<compile_context>
chip_gen: v6e
topology: v6e:2x2x1
jax: 0.10.0
libtpu: 0.0.40
codegen_flags: <defaults>
</compile_context>

<pallas_src>
import functools

import jax
import jax.numpy as jnp
from jax.experimental import pallas as pl
from jax.experimental.pallas import tpu as pltpu


def _round_up(a, b):
    return -(-a // b) * b


def _tcn_block_kernel(x_ref, w1_ref, w2_ref, x2_ref, out_ref, *, L, Lp, mxu_dtype):
    """One batch chunk with the batch fused into the lane axis.

    x_ref  : (C_in,  bb*Lp)   input slab (pad columns are zero)
    w*_ref : (C_out, 3*C + 1) BN-scaled taps [t-1, t, t+1] + folded shift column
    x2_ref : (C_out, bb*Lp)   conv2 + BN2 + SiLU activations
    out_ref: (C_out, bb*Lp/2) MaxPool1d(2) of x2
    """
    c_out = w1_ref.shape[0]
    lanes = x_ref.shape[-1]

    # Per-sample lane position: each sample owns a contiguous Lp-lane chunk.
    pos = jax.lax.broadcasted_iota(jnp.int32, (1, lanes), 1) % Lp
    first = pos == 0
    last = pos == Lp - 1

    def conv3(v, w_ref):
        # v: (C, lanes) f32.  "Same"-padded 3-tap conv + per-channel shift as ONE
        # MXU matmul: stack the [t-1, t, t+1] windows plus a ones row on sublanes
        # (boundary lanes of every sample masked to zero) and contract against
        # the (C_out, 3C+1) fused weight.
        z = jnp.zeros((v.shape[0], 1), v.dtype)
        prev = jnp.concatenate([z, v[:, : lanes - 1]], axis=1)   # value at t is v[t-1]
        nxt = jnp.concatenate([v[:, 1:], z], axis=1)             # value at t is v[t+1]
        prev = jnp.where(first, 0.0, prev)                       # sample-start halo -> 0
        nxt = jnp.where(last, 0.0, nxt)                          # sample-end halo -> 0
        ones = jnp.ones((1, lanes), v.dtype)                     # bias / BN-shift row
        cat = jnp.concatenate([prev, v, nxt, ones], axis=0).astype(mxu_dtype)
        return jnp.dot(w_ref[...], cat, preferred_element_type=jnp.float32)

    x = x_ref[...].astype(jnp.float32)
    h1 = conv3(x, w1_ref)                   # conv1 + bias + eval-mode BN folded
    h1 = h1 * jax.nn.sigmoid(h1)            # SiLU (f32); dropout = eval identity
    if Lp > L:                              # keep pad columns zero so conv2's
        h1 = jnp.where(pos < L, h1, 0.0)    # right halo at t = L-1 sees zeros

    h2 = conv3(h1, w2_ref)                  # conv2 + bias + BN folded
    x2 = h2 * jax.nn.sigmoid(h2)
    x2_ref[...] = x2.astype(x2_ref.dtype)   # lane-dense store (bb*Lp % 256 == 0)

    # MaxPool1d(kernel=2, stride=2): pairwise max of adjacent lanes.  Pairs never
    # cross sample boundaries (Lp is even); pooled store is also lane-dense.
    out_ref[...] = jnp.max(
        x2.reshape(c_out, lanes // 2, 2), axis=-1).astype(out_ref.dtype)


def _choose_batch_block(N, C_in, C_out, Lp, batch_block):
    # bb*Lp must be a multiple of 256 so both the x2 block (bb*Lp lanes) and the
    # pooled block (bb*Lp/2 lanes) keep multiple-of-128 last dims.
    quantum = 1 if Lp % 256 == 0 else 2
    if batch_block is not None:
        return _round_up(max(1, batch_block), quantum)
    # Per-sample VMEM per grid step: double-buffered in/out blocks + in-kernel
    # live (3C+1, Lp) windows, all f32.  Budget is conservative for v7x (64 MiB).
    per_sample = 4 * Lp * (2 * (C_in + C_out + C_out // 2) + 5 * max(C_in, C_out))
    budget = 24 << 20
    bb_max = max(quantum, (budget // per_sample) // quantum * quantum)
    if N >= 2 * quantum:
        target = _round_up(-(-N // 2), quantum)   # >=2 grid steps: v7x megacore
    else:
        target = _round_up(N, quantum)
    return max(quantum, min(bb_max, target))


def tcn_block_forward(x, params, *, kernel_size=3, dilation=1, eps=1e-5,
                      mxu_dtype=jnp.bfloat16, batch_block=None):
    """Pallas TPU forward of TCNBlock (eval mode).

    x: (N, C_in, L) float32.  Returns (x2, out) with shapes
    (N, C_out, L) and (N, C_out, L//2).
    """
    assert kernel_size == 3 and dilation == 1, "length-preserving config only"
    N, C_in, L = x.shape
    assert L % 2 == 0, "MaxPool1d(2) demo path expects even L"
    K = kernel_size

    w1, b1, g1, be1, rm1, rv1 = (params[k] for k in
                                 ("w1", "b1", "g1", "be1", "rm1", "rv1"))
    w2, b2, g2, be2, rm2, rv2 = (params[k] for k in
                                 ("w2", "b2", "g2", "be2", "rm2", "rv2"))
    C_out = w1.shape[0]

    # Fold conv bias + eval-mode BatchNorm into the fused weights:
    #   BN(conv(x; w) + b) = conv(x; s*w) + (s*(b - rm) + beta), s = g/sqrt(v+eps)
    # and fold the per-channel shift into the matmul as an extra weight column
    # that contracts against a constant ones row (bias rides the MXU for free).
    s1 = g1 / jnp.sqrt(rv1 + eps)
    s2 = g2 / jnp.sqrt(rv2 + eps)
    sh1 = s1 * (b1 - rm1) + be1
    sh2 = s2 * (b2 - rm2) + be2
    # Fused layout (C_out, K*C + 1): [o, k*C + i] = w[o, i, k] * s[o]; last col = shift.
    w1f = jnp.concatenate(
        [jnp.transpose(w1, (0, 2, 1)).reshape(C_out, K * C_in) * s1[:, None],
         sh1[:, None]], axis=1).astype(mxu_dtype)
    w2f = jnp.concatenate(
        [jnp.transpose(w2, (0, 2, 1)).reshape(C_out, K * C_out) * s2[:, None],
         sh2[:, None]], axis=1).astype(mxu_dtype)

    # Lane geometry: each sample occupies a contiguous Lp-lane chunk.
    Lp = _round_up(L, 128)
    bb = _choose_batch_block(N, C_in, C_out, Lp, batch_block)
    G = -(-N // bb)
    Npad = G * bb

    # Layout plumbing: (N, C_in, L) -> zero-padded (C_in, Npad*Lp) lane slab.
    xf = jnp.pad(x.astype(jnp.float32), ((0, Npad - N), (0, 0), (0, Lp - L)))
    x_lanes = jnp.transpose(xf, (1, 0, 2)).reshape(C_in, Npad * Lp)

    block_bytes = 4 * bb * Lp * (C_in + C_out + C_out // 2)
    vmem_limit = int(min(100 << 20, max(32 << 20, 4 * block_bytes)))

    kernel = functools.partial(_tcn_block_kernel, L=L, Lp=Lp, mxu_dtype=mxu_dtype)
    x2_flat, out_flat = pl.pallas_call(
        kernel,
        out_shape=(
            jax.ShapeDtypeStruct((C_out, Npad * Lp), x.dtype),
            jax.ShapeDtypeStruct((C_out, Npad * Lp // 2), x.dtype),
        ),
        grid_spec=pltpu.PrefetchScalarGridSpec(
            num_scalar_prefetch=0,
            grid=(G,),
            in_specs=[
                pl.BlockSpec((C_in, bb * Lp), lambda g: (0, g)),         # x slab
                pl.BlockSpec((C_out, K * C_in + 1), lambda g: (0, 0)),   # fused w1
                pl.BlockSpec((C_out, K * C_out + 1), lambda g: (0, 0)),  # fused w2
            ],
            out_specs=(
                pl.BlockSpec((C_out, bb * Lp), lambda g: (0, g)),        # x2 slab
                pl.BlockSpec((C_out, bb * Lp // 2), lambda g: (0, g)),   # pooled slab
            ),
        ),
        compiler_params=pltpu.CompilerParams(
            dimension_semantics=("parallel",),
            vmem_limit_bytes=vmem_limit),
    )(x_lanes, w1f, w2f)

    # Un-plumb: (C_out, Npad*Lp) -> (N, C_out, L); drop batch / length padding.
    x2 = jnp.transpose(x2_flat.reshape(C_out, Npad, Lp), (1, 0, 2))[:N, :, :L]
    out = jnp.transpose(out_flat.reshape(C_out, Npad, Lp // 2),
                        (1, 0, 2))[:N, :, :L // 2]
    return x2, out


def tcn_block_reference(x, params, eps=1e-5):
    """Pure-JAX reference (eval-mode PyTorch semantics)."""
    def conv1d(x, w, b):
        y = jax.lax.conv_general_dilated(
            x, w, window_strides=(1,), padding=[(1, 1)],
            dimension_numbers=("NCH", "OIH", "NCH"))
        return y + b[None, :, None]

    def bn(x, g, be, rm, rv):
        s = g / jnp.sqrt(rv + eps)
        return (x - rm[None, :, None]) * s[None, :, None] + be[None, :, None]

    def silu(v):
        return v * jax.nn.sigmoid(v)

    h1 = silu(bn(conv1d(x, params["w1"], params["b1"]),
                 params["g1"], params["be1"], params["rm1"], params["rv1"]))
    h2 = silu(bn(conv1d(h1, params["w2"], params["b2"]),
                 params["g2"], params["be2"], params["rm2"], params["rv2"]))
    N, C, L = h2.shape
    out = h2.reshape(N, C, L // 2, 2).max(axis=-1)
    return h2, out


def make_params(key, c_in, c_out, k=3):
    ks = jax.random.split(key, 12)
    return {
        "w1": 0.3 * jax.random.normal(ks[0], (c_out, c_in, k), jnp.float32),
        "b1": 0.1 * jax.random.normal(ks[1], (c_out,), jnp.float32),
        "g1": 1.0 + 0.1 * jax.random.normal(ks[2], (c_out,), jnp.float32),
        "be1": 0.1 * jax.random.normal(ks[3], (c_out,), jnp.float32),
        "rm1": 0.1 * jax.random.normal(ks[4], (c_out,), jnp.float32),
        "rv1": 1.0 + 0.1 * jax.random.uniform(ks[5], (c_out,), jnp.float32),
        "w2": 0.3 * jax.random.normal(ks[6], (c_out, c_out, k), jnp.float32),
        "b2": 0.1 * jax.random.normal(ks[7], (c_out,), jnp.float32),
        "g2": 1.0 + 0.1 * jax.random.normal(ks[8], (c_out,), jnp.float32),
        "be2": 0.1 * jax.random.normal(ks[9], (c_out,), jnp.float32),
        "rm2": 0.1 * jax.random.normal(ks[10], (c_out,), jnp.float32),
        "rv2": 1.0 + 0.1 * jax.random.uniform(ks[11], (c_out,), jnp.float32),
    }


if __name__ == "__main__":
    N, C_IN, C_OUT, L = 4, 4, 8, 16

    key = jax.random.PRNGKey(0)
    kx, kp = jax.random.split(key)
    x = jax.random.normal(kx, (N, C_IN, L), dtype=jnp.float32)
    params = make_params(kp, C_IN, C_OUT)

    x2_ref, out_ref = tcn_block_reference(x, params)

    # Numerically faithful path: f32 MXU operands, tight tolerance.
    x2, out = tcn_block_forward(x, params, mxu_dtype=jnp.float32)
    jax.block_until_ready((x2, out))
    assert x2.shape == (N, C_OUT, L) and out.shape == (N, C_OUT, L // 2)
    assert jnp.allclose(x2, x2_ref, atol=1e-4, rtol=1e-4)
    assert jnp.allclose(out, out_ref, atol=1e-4, rtol=1e-4)

    # Default perf path: bf16 MXU operands, f32 accumulation / SiLU.
    x2b, outb = tcn_block_forward(x, params)
    jax.block_until_ready((x2b, outb))
    assert jnp.allclose(x2b, x2_ref, atol=1e-1, rtol=1e-1)
    assert jnp.allclose(outb, out_ref, atol=1e-1, rtol=1e-1)

    print("KERNEL_OK")
</pallas_src>

<mosaic_0001>
module attributes {stable_mosaic.version = 11 : i64} {
  func.func @_tcn_block_kernel(%arg0: i32, %arg1: memref<4x256xf32, #tpu.memory_space<vmem>>, %arg2: memref<8x13xf32, #tpu.memory_space<vmem>>, %arg3: memref<8x25xf32, #tpu.memory_space<vmem>>, %arg4: memref<8x256xf32, #tpu.memory_space<vmem>>, %arg5: memref<8x128xf32, #tpu.memory_space<vmem>>) attributes {dimension_semantics = [#tpu.dimension_semantics<parallel>], iteration_bounds = array<i64: 2>, scalar_prefetch = 0 : i64, scratch_operands = 0 : i64, tpu.core_type = #tpu.core_type<tc>, window_params = [{transform_indices = @transform_0, window_bounds = array<i64: 4, 256>}, {pipeline_mode = #tpu.pipeline_mode<synchronous>, transform_indices = @transform_1, window_bounds = array<i64: 8, 13>}, {pipeline_mode = #tpu.pipeline_mode<synchronous>, transform_indices = @transform_2, window_bounds = array<i64: 8, 25>}, {transform_indices = @transform_3, window_bounds = array<i64: 8, 256>}, {transform_indices = @transform_4, window_bounds = array<i64: 8, 128>}]} {
    %0 = tpu.iota {dimensions = array<i32: 1>} : vector<1x256xi32>
    %c128_i32 = arith.constant 128 : i32
    %c0_i32 = arith.constant 0 : i32
    %1 = arith.cmpi eq, %c128_i32, %c0_i32 : i32
    %c1_i32 = arith.constant 1 : i32
    %2 = arith.select %1, %c1_i32, %c128_i32 : i32
    %3 = vector.broadcast %2 : i32 to vector<1x256xi32>
    %4 = arith.remsi %0, %3 : vector<1x256xi32>
    %c0_i32_0 = arith.constant 0 : i32
    %5 = vector.broadcast %c0_i32_0 : i32 to vector<1x256xi32>
    %6 = arith.cmpi ne, %4, %5 : vector<1x256xi32>
    %c0_i32_1 = arith.constant 0 : i32
    %7 = vector.broadcast %c0_i32_1 : i32 to vector<1x256xi32>
    %8 = arith.cmpi slt, %4, %7 : vector<1x256xi32>
    %c0_i32_2 = arith.constant 0 : i32
    %9 = arith.cmpi slt, %2, %c0_i32_2 : i32
    %10 = vector.broadcast %9 : i1 to vector<1x256xi1>
    %11 = vector.broadcast %10 : vector<1x256xi1> to vector<1x256xi1>
    %12 = arith.xori %8, %11 : vector<1x256xi1>
    %13 = arith.andi %12, %6 : vector<1x256xi1>
    %14 = vector.broadcast %2 : i32 to vector<1x256xi32>
    %15 = arith.addi %4, %14 : vector<1x256xi32>
    %16 = arith.select %13, %15, %4 : vector<1x256xi1>, vector<1x256xi32>
    %c0_i32_3 = arith.constant 0 : i32
    %17 = vector.broadcast %c0_i32_3 : i32 to vector<1x256xi32>
    %18 = arith.cmpi eq, %16, %17 : vector<1x256xi32>
    %c127_i32 = arith.constant 127 : i32
    %19 = vector.broadcast %c127_i32 : i32 to vector<1x256xi32>
    %20 = arith.cmpi eq, %16, %19 : vector<1x256xi32>
    %c0 = arith.constant 0 : index
    %c0_4 = arith.constant 0 : index
    %21 = vector.load %arg1[%c0, %c0_4] : memref<4x256xf32, #tpu.memory_space<vmem>>, vector<4x256xf32>
    %cst = arith.constant 0.000000e+00 : f32
    %22 = vector.broadcast %cst : f32 to vector<4x1xf32>
    %23 = vector.extract_strided_slice %21 {offsets = [0, 0], sizes = [4, 255], strides = [1, 1]} : vector<4x256xf32> to vector<4x255xf32>
    %24 = tpu.concatenate %22, %23 in 1 : vector<4x1xf32>, vector<4x255xf32> -> vector<4x256xf32>
    %25 = vector.extract_strided_slice %21 {offsets = [0, 1], sizes = [4, 255], strides = [1, 1]} : vector<4x256xf32> to vector<4x255xf32>
    %26 = tpu.concatenate %25, %22 in 1 : vector<4x255xf32>, vector<4x1xf32> -> vector<4x256xf32>
    %cst_5 = arith.constant 0.000000e+00 : f32
    %27 = vector.shape_cast %18 : vector<1x256xi1> to vector<1x256xi1>
    %28 = vector.broadcast %27 : vector<1x256xi1> to vector<4x256xi1>
    %29 = vector.broadcast %cst_5 : f32 to vector<4x256xf32>
    %30 = arith.select %28, %29, %24 : vector<4x256xi1>, vector<4x256xf32>
    %cst_6 = arith.constant 0.000000e+00 : f32
    %31 = vector.shape_cast %20 : vector<1x256xi1> to vector<1x256xi1>
    %32 = vector.broadcast %31 : vector<1x256xi1> to vector<4x256xi1>
    %33 = vector.broadcast %cst_6 : f32 to vector<4x256xf32>
    %34 = arith.select %32, %33, %26 : vector<4x256xi1>, vector<4x256xf32>
    %cst_7 = arith.constant 1.000000e+00 : f32
    %35 = vector.broadcast %cst_7 : f32 to vector<1x256xf32>
    %36 = tpu.concatenate %30, %21, %34, %35 in 0 : vector<4x256xf32>, vector<4x256xf32>, vector<4x256xf32>, vector<1x256xf32> -> vector<13x256xf32>
    %c0_8 = arith.constant 0 : index
    %c0_9 = arith.constant 0 : index
    %37 = vector.load %arg2[%c0_8, %c0_9] : memref<8x13xf32, #tpu.memory_space<vmem>>, vector<8x13xf32>
    %cst_10 = arith.constant dense<0.000000e+00> : vector<8x256xf32>
    %38 = tpu.matmul %37, %36, %cst_10 {dimension_numbers = #tpu.dot_dimension_numbers<[1], [0], [0], [1], [0, 0, 1, 1], [], []>} : vector<8x13xf32>, vector<13x256xf32>, vector<8x256xf32> -> vector<8x256xf32>
    %39 = arith.negf %38 : vector<8x256xf32>
    %40 = math.exp %39 : vector<8x256xf32>
    %cst_11 = arith.constant 1.000000e+00 : f32
    %41 = vector.broadcast %cst_11 : f32 to vector<8x256xf32>
    %42 = arith.addf %41, %40 : vector<8x256xf32>
    %43 = arith.divf %41, %42 : vector<8x256xf32>
    %44 = arith.mulf %38, %43 : vector<8x256xf32>
    %c16_i32 = arith.constant 16 : i32
    %45 = vector.broadcast %c16_i32 : i32 to vector<1x256xi32>
    %46 = arith.cmpi slt, %16, %45 : vector<1x256xi32>
    %cst_12 = arith.constant 0.000000e+00 : f32
    %47 = vector.shape_cast %46 : vector<1x256xi1> to vector<1x256xi1>
    %48 = vector.broadcast %47 : vector<1x256xi1> to vector<8x256xi1>
    %49 = vector.broadcast %cst_12 : f32 to vector<8x256xf32>
    %50 = arith.select %48, %44, %49 : vector<8x256xi1>, vector<8x256xf32>
    %cst_13 = arith.constant 0.000000e+00 : f32
    %51 = vector.broadcast %cst_13 : f32 to vector<8x1xf32>
    %52 = vector.extract_strided_slice %50 {offsets = [0, 0], sizes = [8, 255], strides = [1, 1]} : vector<8x256xf32> to vector<8x255xf32>
    %53 = tpu.concatenate %51, %52 in 1 : vector<8x1xf32>, vector<8x255xf32> -> vector<8x256xf32>
    %54 = vector.extract_strided_slice %50 {offsets = [0, 1], sizes = [8, 255], strides = [1, 1]} : vector<8x256xf32> to vector<8x255xf32>
    %55 = tpu.concatenate %54, %51 in 1 : vector<8x255xf32>, vector<8x1xf32> -> vector<8x256xf32>
    %cst_14 = arith.constant 0.000000e+00 : f32
    %56 = vector.shape_cast %18 : vector<1x256xi1> to vector<1x256xi1>
    %57 = vector.broadcast %56 : vector<1x256xi1> to vector<8x256xi1>
    %58 = vector.broadcast %cst_14 : f32 to vector<8x256xf32>
    %59 = arith.select %57, %58, %53 : vector<8x256xi1>, vector<8x256xf32>
    %cst_15 = arith.constant 0.000000e+00 : f32
    %60 = vector.shape_cast %20 : vector<1x256xi1> to vector<1x256xi1>
    %61 = vector.broadcast %60 : vector<1x256xi1> to vector<8x256xi1>
    %62 = vector.broadcast %cst_15 : f32 to vector<8x256xf32>
    %63 = arith.select %61, %62, %55 : vector<8x256xi1>, vector<8x256xf32>
    %cst_16 = arith.constant 1.000000e+00 : f32
    %64 = vector.broadcast %cst_16 : f32 to vector<1x256xf32>
    %65 = tpu.concatenate %59, %50, %63, %64 in 0 : vector<8x256xf32>, vector<8x256xf32>, vector<8x256xf32>, vector<1x256xf32> -> vector<25x256xf32>
    %c0_17 = arith.constant 0 : index
    %c0_18 = arith.constant 0 : index
    %66 = vector.load %arg3[%c0_17, %c0_18] : memref<8x25xf32, #tpu.memory_space<vmem>>, vector<8x25xf32>
    %cst_19 = arith.constant dense<0.000000e+00> : vector<8x256xf32>
    %67 = tpu.matmul %66, %65, %cst_19 {dimension_numbers = #tpu.dot_dimension_numbers<[1], [0], [0], [1], [0, 0, 1, 1], [], []>} : vector<8x25xf32>, vector<25x256xf32>, vector<8x256xf32> -> vector<8x256xf32>
    %68 = arith.negf %67 : vector<8x256xf32>
    %69 = math.exp %68 : vector<8x256xf32>
    %cst_20 = arith.constant 1.000000e+00 : f32
    %70 = vector.broadcast %cst_20 : f32 to vector<8x256xf32>
    %71 = arith.addf %70, %69 : vector<8x256xf32>
    %72 = arith.divf %70, %71 : vector<8x256xf32>
    %73 = arith.mulf %67, %72 : vector<8x256xf32>
    %c0_21 = arith.constant 0 : index
    %c0_22 = arith.constant 0 : index
    %74 = vector.load %arg4[%c0_21, %c0_22] : memref<8x256xf32, #tpu.memory_space<vmem>>, vector<8x256xf32>
    tpu.vector_store %arg4[%c0_21, %c0_22], %73 {strides = array<i32>} : memref<8x256xf32, #tpu.memory_space<vmem>>, vector<8x256xf32>,
    %75 = vector.shape_cast %73 : vector<8x256xf32> to vector<8x128x2xf32>
    %cst_23 = arith.constant dense<0xFF800000> : vector<8x128xf32>
    %76 = vector.multi_reduction <maximumf>, %75, %cst_23 [2] : vector<8x128x2xf32> to vector<8x128xf32>
    %c0_24 = arith.constant 0 : index
    %c0_25 = arith.constant 0 : index
    %77 = vector.load %arg5[%c0_24, %c0_25] : memref<8x128xf32, #tpu.memory_space<vmem>>, vector<8x128xf32>
    tpu.vector_store %arg5[%c0_24, %c0_25], %76 {strides = array<i32>} : memref<8x128xf32, #tpu.memory_space<vmem>>, vector<8x128xf32>,
    return
  }
  func.func @transform_0(%arg0: i32) -> (i32, i32) {
    %c0_i32 = arith.constant 0 : i32
    %c0_i32_0 = arith.constant 0 : i32
    return %c0_i32, %arg0 : i32, i32
  }
  func.func @transform_1(%arg0: i32) -> (i32, i32) {
    %c0_i32 = arith.constant 0 : i32
    %c0_i32_0 = arith.constant 0 : i32
    %c0_i32_1 = arith.constant 0 : i32
    return %c0_i32, %c0_i32_0 : i32, i32
  }
  func.func @transform_2(%arg0: i32) -> (i32, i32) {
    %c0_i32 = arith.constant 0 : i32
    %c0_i32_0 = arith.constant 0 : i32
    %c0_i32_1 = arith.constant 0 : i32
    return %c0_i32, %c0_i32_0 : i32, i32
  }
  func.func @transform_3(%arg0: i32) -> (i32, i32) {
    %c0_i32 = arith.constant 0 : i32
    %c0_i32_0 = arith.constant 0 : i32
    return %c0_i32, %arg0 : i32, i32
  }
  func.func @transform_4(%arg0: i32) -> (i32, i32) {
    %c0_i32 = arith.constant 0 : i32
    %c0_i32_0 = arith.constant 0 : i32
    return %c0_i32, %arg0 : i32, i32
  }
}

</mosaic_0001>

<llo_original>
// kernel: tpu_custom_call.1
$region0: #{tpu_custom_call.1}
  #allocation0 [shape = 'u32[]', space=smem, size = 0x4, offset = 0x4, fixed_abs, tag = 'smem constant byte address 0x4 - core index']
  #allocation1 [shape = 'u32[144,128]{1,0:T(1,128)}', space=vmem, size = 0x12000, scoped, tag = 'internal scratch']
  %s0 = inlined_call_operand.hbm [shape: f32[4,512], index: 0, kind: input, shape index: {}]
  %s1 = inlined_call_operand.hbm [shape: f32[8,13], index: 1, kind: input, shape index: {}]
  %s2 = inlined_call_operand.hbm [shape: f32[8,25], index: 2, kind: input, shape index: {}]
  %s3 = inlined_call_operand.hbm [shape: f32[8,512], index: 3, kind: output, shape index: {0}]
  %s4 = inlined_call_operand.hbm [shape: f32[8,256], index: 4, kind: output, shape index: {1}]
  %5 = xla_tuple %s3, %s4
  %s6 = sld [smem:[#allocation0]]
  $region65: #{tpu_custom_call.1} parent=0
    _
  %s8 = ssub.s32 1, %s6
  %s9 = scalar_select 0, %s8, %s6
  $region1: #{tpu_custom_call.1} parent=0
    #allocation2 [shape = 'u8[8192]{0}', space=vmem, size = 0x2000, scoped, tag = 'input window, operand 0']
    #allocation3 [shape = 's32[2]{0}', space=sflag, size = 0x8, scoped, tag = 'scoped memory for tpu_custom_call.1']
    #allocation4 [shape = 's32[2]{0}', space=sflag, size = 0x8, scoped, tag = 'scoped memory for tpu_custom_call.1']
    #allocation5 [shape = 'u8[4096]{0}', space=vmem, size = 0x1000, scoped, tag = 'input window, operand 1, single buffered']
    #allocation6 [shape = 's32[1]{0}', space=sflag, size = 0x4, scoped, tag = 'scoped memory for tpu_custom_call.1']
    #allocation7 [shape = 'u8[4096]{0}', space=vmem, size = 0x1000, scoped, tag = 'input window, operand 2, single buffered']
    #allocation8 [shape = 'u8[16384]{0}', space=vmem, size = 0x4000, scoped, tag = 'output window, operand 0']
    #allocation9 [shape = 'u8[8192]{0}', space=vmem, size = 0x2000, scoped, tag = 'output window, operand 1']
    #allocation10 [shape = 's32[2]{0}', space=sflag, size = 0x8, scoped, tag = 'scoped memory for tpu_custom_call.1']
    %10 = vsyncpa [#allocation3], 0
    %s11 = scalar_lea.sflag [#allocation3], 1
    %12 = vsyncpa %s11, 0
    %13 = vsyncpa [#allocation6], 0
    %14 = vsyncpa [#allocation4], 0
    %s15 = scalar_lea.sflag [#allocation4], 1
    %16 = vsyncpa %s15, 0
    %17 = vsyncpa [#allocation10], 0
    %s18 = scalar_lea.sflag [#allocation10], 1
    %19 = vsyncpa %s18, 0
    loop: start=0, step=1, limit=4
    $region2: #{tpu_custom_call.1} parent=1 // loop_pre_header
      _
    $region3: #{tpu_custom_call.1} parent=1 // loop_header
      %s21 = sphi 0, %s25
      %p22 = scmp.ge.s32.totalorder %s21, 4
      %s31 = sphi 0, %s33
      %s34 = sphi 0, %s31
      %s35 = sphi 0, %s34
      %s51 = sphi 0, %s35
      %s55 = sphi 0, %s55
      %s57 = sphi 0, %s55
      %s58 = sphi 0, %s57
      %s72 = sphi 0, %s58
      %s76 = sphi 0, %s76
      %s78 = sphi 0, %s76
      %s79 = sphi 0, %s78
      %s93 = sphi 0, %s79
      %s99 = sphi 0, %s101
      %s102 = sphi 0, %s99
      %s103 = sphi 0, %s102
      %s119 = sphi 0, %s103
      %s125 = sphi 0, %s127
      %s128 = sphi 0, %s125
      %s129 = sphi 0, %s128
      %s145 = sphi 0, %s129
    $region4: #{tpu_custom_call.1} parent=1 // loop_header_branch
      %24 = sbr.rel (%p22) target = $region8
    $region5: #{tpu_custom_call.1} parent=1 // loop_body
      %s26 = ssub.s32 %s21, 1
      %s27 = ssub.s32 %s21, 2
      %s28 = sadd.s32 %s21, 1
      %s29 = ssub.s32 %s21, %s28
      %p30 = scmp.eq.s32.totalorder %s29, 0
      %s32 = sadd.s32 %s31, 1
      %s33 = scalar_select %p30, %s31, %s32
      %p36 = pneg %p30
      %p37 = scmp.eq.s32.totalorder %s21, 1
      %p38 = por %p36, %p37
      %p39 = scmp.ne.s32.totalorder %s31, %s34
      %p40 = scmp.eq.s32.totalorder %s21, 0
      %p41 = por %p39, %p40
      %p42 = scmp.ne.s32.totalorder %s31, %s34
      %p43 = scmp.eq.s32.totalorder %s26, 1
      %p44 = por %p42, %p43
      %p45 = scmp.ne.s32.totalorder %s34, %s35
      %p46 = scmp.eq.s32.totalorder %s26, 0
      %p47 = por %p45, %p46
      %p48 = scmp.ne.s32.totalorder %s34, %s35
      %p49 = scmp.eq.s32.totalorder %s27, 1
      %p50 = por %p48, %p49
      %p52 = scmp.ne.s32.totalorder %s35, %s51
      %p53 = scmp.eq.s32.totalorder %s27, 0
      %p54 = por %p52, %p53
      %s56 = sadd.s32 %s55, 1
      %p59 = scmp.eq.s32.totalorder %s21, 1
      %p60 = scmp.ne.s32.totalorder %s55, %s57
      %p61 = scmp.eq.s32.totalorder %s21, 0
      %p62 = por %p60, %p61
      %p63 = scmp.ne.s32.totalorder %s55, %s57
      %p64 = scmp.eq.s32.totalorder %s26, 1
      %p65 = por %p63, %p64
      %p66 = scmp.ne.s32.totalorder %s57, %s58
      %p67 = scmp.eq.s32.totalorder %s26, 0
      %p68 = por %p66, %p67
      %p69 = scmp.ne.s32.totalorder %s57, %s58
      %p70 = scmp.eq.s32.totalorder %s27, 1
      %p71 = por %p69, %p70
      %p73 = scmp.ne.s32.totalorder %s58, %s72
      %p74 = scmp.eq.s32.totalorder %s27, 0
      %p75 = por %p73, %p74
      %s77 = sadd.s32 %s76, 1
      %p80 = scmp.eq.s32.totalorder %s21, 1
      %p81 = scmp.ne.s32.totalorder %s76, %s78
      %p82 = scmp.eq.s32.totalorder %s21, 0
      %p83 = por %p81, %p82
      %p84 = scmp.ne.s32.totalorder %s76, %s78
      %p85 = scmp.eq.s32.totalorder %s26, 1
      %p86 = por %p84, %p85
      %p87 = scmp.ne.s32.totalorder %s78, %s79
      %p88 = scmp.eq.s32.totalorder %s26, 0
      %p89 = por %p87, %p88
      %p90 = scmp.ne.s32.totalorder %s78, %s79
      %p91 = scmp.eq.s32.totalorder %s27, 1
      %p92 = por %p90, %p91
      %p94 = scmp.ne.s32.totalorder %s79, %s93
      %p95 = scmp.eq.s32.totalorder %s27, 0
      %p96 = por %p94, %p95
      %s97 = ssub.s32 %s21, %s28
      %p98 = scmp.eq.s32.totalorder %s97, 0
      %s100 = sadd.s32 %s99, 1
      %s101 = scalar_select %p98, %s99, %s100
      %p104 = pneg %p98
      %p105 = scmp.eq.s32.totalorder %s21, 1
      %p106 = por %p104, %p105
      %p107 = scmp.ne.s32.totalorder %s99, %s102
      %p108 = scmp.eq.s32.totalorder %s21, 0
      %p109 = por %p107, %p108
      %p110 = scmp.ne.s32.totalorder %s99, %s102
      %p111 = scmp.eq.s32.totalorder %s26, 1
      %p112 = por %p110, %p111
      %p113 = scmp.ne.s32.totalorder %s102, %s103
      %p114 = scmp.eq.s32.totalorder %s26, 0
      %p115 = por %p113, %p114
      %p116 = scmp.ne.s32.totalorder %s102, %s103
      %p117 = scmp.eq.s32.totalorder %s27, 1
      %p118 = por %p116, %p117
      %p120 = scmp.ne.s32.totalorder %s103, %s119
      %p121 = scmp.eq.s32.totalorder %s27, 0
      %p122 = por %p120, %p121
      %s123 = ssub.s32 %s21, %s28
      %p124 = scmp.eq.s32.totalorder %s123, 0
      %s126 = sadd.s32 %s125, 1
      %s127 = scalar_select %p124, %s125, %s126
      %p130 = pneg %p124
      %p131 = scmp.eq.s32.totalorder %s21, 1
      %p132 = por %p130, %p131
      %p133 = scmp.ne.s32.totalorder %s125, %s128
      %p134 = scmp.eq.s32.totalorder %s21, 0
      %p135 = por %p133, %p134
      %p136 = scmp.ne.s32.totalorder %s125, %s128
      %p137 = scmp.eq.s32.totalorder %s26, 1
      %p138 = por %p136, %p137
      %p139 = scmp.ne.s32.totalorder %s128, %s129
      %p140 = scmp.eq.s32.totalorder %s26, 0
      %p141 = por %p139, %p140
      %p142 = scmp.ne.s32.totalorder %s128, %s129
      %p143 = scmp.eq.s32.totalorder %s27, 1
      %p144 = por %p142, %p143
      %p146 = scmp.ne.s32.totalorder %s129, %s145
      %p147 = scmp.eq.s32.totalorder %s27, 0
      %p148 = por %p146, %p147
      %p149 = scmp.le.s32.totalorder 1, %s21
      %p150 = scmp.lt.s32.totalorder %s21, 3
      %p151 = pnand %p149, %p150
      %p152 = pneg %p151
      // Predicated region
      $region9: #{tpu_custom_call.1} parent=5 // pred_check
        _
      $region10: #{tpu_custom_call.1} parent=5 // pred_check_branch
        %154 = sbr.rel (%p151) target = $region12
      $region11: #{tpu_custom_call.1} parent=5 // pred_region
        %s155 = ssub.s32 %s21, 1
        // Predicated region
        $region13: #{tpu_custom_call.1} parent=11 // pred_check
          %p156 = pneg %p68
        $region14: #{tpu_custom_call.1} parent=11 // pred_check_branch
          %158 = sbr.rel (%p156) target = $region16
        $region15: #{tpu_custom_call.1} parent=11 // pred_region
          %s160 = ssub.s32 128, 128
          %161 = vsyncadd [#allocation6], %s160
          %s163 = sshll.u32 [#allocation5], 4
          %s164 = int_to_ptr.vmem [resolvable:$true] %s163
          %166 = dma.hbm_to_vmem [thread:$0]  %s1, 128, %s164, [#allocation6]
        $region16: #{tpu_custom_call.1} parent=11 // pred_fallthru
          _
        // Predicated region
        $region17: #{tpu_custom_call.1} parent=11 // pred_check
          %p167 = pneg %p89
        $region18: #{tpu_custom_call.1} parent=11 // pred_check_branch
          %169 = sbr.rel (%p167) target = $region20
        $region19: #{tpu_custom_call.1} parent=11 // pred_region
          %s171 = ssub.s32 128, 128
          %172 = vsyncadd [#allocation6], %s171
          %s174 = sshll.u32 [#allocation7], 4
          %s175 = int_to_ptr.vmem [resolvable:$true] %s174
          %177 = dma.hbm_to_vmem [thread:$0]  %s2, 128, %s175, [#allocation6]
        $region20: #{tpu_custom_call.1} parent=11 // pred_fallthru
          _
      $region12: #{tpu_custom_call.1} parent=5 // pred_fallthru
        _
      %p178 = scmp.lt.s32.totalorder %s21, 2
      // Predicated region
      $region21: #{tpu_custom_call.1} parent=5 // pred_check
        %p179 = pneg %p178
      $region22: #{tpu_custom_call.1} parent=5 // pred_check_branch
        %181 = sbr.rel (%p179) target = $region24
      $region23: #{tpu_custom_call.1} parent=5 // pred_region
        // Predicated region
        $region25: #{tpu_custom_call.1} parent=23 // pred_check
          %p182 = pneg %p41
        $region26: #{tpu_custom_call.1} parent=23 // pred_check_branch
          %184 = sbr.rel (%p182) target = $region28
        $region27: #{tpu_custom_call.1} parent=23 // pred_region
          %s185 = sand.u32 %s31, 1
          %s186 = scalar_lea.sflag [#allocation3], %s185
          %s187 = sand.u32 %s31, 1
          %s188 = smul.addr %s187, 8
          %s189 = scalar_lea.vmem [#allocation2], %s188
          %s190 = smul.u32 2, %s21
          %s192 = ssub.s32 128, 128
          %193 = vsyncadd %s186, %s192
          %s194 = smul.addr %s190, 64
          %s195 = scalar_lea.hbm %s0, %s194
          %s197 = sshll.u32 %s189, 4
          %s198 = int_to_ptr.vmem [resolvable:$true] %s197
          %200 = dma.hbm_to_vmem [thread:$0]  %s195, 128, %s198, %s186
        $region28: #{tpu_custom_call.1} parent=23 // pred_fallthru
          _
      $region24: #{tpu_custom_call.1} parent=5 // pred_fallthru
        _
      %p201 = scmp.le.s32.totalorder 1, %s21
      %p202 = scmp.lt.s32.totalorder %s21, 3
      %p203 = pnand %p201, %p202
      %p204 = pneg %p203
      // Predicated region
      $region29: #{tpu_custom_call.1} parent=5 // pred_check
        _
      $region30: #{tpu_custom_call.1} parent=5 // pred_check_branch
        %206 = sbr.rel (%p203) target = $region32
      $region31: #{tpu_custom_call.1} parent=5 // pred_region
        %s207 = ssub.s32 %s21, 1
        %s208 = sand.u32 %s34, 1
        %s209 = scalar_lea.sflag [#allocation3], %s208
        %s210 = sand.u32 %s34, 1
        %s211 = smul.addr %s210, 8
        %s212 = scalar_lea.vmem [#allocation2], %s211
        // Predicated region
        $region33: #{tpu_custom_call.1} parent=31 // pred_check
          %p213 = pneg %p47
        $region34: #{tpu_custom_call.1} parent=31 // pred_check_branch
          %215 = sbr.rel (%p213) target = $region36
        $region35: #{tpu_custom_call.1} parent=31 // pred_region
          %216 = dma.done %s209, 128
        $region36: #{tpu_custom_call.1} parent=31 // pred_fallthru
          _
        // Predicated region
        $region37: #{tpu_custom_call.1} parent=31 // pred_check
          %p217 = pneg %p68
        $region38: #{tpu_custom_call.1} parent=31 // pred_check_branch
          %219 = sbr.rel (%p217) target = $region40
        $region39: #{tpu_custom_call.1} parent=31 // pred_region
          %220 = dma.done [#allocation6], 128
        $region40: #{tpu_custom_call.1} parent=31 // pred_fallthru
          _
        // Predicated region
        $region41: #{tpu_custom_call.1} parent=31 // pred_check
          %p221 = pneg %p89
        $region42: #{tpu_custom_call.1} parent=31 // pred_check_branch
          %223 = sbr.rel (%p221) target = $region44
        $region43: #{tpu_custom_call.1} parent=31 // pred_region
          %224 = dma.done [#allocation6], 128
        $region44: #{tpu_custom_call.1} parent=31 // pred_fallthru
          _
        %s225 = sand.u32 %s34, 1
        %s226 = scalar_lea.sflag [#allocation3], %s225
        %s227 = sand.u32 %s34, 1
        %s228 = smul.addr %s227, 8
        %s229 = scalar_lea.vmem [#allocation2], %s228
        %p230 = pneg %p47
        %p231 = pneg %p44
        %p232 = pneg %p68
        %p233 = pneg %p65
        %p234 = pneg %p89
        %p235 = pneg %p86
        %p236 = pneg %p115
        %p237 = pneg %p112
        %s238 = sand.u32 %s102, 1
        %s239 = scalar_lea.sflag [#allocation4], %s238
        %s240 = sand.u32 %s102, 1
        %s241 = smul.addr %s240, 16
        %s242 = scalar_lea.vmem [#allocation8], %s241
        %p243 = pneg %p141
        %p244 = pneg %p138
        %s245 = sand.u32 %s128, 1
        %s246 = scalar_lea.sflag [#allocation10], %s245
        %s247 = sand.u32 %s128, 1
        %s248 = smul.addr %s247, 8
        %s249 = scalar_lea.vmem [#allocation9], %s248
        %s250 = smul.u32 2, %s26
        %s251 = smul.u32 2, %s26
        %v252 = vlaneseq
        %v253 = vand.u32 %v252, 127
        %v254 = vadd.s32 %v253, 128
        %vm255 = vcmp.lt.s32.totalorder %v253, 0
        %v256 = vsub.s32 0, %v253
        %v257 = vsel %vm255, %v256, %v253
        %v258 = vshrl.u32 %v257, 7
        %v259 = vand.u32 %v257, 127
        %v260 = vsub.s32 0, %v259
        %v261 = vsel %vm255, %v260, %v259
        %vm262 = vcmp.lt.s32.totalorder %v254, 0
        %v263 = vsub.s32 0, %v254
        %v264 = vsel %vm262, %v263, %v254
        %v265 = vshrl.u32 %v264, 7
        %v266 = vand.u32 %v264, 127
        %v267 = vsub.s32 0, %v266
        %v268 = vsel %vm262, %v267, %v266
        %vm269 = vcmp.ne.s32.totalorder %v261, 0
        %vm270 = vcmp.ne.s32.totalorder %v268, 0
        %vm271 = vcmp.lt.s32.totalorder %v261, 0
        %vm272 = vcmp.lt.s32.totalorder %v268, 0
        %vm273 = vmand %vm271, %vm269
        %vm274 = vmand %vm272, %vm270
        %v275 = vadd.s32 %v261, 128
        %v276 = vadd.s32 %v268, 128
        %v277 = vsel %vm273, %v275, %v261
        %v278 = vsel %vm274, %v276, %v268
        %vm279 = vcmp.eq.s32.totalorder %v277, 0
        %vm280 = vcmp.eq.s32.totalorder %v278, 0
        %vm281 = vcmp.eq.s32.totalorder %v277, 127
        %vm282 = vcmp.eq.s32.totalorder %v278, 127
        %v283 = vld [vmem:[%s212] sm:$0xff]
        %v285 = vcombine.high %v283, %v283
        %286 = vrot.lane.b32.xlu0 %v283, 1
        %v287 = vpop.permute.xlu0 %286
        %288 = vrot.lane.b32.xlu0 %v285, 1
        %v289 = vpop.permute.xlu0 %288
        %vm290 = vcmask 7168
        %v291 = vsel %vm290, %v287, %v289
        %v294 = vsel %vm290, 0.0, %v287
        %295 = vrot.lane.b32.xlu0 %v283, 127
        %v296 = vpop.permute.xlu0 %295
        %297 = vrot.lane.b32.xlu0 %v285, 127
        %v298 = vpop.permute.xlu0 %297
        %vm299 = vcmask 1039360
        %v300 = vsel %vm299, %v296, %v298
        %v303 = vsel %vm299, %v298, 0.0
        %v304 = vsel %vm279, 1, 0
        %v305 = vsel %vm280, 1, 0
        %vm306 = vcmp.eq.s32.totalorder %v304, 1
        %vm307 = vcmp.eq.s32.totalorder %v305, 1
        %v308 = vsel %vm306, 0.0, %v294
        %v309 = vsel %vm307, 0.0, %v291
        %v310 = vsel %vm281, 1, 0
        %v311 = vsel %vm282, 1, 0
        %vm312 = vcmp.eq.s32.totalorder %v310, 1
        %vm313 = vcmp.eq.s32.totalorder %v311, 1
        %v314 = vsel %vm312, 0.0, %v300
        %v315 = vsel %vm313, 0.0, %v303
        %v316 = vcombine.low %v283, %v283
        %vm318 = vcmask 1043456
        %v319 = vsel %vm318, %v308, %v316
        %v320 = vsel %vm318, %v309, %v283
        %v321 = vsel %vm318, %v314, 1.0
        %v322 = vsel %vm318, %v315, 1.0
        %v323 = vld [vmem:[#allocation5] sm:$0xff]
        %vm324 = vcmask 105472
        %v326 = vsel %vm324, %v323, 0
        %vm328 = vcmask 1044480
        %v330 = vsel %vm328, %v321, 0
        %v333 = vsel %vm328, %v322, 0
        %335 = vmatprep.subr.mxu0 0.0
        %336 = vmatpush1.msra.mxu0 0.0
        %337 = vmatprep.subr.mxu0 0.0
        %338 = vmatpush1.msra.mxu0 0.0
        %339 = vmatprep.subr.mxu0 0.0
        %340 = vmatpush1.msra.mxu0 0.0
        %341 = vmatprep.subr.mxu0 0.0
        %342 = vmatpush1.msra.mxu0 0.0
        %343 = vmatprep.subr.mxu0 0.0
        %344 = vmatpush1.msra.mxu0 0.0
        %345 = vmatprep.subr.mxu0 0.0
        %346 = vmatpush1.msra.mxu0 0.0
        %347 = vmatprep.subr.mxu0 0.0
        %348 = vmatpush1.msra.mxu0 0.0
        %349 = vmatprep.subr.mxu0 0.0
        %350 = vmatpush1.msra.mxu0 0.0
        %351 = vmatprep.subr.mxu0 0.0
        %352 = vmatpush1.msra.mxu0 0.0
        %353 = vmatprep.subr.mxu0 0.0
        %354 = vmatpush1.msra.mxu0 0.0
        %355 = vmatprep.subr.mxu0 0.0
        %356 = vmatpush1.msra.mxu0 0.0
        %357 = vmatprep.subr.mxu0 0.0
        %358 = vmatpush1.msra.mxu0 0.0
        %359 = vmatprep.subr.mxu0 0.0
        %360 = vmatpush1.msra.mxu0 0.0
        %361 = vmatprep.subr.mxu0 0.0
        %362 = vmatpush1.msra.mxu0 0.0
        %363 = vmatprep.subr.mxu0 %v333
        %364 = vmatpush1.msra.mxu0 %v330
        %365 = vmatprep.subr.mxu0 %v320
        %366 = vmatpush1.msra.mxu0 %v319
        %367 = vmatprep.subr.mxu0 0.0
        %368 = vmatpush2.msra.mxu0 0.0
        %369 = vmatprep.subr.mxu0 0.0
        %370 = vmatpush2.msra.mxu0 0.0
        %371 = vmatprep.subr.mxu0 0.0
        %372 = vmatpush2.msra.mxu0 0.0
        %373 = vmatprep.subr.mxu0 0.0
        %374 = vmatpush2.msra.mxu0 0.0
        %375 = vmatprep.subr.mxu0 0.0
        %376 = vmatpush2.msra.mxu0 0.0
        %377 = vmatprep.subr.mxu0 0.0
        %378 = vmatpush2.msra.mxu0 0.0
        %379 = vmatprep.subr.mxu0 0.0
        %380 = vmatpush2.msra.mxu0 0.0
        %381 = vmatprep.subr.mxu0 0.0
        %382 = vmatpush2.msra.mxu0 0.0
        %383 = vmatprep.subr.mxu0 0.0
        %384 = vmatpush2.msra.mxu0 0.0
        %385 = vmatprep.subr.mxu0 0.0
        %386 = vmatpush2.msra.mxu0 0.0
        %387 = vmatprep.subr.mxu0 0.0
        %388 = vmatpush2.msra.mxu0 0.0
        %389 = vmatprep.subr.mxu0 0.0
        %390 = vmatpush2.msra.mxu0 0.0
        %391 = vmatprep.subr.mxu0 0.0
        %392 = vmatpush2.msra.mxu0 0.0
        %393 = vmatprep.subr.mxu0 0.0
        %394 = vmatpush2.msra.mxu0 0.0
        %395 = vmatprep.subr.mxu0 0.0
        %396 = vmatpush2.msra.mxu0 0.0
        %397 = vmatprep.subr.mxu0 0.0
        %398 = vmatpush2.msra.mxu0 0.0
        %399 = vmatprep.mubr.f32.mxu0 0.0
        %400 = vmatmul.mubr.f32.gmra.mxu0 %v326
        %v401 = vpop.f32.mrf.mxu0
        %v402 = vadd.f32 0.0, %v401
        %v403 = vpop.f32.mrf.mxu0
        %v404 = vadd.f32 0.0, %v403
        %405 = vdwg.mxu0
        %v406 = vxor.u32 %v402, 2147483648
        %v407 = vxor.u32 %v404, 2147483648
        %v408 = vmul.f32 %v406, 1.442695
        %v409 = vpow.pop %v408
        %v410 = vmul.f32 %v407, 1.442695
        %v411 = vpow.pop %v410
        %v412 = vadd.f32 %v409, 1.0
        %v413 = vadd.f32 %v411, 1.0
        %v414 = vrcp.pop %v412
        %v415 = vmul.f32 1.0, %v414
        %v416 = vrcp.pop %v413
        %v417 = vmul.f32 1.0, %v416
        %v418 = vmul.f32 %v402, %v415
        %v419 = vmul.f32 %v404, %v417
        %vm420 = vcmp.lt.s32.totalorder %v277, 16
        %vm421 = vcmp.lt.s32.totalorder %v278, 16
        %v422 = vsel %vm420, 1, 0
        %v423 = vsel %vm421, 1, 0
        %vm424 = vcmp.eq.s32.totalorder %v422, 1
        %vm425 = vcmp.eq.s32.totalorder %v423, 1
        %v426 = vsel %vm424, %v418, 0.0
        %v427 = vsel %vm425, %v419, 0.0
        %430 = vrot.lane.b32.xlu0 %v426, 1
        %v431 = vpop.permute.xlu0 %430
        %432 = vrot.lane.b32.xlu0 %v427, 1
        %v433 = vpop.permute.xlu0 %432
        %v434 = vsel %vm290, %v431, %v433
        %v437 = vsel %vm290, 0.0, %v431
        %438 = vrot.lane.b32.xlu0 %v426, 127
        %v439 = vpop.permute.xlu0 %438
        %440 = vrot.lane.b32.xlu0 %v427, 127
        %v441 = vpop.permute.xlu0 %440
        %v442 = vsel %vm299, %v439, %v441
        %v445 = vsel %vm299, %v441, 0.0
        %v446 = vsel %vm306, 0.0, %v437
        %v447 = vsel %vm307, 0.0, %v434
        %v448 = vsel %vm312, 0.0, %v442
        %v449 = vsel %vm313, 0.0, %v445
        %v450 = vld [vmem:[#allocation7] sm:$0xff]
        %vm451 = vcmask 203776
        %v453 = vsel %vm451, %v450, 0
        %vm455 = vcmask 1040384
        %v457 = vsel %vm455, 1.0, 0
        %459 = vmatprep.subr.mxu0 0.0
        %460 = vmatpush1.msra.mxu0 0.0
        %461 = vmatprep.subr.mxu0 0.0
        %462 = vmatpush1.msra.mxu0 0.0
        %463 = vmatprep.subr.mxu0 0.0
        %464 = vmatpush1.msra.mxu0 0.0
        %465 = vmatprep.subr.mxu0 0.0
        %466 = vmatpush1.msra.mxu0 0.0
        %467 = vmatprep.subr.mxu0 0.0
        %468 = vmatpush1.msra.mxu0 0.0
        %469 = vmatprep.subr.mxu0 0.0
        %470 = vmatpush1.msra.mxu0 0.0
        %471 = vmatprep.subr.mxu0 0.0
        %472 = vmatpush1.msra.mxu0 0.0
        %473 = vmatprep.subr.mxu0 0.0
        %474 = vmatpush1.msra.mxu0 0.0
        %475 = vmatprep.subr.mxu0 0.0
        %476 = vmatpush1.msra.mxu0 0.0
        %477 = vmatprep.subr.mxu0 0.0
        %478 = vmatpush1.msra.mxu0 0.0
        %479 = vmatprep.subr.mxu0 0.0
        %480 = vmatpush1.msra.mxu0 0.0
        %481 = vmatprep.subr.mxu0 0.0
        %482 = vmatpush1.msra.mxu0 0.0
        %483 = vmatprep.subr.mxu0 %v457
        %484 = vmatpush1.msra.mxu0 %v457
        %485 = vmatprep.subr.mxu0 %v449
        %486 = vmatpush1.msra.mxu0 %v448
        %487 = vmatprep.subr.mxu0 %v427
        %488 = vmatpush1.msra.mxu0 %v426
        %489 = vmatprep.subr.mxu0 %v447
        %490 = vmatpush1.msra.mxu0 %v446
        %491 = vmatprep.subr.mxu0 0.0
        %492 = vmatpush2.msra.mxu0 0.0
        %493 = vmatprep.subr.mxu0 0.0
        %494 = vmatpush2.msra.mxu0 0.0
        %495 = vmatprep.subr.mxu0 0.0
        %496 = vmatpush2.msra.mxu0 0.0
        %497 = vmatprep.subr.mxu0 0.0
        %498 = vmatpush2.msra.mxu0 0.0
        %499 = vmatprep.subr.mxu0 0.0
        %500 = vmatpush2.msra.mxu0 0.0
        %501 = vmatprep.subr.mxu0 0.0
        %502 = vmatpush2.msra.mxu0 0.0
        %503 = vmatprep.subr.mxu0 0.0
        %504 = vmatpush2.msra.mxu0 0.0
        %505 = vmatprep.subr.mxu0 0.0
        %506 = vmatpush2.msra.mxu0 0.0
        %507 = vmatprep.subr.mxu0 0.0
        %508 = vmatpush2.msra.mxu0 0.0
        %509 = vmatprep.subr.mxu0 0.0
        %510 = vmatpush2.msra.mxu0 0.0
        %511 = vmatprep.subr.mxu0 0.0
        %512 = vmatpush2.msra.mxu0 0.0
        %513 = vmatprep.subr.mxu0 0.0
        %514 = vmatpush2.msra.mxu0 0.0
        %515 = vmatprep.subr.mxu0 0.0
        %516 = vmatpush2.msra.mxu0 0.0
        %517 = vmatprep.subr.mxu0 0.0
        %518 = vmatpush2.msra.mxu0 0.0
        %519 = vmatprep.subr.mxu0 0.0
        %520 = vmatpush2.msra.mxu0 0.0
        %521 = vmatprep.subr.mxu0 0.0
        %522 = vmatpush2.msra.mxu0 0.0
        %523 = vmatprep.mubr.f32.mxu0 0.0
        %524 = vmatmul.mubr.f32.gmra.mxu0 %v453
        %v525 = vpop.f32.mrf.mxu0
        %v526 = vadd.f32 0.0, %v525
        %v527 = vpop.f32.mrf.mxu0
        %v528 = vadd.f32 0.0, %v527
        %529 = vdwg.mxu0
        %v530 = vxor.u32 %v526, 2147483648
        %v531 = vxor.u32 %v528, 2147483648
        %v532 = vmul.f32 %v530, 1.442695
        %v533 = vpow.pop %v532
        %v534 = vmul.f32 %v531, 1.442695
        %v535 = vpow.pop %v534
        %v536 = vadd.f32 %v533, 1.0
        %v537 = vadd.f32 %v535, 1.0
        %v538 = vrcp.pop %v536
        %v539 = vmul.f32 1.0, %v538
        %v540 = vrcp.pop %v537
        %v541 = vmul.f32 1.0, %v540
        %v542 = vmul.f32 %v526, %v539
        %v543 = vmul.f32 %v528, %v541
        %544 = vst [vmem:[%s242] sm:$0xff] %v542
        %545 = vst [vmem:[%s242 + $0x8] sm:$0xff] %v543
        %547 = vrot.lane.b32.xlu0 %v542, 126
        %v548 = vpop.permute.xlu0 %547
        %550 = vrot.lane.b32.xlu0 %v542, 124
        %v551 = vpop.permute.xlu0 %550
        %553 = vrot.lane.b32.xlu0 %v542, 122
        %v554 = vpop.permute.xlu0 %553
        %556 = vrot.lane.b32.xlu0 %v542, 120
        %v557 = vpop.permute.xlu0 %556
        %559 = vrot.lane.b32.xlu0 %v542, 118
        %v560 = vpop.permute.xlu0 %559
        %562 = vrot.lane.b32.xlu0 %v542, 116
        %v563 = vpop.permute.xlu0 %562
        %565 = vrot.lane.b32.xlu0 %v542, 114
        %v566 = vpop.permute.xlu0 %565
        %568 = vrot.lane.b32.xlu0 %v542, 112
        %v569 = vpop.permute.xlu0 %568
        %571 = vrot.lane.b32.xlu0 %v542, 110
        %v572 = vpop.permute.xlu0 %571
        %574 = vrot.lane.b32.xlu0 %v542, 108
        %v575 = vpop.permute.xlu0 %574
        %577 = vrot.lane.b32.xlu0 %v542, 106
        %v578 = vpop.permute.xlu0 %577
        %580 = vrot.lane.b32.xlu0 %v542, 104
        %v581 = vpop.permute.xlu0 %580
        %583 = vrot.lane.b32.xlu0 %v542, 102
        %v584 = vpop.permute.xlu0 %583
        %586 = vrot.lane.b32.xlu0 %v542, 100
        %v587 = vpop.permute.xlu0 %586
        %589 = vrot.lane.b32.xlu0 %v542, 98
        %v590 = vpop.permute.xlu0 %589
        %592 = vrot.lane.b32.xlu0 %v542, 96
        %v593 = vpop.permute.xlu0 %592
        %595 = vrot.lane.b32.xlu0 %v542, 94
        %v596 = vpop.permute.xlu0 %595
        %598 = vrot.lane.b32.xlu0 %v542, 92
        %v599 = vpop.permute.xlu0 %598
        %601 = vrot.lane.b32.xlu0 %v542, 90
        %v602 = vpop.permute.xlu0 %601
        %604 = vrot.lane.b32.xlu0 %v542, 88
        %v605 = vpop.permute.xlu0 %604
        %607 = vrot.lane.b32.xlu0 %v542, 86
        %v608 = vpop.permute.xlu0 %607
        %610 = vrot.lane.b32.xlu0 %v542, 84
        %v611 = vpop.permute.xlu0 %610
        %613 = vrot.lane.b32.xlu0 %v542, 82
        %v614 = vpop.permute.xlu0 %613
        %616 = vrot.lane.b32.xlu0 %v542, 80
        %v617 = vpop.permute.xlu0 %616
        %619 = vrot.lane.b32.xlu0 %v542, 78
        %v620 = vpop.permute.xlu0 %619
        %622 = vrot.lane.b32.xlu0 %v542, 76
        %v623 = vpop.permute.xlu0 %622
        %625 = vrot.lane.b32.xlu0 %v542, 74
        %v626 = vpop.permute.xlu0 %625
        %628 = vrot.lane.b32.xlu0 %v542, 72
        %v629 = vpop.permute.xlu0 %628
        %631 = vrot.lane.b32.xlu0 %v542, 70
        %v632 = vpop.permute.xlu0 %631
        %634 = vrot.lane.b32.xlu0 %v542, 68
        %v635 = vpop.permute.xlu0 %634
        %637 = vrot.lane.b32.xlu0 %v542, 66
        %v638 = vpop.permute.xlu0 %637
        %640 = vrot.lane.b32.xlu0 %v542, 64
        %v641 = vpop.permute.xlu0 %640
        %643 = vrot.lane.b32.xlu0 %v542, 62
        %v644 = vpop.permute.xlu0 %643
        %646 = vrot.lane.b32.xlu0 %v542, 60
        %v647 = vpop.permute.xlu0 %646
        %649 = vrot.lane.b32.xlu0 %v542, 58
        %v650 = vpop.permute.xlu0 %649
        %652 = vrot.lane.b32.xlu0 %v542, 56
        %v653 = vpop.permute.xlu0 %652
        %655 = vrot.lane.b32.xlu0 %v542, 54
        %v656 = vpop.permute.xlu0 %655
        %658 = vrot.lane.b32.xlu0 %v542, 52
        %v659 = vpop.permute.xlu0 %658
        %661 = vrot.lane.b32.xlu0 %v542, 50
        %v662 = vpop.permute.xlu0 %661
        %664 = vrot.lane.b32.xlu0 %v542, 48
        %v665 = vpop.permute.xlu0 %664
        %667 = vrot.lane.b32.xlu0 %v542, 46
        %v668 = vpop.permute.xlu0 %667
        %670 = vrot.lane.b32.xlu0 %v542, 44
        %v671 = vpop.permute.xlu0 %670
        %673 = vrot.lane.b32.xlu0 %v542, 42
        %v674 = vpop.permute.xlu0 %673
        %676 = vrot.lane.b32.xlu0 %v542, 40
        %v677 = vpop.permute.xlu0 %676
        %679 = vrot.lane.b32.xlu0 %v542, 38
        %v680 = vpop.permute.xlu0 %679
        %682 = vrot.lane.b32.xlu0 %v542, 36
        %v683 = vpop.permute.xlu0 %682
        %685 = vrot.lane.b32.xlu0 %v542, 34
        %v686 = vpop.permute.xlu0 %685
        %688 = vrot.lane.b32.xlu0 %v542, 32
        %v689 = vpop.permute.xlu0 %688
        %691 = vrot.lane.b32.xlu0 %v542, 30
        %v692 = vpop.permute.xlu0 %691
        %694 = vrot.lane.b32.xlu0 %v542, 28
        %v695 = vpop.permute.xlu0 %694
        %697 = vrot.lane.b32.xlu0 %v542, 26
        %v698 = vpop.permute.xlu0 %697
        %700 = vrot.lane.b32.xlu0 %v542, 24
        %v701 = vpop.permute.xlu0 %700
        %703 = vrot.lane.b32.xlu0 %v542, 22
        %v704 = vpop.permute.xlu0 %703
        %706 = vrot.lane.b32.xlu0 %v542, 20
        %v707 = vpop.permute.xlu0 %706
        %709 = vrot.lane.b32.xlu0 %v542, 18
        %v710 = vpop.permute.xlu0 %709
        %712 = vrot.lane.b32.xlu0 %v542, 16
        %v713 = vpop.permute.xlu0 %712
        %715 = vrot.lane.b32.xlu0 %v542, 14
        %v716 = vpop.permute.xlu0 %715
        %718 = vrot.lane.b32.xlu0 %v542, 12
        %v719 = vpop.permute.xlu0 %718
        %721 = vrot.lane.b32.xlu0 %v542, 10
        %v722 = vpop.permute.xlu0 %721
        %724 = vrot.lane.b32.xlu0 %v542, 8
        %v725 = vpop.permute.xlu0 %724
        %727 = vrot.lane.b32.xlu0 %v542, 6
        %v728 = vpop.permute.xlu0 %727
        %730 = vrot.lane.b32.xlu0 %v542, 4
        %v731 = vpop.permute.xlu0 %730
        %733 = vrot.lane.b32.xlu0 %v542, 2
        %v734 = vpop.permute.xlu0 %733
        %737 = vrot.lane.b32.xlu0 %v543, 126
        %v738 = vpop.permute.xlu0 %737
        %740 = vrot.lane.b32.xlu0 %v543, 124
        %v741 = vpop.permute.xlu0 %740
        %743 = vrot.lane.b32.xlu0 %v543, 122
        %v744 = vpop.permute.xlu0 %743
        %746 = vrot.lane.b32.xlu0 %v543, 120
        %v747 = vpop.permute.xlu0 %746
        %749 = vrot.lane.b32.xlu0 %v543, 118
        %v750 = vpop.permute.xlu0 %749
        %752 = vrot.lane.b32.xlu0 %v543, 116
        %v753 = vpop.permute.xlu0 %752
        %755 = vrot.lane.b32.xlu0 %v543, 114
        %v756 = vpop.permute.xlu0 %755
        %758 = vrot.lane.b32.xlu0 %v543, 112
        %v759 = vpop.permute.xlu0 %758
        %761 = vrot.lane.b32.xlu0 %v543, 110
        %v762 = vpop.permute.xlu0 %761
        %764 = vrot.lane.b32.xlu0 %v543, 108
        %v765 = vpop.permute.xlu0 %764
        %767 = vrot.lane.b32.xlu0 %v543, 106
        %v768 = vpop.permute.xlu0 %767
        %770 = vrot.lane.b32.xlu0 %v543, 104
        %v771 = vpop.permute.xlu0 %770
        %773 = vrot.lane.b32.xlu0 %v543, 102
        %v774 = vpop.permute.xlu0 %773
        %776 = vrot.lane.b32.xlu0 %v543, 100
        %v777 = vpop.permute.xlu0 %776
        %779 = vrot.lane.b32.xlu0 %v543, 98
        %v780 = vpop.permute.xlu0 %779
        %782 = vrot.lane.b32.xlu0 %v543, 96
        %v783 = vpop.permute.xlu0 %782
        %785 = vrot.lane.b32.xlu0 %v543, 94
        %v786 = vpop.permute.xlu0 %785
        %788 = vrot.lane.b32.xlu0 %v543, 92
        %v789 = vpop.permute.xlu0 %788
        %791 = vrot.lane.b32.xlu0 %v543, 90
        %v792 = vpop.permute.xlu0 %791
        %794 = vrot.lane.b32.xlu0 %v543, 88
        %v795 = vpop.permute.xlu0 %794
        %797 = vrot.lane.b32.xlu0 %v543, 86
        %v798 = vpop.permute.xlu0 %797
        %800 = vrot.lane.b32.xlu0 %v543, 84
        %v801 = vpop.permute.xlu0 %800
        %803 = vrot.lane.b32.xlu0 %v543, 82
        %v804 = vpop.permute.xlu0 %803
        %806 = vrot.lane.b32.xlu0 %v543, 80
        %v807 = vpop.permute.xlu0 %806
        %809 = vrot.lane.b32.xlu0 %v543, 78
        %v810 = vpop.permute.xlu0 %809
        %812 = vrot.lane.b32.xlu0 %v543, 76
        %v813 = vpop.permute.xlu0 %812
        %815 = vrot.lane.b32.xlu0 %v543, 74
        %v816 = vpop.permute.xlu0 %815
        %818 = vrot.lane.b32.xlu0 %v543, 72
        %v819 = vpop.permute.xlu0 %818
        %821 = vrot.lane.b32.xlu0 %v543, 70
        %v822 = vpop.permute.xlu0 %821
        %824 = vrot.lane.b32.xlu0 %v543, 68
        %v825 = vpop.permute.xlu0 %824
        %827 = vrot.lane.b32.xlu0 %v543, 66
        %v828 = vpop.permute.xlu0 %827
        %830 = vrot.lane.b32.xlu0 %v543, 64
        %v831 = vpop.permute.xlu0 %830
        %833 = vrot.lane.b32.xlu0 %v543, 62
        %v834 = vpop.permute.xlu0 %833
        %836 = vrot.lane.b32.xlu0 %v543, 60
        %v837 = vpop.permute.xlu0 %836
        %839 = vrot.lane.b32.xlu0 %v543, 58
        %v840 = vpop.permute.xlu0 %839
        %842 = vrot.lane.b32.xlu0 %v543, 56
        %v843 = vpop.permute.xlu0 %842
        %845 = vrot.lane.b32.xlu0 %v543, 54
        %v846 = vpop.permute.xlu0 %845
        %848 = vrot.lane.b32.xlu0 %v543, 52
        %v849 = vpop.permute.xlu0 %848
        %851 = vrot.lane.b32.xlu0 %v543, 50
        %v852 = vpop.permute.xlu0 %851
        %854 = vrot.lane.b32.xlu0 %v543, 48
        %v855 = vpop.permute.xlu0 %854
        %857 = vrot.lane.b32.xlu0 %v543, 46
        %v858 = vpop.permute.xlu0 %857
        %860 = vrot.lane.b32.xlu0 %v543, 44
        %v861 = vpop.permute.xlu0 %860
        %863 = vrot.lane.b32.xlu0 %v543, 42
        %v864 = vpop.permute.xlu0 %863
        %866 = vrot.lane.b32.xlu0 %v543, 40
        %v867 = vpop.permute.xlu0 %866
        %869 = vrot.lane.b32.xlu0 %v543, 38
        %v870 = vpop.permute.xlu0 %869
        %872 = vrot.lane.b32.xlu0 %v543, 36
        %v873 = vpop.permute.xlu0 %872
        %875 = vrot.lane.b32.xlu0 %v543, 34
        %v876 = vpop.permute.xlu0 %875
        %878 = vrot.lane.b32.xlu0 %v543, 32
        %v879 = vpop.permute.xlu0 %878
        %881 = vrot.lane.b32.xlu0 %v543, 30
        %v882 = vpop.permute.xlu0 %881
        %884 = vrot.lane.b32.xlu0 %v543, 28
        %v885 = vpop.permute.xlu0 %884
        %887 = vrot.lane.b32.xlu0 %v543, 26
        %v888 = vpop.permute.xlu0 %887
        %890 = vrot.lane.b32.xlu0 %v543, 24
        %v891 = vpop.permute.xlu0 %890
        %893 = vrot.lane.b32.xlu0 %v543, 22
        %v894 = vpop.permute.xlu0 %893
        %896 = vrot.lane.b32.xlu0 %v543, 20
        %v897 = vpop.permute.xlu0 %896
        %899 = vrot.lane.b32.xlu0 %v543, 18
        %v900 = vpop.permute.xlu0 %899
        %902 = vrot.lane.b32.xlu0 %v543, 16
        %v903 = vpop.permute.xlu0 %902
        %905 = vrot.lane.b32.xlu0 %v543, 14
        %v906 = vpop.permute.xlu0 %905
        %908 = vrot.lane.b32.xlu0 %v543, 12
        %v909 = vpop.permute.xlu0 %908
        %911 = vrot.lane.b32.xlu0 %v543, 10
        %v912 = vpop.permute.xlu0 %911
        %914 = vrot.lane.b32.xlu0 %v543, 8
        %v915 = vpop.permute.xlu0 %914
        %917 = vrot.lane.b32.xlu0 %v543, 6
        %v918 = vpop.permute.xlu0 %917
        %920 = vrot.lane.b32.xlu0 %v543, 4
        %v921 = vpop.permute.xlu0 %920
        %923 = vrot.lane.b32.xlu0 %v543, 2
        %v924 = vpop.permute.xlu0 %923
        %v926 = vcombine.low %v542, %v551
        %v927 = vcombine.high %v542, %v551
        %v929 = vunpack.c.l.s4 1983009808
        %v930 = vunpack.c.0.s8 %v929
        %v931 = vlaneseq
        %v932 = vshrl.u32 %v931, 7
        %v933 = vsub.s32 %v930, %v932
        %v934 = vrot.slane %v926, %v933
        %v936 = vunpack.c.l.s4 1983009808
        %v937 = vunpack.c.0.s8 %v936
        %v938 = vlaneseq
        %v939 = vshrl.u32 %v938, 7
        %v940 = vsub.s32 %v937, %v939
        %v941 = vrot.slane %v927, %v940
        %v942 = vcombine.low %v548, %v554
        %v943 = vcombine.high %v548, %v554
        %v945 = vunpack.c.l.s4 1983009808
        %v946 = vunpack.c.0.s8 %v945
        %v947 = vlaneseq
        %v948 = vshrl.u32 %v947, 7
        %v949 = vsub.s32 %v946, %v948
        %v950 = vrot.slane %v942, %v949
        %v952 = vunpack.c.l.s4 1983009808
        %v953 = vunpack.c.0.s8 %v952
        %v954 = vlaneseq
        %v955 = vshrl.u32 %v954, 7
        %v956 = vsub.s32 %v953, %v955
        %v957 = vrot.slane %v943, %v956
        %v958 = vcombine.low %v557, %v563
        %v959 = vcombine.high %v557, %v563
        %v961 = vunpack.c.l.s4 1983009808
        %v962 = vunpack.c.0.s8 %v961
        %v963 = vlaneseq
        %v964 = vshrl.u32 %v963, 7
        %v965 = vsub.s32 %v962, %v964
        %v966 = vrot.slane %v958, %v965
        %v968 = vunpack.c.l.s4 1983009808
        %v969 = vunpack.c.0.s8 %v968
        %v970 = vlaneseq
        %v971 = vshrl.u32 %v970, 7
        %v972 = vsub.s32 %v969, %v971
        %v973 = vrot.slane %v959, %v972
        %v974 = vcombine.low %v560, %v566
        %v975 = vcombine.high %v560, %v566
        %v977 = vunpack.c.l.s4 1983009808
        %v978 = vunpack.c.0.s8 %v977
        %v979 = vlaneseq
        %v980 = vshrl.u32 %v979, 7
        %v981 = vsub.s32 %v978, %v980
        %v982 = vrot.slane %v974, %v981
        %v984 = vunpack.c.l.s4 1983009808
        %v985 = vunpack.c.0.s8 %v984
        %v986 = vlaneseq
        %v987 = vshrl.u32 %v986, 7
        %v988 = vsub.s32 %v985, %v987
        %v989 = vrot.slane %v975, %v988
        %v990 = vcombine.low %v934, %v950
        %v991 = vcombine.high %v934, %v950
        %v993 = vunpack.c.l.s4 1934713408
        %v994 = vunpack.c.0.s8 %v993
        %v995 = vlaneseq
        %v996 = vshrl.u32 %v995, 7
        %v997 = vsub.s32 %v994, %v996
        %v998 = vrot.slane %v990, %v997
        %v1000 = vunpack.c.l.s4 1934713408
        %v1001 = vunpack.c.0.s8 %v1000
        %v1002 = vlaneseq
        %v1003 = vshrl.u32 %v1002, 7
        %v1004 = vsub.s32 %v1001, %v1003
        %v1005 = vrot.slane %v991, %v1004
        %v1006 = vcombine.low %v941, %v957
        %v1007 = vcombine.high %v941, %v957
        %v1009 = vunpack.c.l.s4 1934713408
        %v1010 = vunpack.c.0.s8 %v1009
        %v1011 = vlaneseq
        %v1012 = vshrl.u32 %v1011, 7
        %v1013 = vsub.s32 %v1010, %v1012
        %v1014 = vrot.slane %v1006, %v1013
        %v1016 = vunpack.c.l.s4 1934713408
        %v1017 = vunpack.c.0.s8 %v1016
        %v1018 = vlaneseq
        %v1019 = vshrl.u32 %v1018, 7
        %v1020 = vsub.s32 %v1017, %v1019
        %v1021 = vrot.slane %v1007, %v1020
        %v1022 = vcombine.low %v966, %v982
        %v1023 = vcombine.high %v966, %v982
        %v1025 = vunpack.c.l.s4 1934713408
        %v1026 = vunpack.c.0.s8 %v1025
        %v1027 = vlaneseq
        %v1028 = vshrl.u32 %v1027, 7
        %v1029 = vsub.s32 %v1026, %v1028
        %v1030 = vrot.slane %v1022, %v1029
        %v1032 = vunpack.c.l.s4 1934713408
        %v1033 = vunpack.c.0.s8 %v1032
        %v1034 = vlaneseq
        %v1035 = vshrl.u32 %v1034, 7
        %v1036 = vsub.s32 %v1033, %v1035
        %v1037 = vrot.slane %v1023, %v1036
        %v1038 = vcombine.low %v973, %v989
        %v1039 = vcombine.high %v973, %v989
        %v1041 = vunpack.c.l.s4 1934713408
        %v1042 = vunpack.c.0.s8 %v1041
        %v1043 = vlaneseq
        %v1044 = vshrl.u32 %v1043, 7
        %v1045 = vsub.s32 %v1042, %v1044
        %v1046 = vrot.slane %v1038, %v1045
        %v1048 = vunpack.c.l.s4 1934713408
        %v1049 = vunpack.c.0.s8 %v1048
        %v1050 = vlaneseq
        %v1051 = vshrl.u32 %v1050, 7
        %v1052 = vsub.s32 %v1049, %v1051
        %v1053 = vrot.slane %v1039, %v1052
        %v1054 = vcombine.low %v998, %v1030
        %v1055 = vcombine.high %v998, %v1030
        %v1056 = vcombine.low %v1005, %v1037
        %v1057 = vcombine.high %v1005, %v1037
        %v1058 = vcombine.low %v1014, %v1046
        %v1059 = vcombine.high %v1014, %v1046
        %v1060 = vcombine.low %v1021, %v1053
        %v1061 = vcombine.high %v1021, %v1053
        %v1062 = vcombine.low %v569, %v575
        %v1063 = vcombine.high %v569, %v575
        %v1065 = vunpack.c.l.s4 1983009808
        %v1066 = vunpack.c.0.s8 %v1065
        %v1067 = vlaneseq
        %v1068 = vshrl.u32 %v1067, 7
        %v1069 = vsub.s32 %v1066, %v1068
        %v1070 = vrot.slane %v1062, %v1069
        %v1072 = vunpack.c.l.s4 1983009808
        %v1073 = vunpack.c.0.s8 %v1072
        %v1074 = vlaneseq
        %v1075 = vshrl.u32 %v1074, 7
        %v1076 = vsub.s32 %v1073, %v1075
        %v1077 = vrot.slane %v1063, %v1076
        %v1078 = vcombine.low %v572, %v578
        %v1079 = vcombine.high %v572, %v578
        %v1081 = vunpack.c.l.s4 1983009808
        %v1082 = vunpack.c.0.s8 %v1081
        %v1083 = vlaneseq
        %v1084 = vshrl.u32 %v1083, 7
        %v1085 = vsub.s32 %v1082, %v1084
        %v1086 = vrot.slane %v1078, %v1085
        %v1088 = vunpack.c.l.s4 1983009808
        %v1089 = vunpack.c.0.s8 %v1088
        %v1090 = vlaneseq
        %v1091 = vshrl.u32 %v1090, 7
        %v1092 = vsub.s32 %v1089, %v1091
        %v1093 = vrot.slane %v1079, %v1092
        %v1094 = vcombine.low %v581, %v587
        %v1095 = vcombine.high %v581, %v587
        %v1097 = vunpack.c.l.s4 1983009808
        %v1098 = vunpack.c.0.s8 %v1097
        %v1099 = vlaneseq
        %v1100 = vshrl.u32 %v1099, 7
        %v1101 = vsub.s32 %v1098, %v1100
        %v1102 = vrot.slane %v1094, %v1101
        %v1104 = vunpack.c.l.s4 1983009808
        %v1105 = vunpack.c.0.s8 %v1104
        %v1106 = vlaneseq
        %v1107 = vshrl.u32 %v1106, 7
        %v1108 = vsub.s32 %v1105, %v1107
        %v1109 = vrot.slane %v1095, %v1108
        %v1110 = vcombine.low %v584, %v590
        %v1111 = vcombine.high %v584, %v590
        %v1113 = vunpack.c.l.s4 1983009808
        %v1114 = vunpack.c.0.s8 %v1113
        %v1115 = vlaneseq
        %v1116 = vshrl.u32 %v1115, 7
        %v1117 = vsub.s32 %v1114, %v1116
        %v1118 = vrot.slane %v1110, %v1117
        %v1120 = vunpack.c.l.s4 1983009808
        %v1121 = vunpack.c.0.s8 %v1120
        %v1122 = vlaneseq
        %v1123 = vshrl.u32 %v1122, 7
        %v1124 = vsub.s32 %v1121, %v1123
        %v1125 = vrot.slane %v1111, %v1124
        %v1126 = vcombine.low %v1070, %v1086
        %v1127 = vcombine.high %v1070, %v1086
        %v1129 = vunpack.c.l.s4 1934713408
        %v1130 = vunpack.c.0.s8 %v1129
        %v1131 = vlaneseq
        %v1132 = vshrl.u32 %v1131, 7
        %v1133 = vsub.s32 %v1130, %v1132
        %v1134 = vrot.slane %v1126, %v1133
        %v1136 = vunpack.c.l.s4 1934713408
        %v1137 = vunpack.c.0.s8 %v1136
        %v1138 = vlaneseq
        %v1139 = vshrl.u32 %v1138, 7
        %v1140 = vsub.s32 %v1137, %v1139
        %v1141 = vrot.slane %v1127, %v1140
        %v1142 = vcombine.low %v1077, %v1093
        %v1143 = vcombine.high %v1077, %v1093
        %v1145 = vunpack.c.l.s4 1934713408
        %v1146 = vunpack.c.0.s8 %v1145
        %v1147 = vlaneseq
        %v1148 = vshrl.u32 %v1147, 7
        %v1149 = vsub.s32 %v1146, %v1148
        %v1150 = vrot.slane %v1142, %v1149
        %v1152 = vunpack.c.l.s4 1934713408
        %v1153 = vunpack.c.0.s8 %v1152
        %v1154 = vlaneseq
        %v1155 = vshrl.u32 %v1154, 7
        %v1156 = vsub.s32 %v1153, %v1155
        %v1157 = vrot.slane %v1143, %v1156
        %v1158 = vcombine.low %v1102, %v1118
        %v1159 = vcombine.high %v1102, %v1118
        %v1161 = vunpack.c.l.s4 1934713408
        %v1162 = vunpack.c.0.s8 %v1161
        %v1163 = vlaneseq
        %v1164 = vshrl.u32 %v1163, 7
        %v1165 = vsub.s32 %v1162, %v1164
        %v1166 = vrot.slane %v1158, %v1165
        %v1168 = vunpack.c.l.s4 1934713408
        %v1169 = vunpack.c.0.s8 %v1168
        %v1170 = vlaneseq
        %v1171 = vshrl.u32 %v1170, 7
        %v1172 = vsub.s32 %v1169, %v1171
        %v1173 = vrot.slane %v1159, %v1172
        %v1174 = vcombine.low %v1109, %v1125
        %v1175 = vcombine.high %v1109, %v1125
        %v1177 = vunpack.c.l.s4 1934713408
        %v1178 = vunpack.c.0.s8 %v1177
        %v1179 = vlaneseq
        %v1180 = vshrl.u32 %v1179, 7
        %v1181 = vsub.s32 %v1178, %v1180
        %v1182 = vrot.slane %v1174, %v1181
        %v1184 = vunpack.c.l.s4 1934713408
        %v1185 = vunpack.c.0.s8 %v1184
        %v1186 = vlaneseq
        %v1187 = vshrl.u32 %v1186, 7
        %v1188 = vsub.s32 %v1185, %v1187
        %v1189 = vrot.slane %v1175, %v1188
        %v1190 = vcombine.low %v1134, %v1166
        %v1191 = vcombine.high %v1134, %v1166
        %v1192 = vcombine.low %v1141, %v1173
        %v1193 = vcombine.high %v1141, %v1173
        %v1194 = vcombine.low %v1150, %v1182
        %v1195 = vcombine.high %v1150, %v1182
        %v1196 = vcombine.low %v1157, %v1189
        %v1197 = vcombine.high %v1157, %v1189
        %v1198 = vcombine.low %v593, %v599
        %v1199 = vcombine.high %v593, %v599
        %v1201 = vunpack.c.l.s4 1983009808
        %v1202 = vunpack.c.0.s8 %v1201
        %v1203 = vlaneseq
        %v1204 = vshrl.u32 %v1203, 7
        %v1205 = vsub.s32 %v1202, %v1204
        %v1206 = vrot.slane %v1198, %v1205
        %v1208 = vunpack.c.l.s4 1983009808
        %v1209 = vunpack.c.0.s8 %v1208
        %v1210 = vlaneseq
        %v1211 = vshrl.u32 %v1210, 7
        %v1212 = vsub.s32 %v1209, %v1211
        %v1213 = vrot.slane %v1199, %v1212
        %v1214 = vcombine.low %v596, %v602
        %v1215 = vcombine.high %v596, %v602
        %v1217 = vunpack.c.l.s4 1983009808
        %v1218 = vunpack.c.0.s8 %v1217
        %v1219 = vlaneseq
        %v1220 = vshrl.u32 %v1219, 7
        %v1221 = vsub.s32 %v1218, %v1220
        %v1222 = vrot.slane %v1214, %v1221
        %v1224 = vunpack.c.l.s4 1983009808
        %v1225 = vunpack.c.0.s8 %v1224
        %v1226 = vlaneseq
        %v1227 = vshrl.u32 %v1226, 7
        %v1228 = vsub.s32 %v1225, %v1227
        %v1229 = vrot.slane %v1215, %v1228
        %v1230 = vcombine.low %v605, %v611
        %v1231 = vcombine.high %v605, %v611
        %v1233 = vunpack.c.l.s4 1983009808
        %v1234 = vunpack.c.0.s8 %v1233
        %v1235 = vlaneseq
        %v1236 = vshrl.u32 %v1235, 7
        %v1237 = vsub.s32 %v1234, %v1236
        %v1238 = vrot.slane %v1230, %v1237
        %v1240 = vunpack.c.l.s4 1983009808
        %v1241 = vunpack.c.0.s8 %v1240
        %v1242 = vlaneseq
        %v1243 = vshrl.u32 %v1242, 7
        %v1244 = vsub.s32 %v1241, %v1243
        %v1245 = vrot.slane %v1231, %v1244
        %v1246 = vcombine.low %v608, %v614
        %v1247 = vcombine.high %v608, %v614
        %v1249 = vunpack.c.l.s4 1983009808
        %v1250 = vunpack.c.0.s8 %v1249
        %v1251 = vlaneseq
        %v1252 = vshrl.u32 %v1251, 7
        %v1253 = vsub.s32 %v1250, %v1252
        %v1254 = vrot.slane %v1246, %v1253
        %v1256 = vunpack.c.l.s4 1983009808
        %v1257 = vunpack.c.0.s8 %v1256
        %v1258 = vlaneseq
        %v1259 = vshrl.u32 %v1258, 7
        %v1260 = vsub.s32 %v1257, %v1259
        %v1261 = vrot.slane %v1247, %v1260
        %v1262 = vcombine.low %v1206, %v1222
        %v1263 = vcombine.high %v1206, %v1222
        %v1265 = vunpack.c.l.s4 1934713408
        %v1266 = vunpack.c.0.s8 %v1265
        %v1267 = vlaneseq
        %v1268 = vshrl.u32 %v1267, 7
        %v1269 = vsub.s32 %v1266, %v1268
        %v1270 = vrot.slane %v1262, %v1269
        %v1272 = vunpack.c.l.s4 1934713408
        %v1273 = vunpack.c.0.s8 %v1272
        %v1274 = vlaneseq
        %v1275 = vshrl.u32 %v1274, 7
        %v1276 = vsub.s32 %v1273, %v1275
        %v1277 = vrot.slane %v1263, %v1276
        %v1278 = vcombine.low %v1213, %v1229
        %v1279 = vcombine.high %v1213, %v1229
        %v1281 = vunpack.c.l.s4 1934713408
        %v1282 = vunpack.c.0.s8 %v1281
        %v1283 = vlaneseq
        %v1284 = vshrl.u32 %v1283, 7
        %v1285 = vsub.s32 %v1282, %v1284
        %v1286 = vrot.slane %v1278, %v1285
        %v1288 = vunpack.c.l.s4 1934713408
        %v1289 = vunpack.c.0.s8 %v1288
        %v1290 = vlaneseq
        %v1291 = vshrl.u32 %v1290, 7
        %v1292 = vsub.s32 %v1289, %v1291
        %v1293 = vrot.slane %v1279, %v1292
        %v1294 = vcombine.low %v1238, %v1254
        %v1295 = vcombine.high %v1238, %v1254
        %v1297 = vunpack.c.l.s4 1934713408
        %v1298 = vunpack.c.0.s8 %v1297
        %v1299 = vlaneseq
        %v1300 = vshrl.u32 %v1299, 7
        %v1301 = vsub.s32 %v1298, %v1300
        %v1302 = vrot.slane %v1294, %v1301
        %v1304 = vunpack.c.l.s4 1934713408
        %v1305 = vunpack.c.0.s8 %v1304
        %v1306 = vlaneseq
        %v1307 = vshrl.u32 %v1306, 7
        %v1308 = vsub.s32 %v1305, %v1307
        %v1309 = vrot.slane %v1295, %v1308
        %v1310 = vcombine.low %v1245, %v1261
        %v1311 = vcombine.high %v1245, %v1261
        %v1313 = vunpack.c.l.s4 1934713408
        %v1314 = vunpack.c.0.s8 %v1313
        %v1315 = vlaneseq
        %v1316 = vshrl.u32 %v1315, 7
        %v1317 = vsub.s32 %v1314, %v1316
        %v1318 = vrot.slane %v1310, %v1317
        %v1320 = vunpack.c.l.s4 1934713408
        %v1321 = vunpack.c.0.s8 %v1320
        %v1322 = vlaneseq
        %v1323 = vshrl.u32 %v1322, 7
        %v1324 = vsub.s32 %v1321, %v1323
        %v1325 = vrot.slane %v1311, %v1324
        %v1326 = vcombine.low %v1270, %v1302
        %v1327 = vcombine.high %v1270, %v1302
        %v1328 = vcombine.low %v1277, %v1309
        %v1329 = vcombine.high %v1277, %v1309
        %v1330 = vcombine.low %v1286, %v1318
        %v1331 = vcombine.high %v1286, %v1318
        %v1332 = vcombine.low %v1293, %v1325
        %v1333 = vcombine.high %v1293, %v1325
        %v1334 = vcombine.low %v617, %v623
        %v1335 = vcombine.high %v617, %v623
        %v1337 = vunpack.c.l.s4 1983009808
        %v1338 = vunpack.c.0.s8 %v1337
        %v1339 = vlaneseq
        %v1340 = vshrl.u32 %v1339, 7
        %v1341 = vsub.s32 %v1338, %v1340
        %v1342 = vrot.slane %v1334, %v1341
        %v1344 = vunpack.c.l.s4 1983009808
        %v1345 = vunpack.c.0.s8 %v1344
        %v1346 = vlaneseq
        %v1347 = vshrl.u32 %v1346, 7
        %v1348 = vsub.s32 %v1345, %v1347
        %v1349 = vrot.slane %v1335, %v1348
        %v1350 = vcombine.low %v620, %v626
        %v1351 = vcombine.high %v620, %v626
        %v1353 = vunpack.c.l.s4 1983009808
        %v1354 = vunpack.c.0.s8 %v1353
        %v1355 = vlaneseq
        %v1356 = vshrl.u32 %v1355, 7
        %v1357 = vsub.s32 %v1354, %v1356
        %v1358 = vrot.slane %v1350, %v1357
        %v1360 = vunpack.c.l.s4 1983009808
        %v1361 = vunpack.c.0.s8 %v1360
        %v1362 = vlaneseq
        %v1363 = vshrl.u32 %v1362, 7
        %v1364 = vsub.s32 %v1361, %v1363
        %v1365 = vrot.slane %v1351, %v1364
        %v1366 = vcombine.low %v629, %v635
        %v1367 = vcombine.high %v629, %v635
        %v1369 = vunpack.c.l.s4 1983009808
        %v1370 = vunpack.c.0.s8 %v1369
        %v1371 = vlaneseq
        %v1372 = vshrl.u32 %v1371, 7
        %v1373 = vsub.s32 %v1370, %v1372
        %v1374 = vrot.slane %v1366, %v1373
        %v1376 = vunpack.c.l.s4 1983009808
        %v1377 = vunpack.c.0.s8 %v1376
        %v1378 = vlaneseq
        %v1379 = vshrl.u32 %v1378, 7
        %v1380 = vsub.s32 %v1377, %v1379
        %v1381 = vrot.slane %v1367, %v1380
        %v1382 = vcombine.low %v632, %v638
        %v1383 = vcombine.high %v632, %v638
        %v1385 = vunpack.c.l.s4 1983009808
        %v1386 = vunpack.c.0.s8 %v1385
        %v1387 = vlaneseq
        %v1388 = vshrl.u32 %v1387, 7
        %v1389 = vsub.s32 %v1386, %v1388
        %v1390 = vrot.slane %v1382, %v1389
        %v1392 = vunpack.c.l.s4 1983009808
        %v1393 = vunpack.c.0.s8 %v1392
        %v1394 = vlaneseq
        %v1395 = vshrl.u32 %v1394, 7
        %v1396 = vsub.s32 %v1393, %v1395
        %v1397 = vrot.slane %v1383, %v1396
        %v1398 = vcombine.low %v1342, %v1358
        %v1399 = vcombine.high %v1342, %v1358
        %v1401 = vunpack.c.l.s4 1934713408
        %v1402 = vunpack.c.0.s8 %v1401
        %v1403 = vlaneseq
        %v1404 = vshrl.u32 %v1403, 7
        %v1405 = vsub.s32 %v1402, %v1404
        %v1406 = vrot.slane %v1398, %v1405
        %v1408 = vunpack.c.l.s4 1934713408
        %v1409 = vunpack.c.0.s8 %v1408
        %v1410 = vlaneseq
        %v1411 = vshrl.u32 %v1410, 7
        %v1412 = vsub.s32 %v1409, %v1411
        %v1413 = vrot.slane %v1399, %v1412
        %v1414 = vcombine.low %v1349, %v1365
        %v1415 = vcombine.high %v1349, %v1365
        %v1417 = vunpack.c.l.s4 1934713408
        %v1418 = vunpack.c.0.s8 %v1417
        %v1419 = vlaneseq
        %v1420 = vshrl.u32 %v1419, 7
        %v1421 = vsub.s32 %v1418, %v1420
        %v1422 = vrot.slane %v1414, %v1421
        %v1424 = vunpack.c.l.s4 1934713408
        %v1425 = vunpack.c.0.s8 %v1424
        %v1426 = vlaneseq
        %v1427 = vshrl.u32 %v1426, 7
        %v1428 = vsub.s32 %v1425, %v1427
        %v1429 = vrot.slane %v1415, %v1428
        %v1430 = vcombine.low %v1374, %v1390
        %v1431 = vcombine.high %v1374, %v1390
        %v1433 = vunpack.c.l.s4 1934713408
        %v1434 = vunpack.c.0.s8 %v1433
        %v1435 = vlaneseq
        %v1436 = vshrl.u32 %v1435, 7
        %v1437 = vsub.s32 %v1434, %v1436
        %v1438 = vrot.slane %v1430, %v1437
        %v1440 = vunpack.c.l.s4 1934713408
        %v1441 = vunpack.c.0.s8 %v1440
        %v1442 = vlaneseq
        %v1443 = vshrl.u32 %v1442, 7
        %v1444 = vsub.s32 %v1441, %v1443
        %v1445 = vrot.slane %v1431, %v1444
        %v1446 = vcombine.low %v1381, %v1397
        %v1447 = vcombine.high %v1381, %v1397
        %v1449 = vunpack.c.l.s4 1934713408
        %v1450 = vunpack.c.0.s8 %v1449
        %v1451 = vlaneseq
        %v1452 = vshrl.u32 %v1451, 7
        %v1453 = vsub.s32 %v1450, %v1452
        %v1454 = vrot.slane %v1446, %v1453
        %v1456 = vunpack.c.l.s4 1934713408
        %v1457 = vunpack.c.0.s8 %v1456
        %v1458 = vlaneseq
        %v1459 = vshrl.u32 %v1458, 7
        %v1460 = vsub.s32 %v1457, %v1459
        %v1461 = vrot.slane %v1447, %v1460
        %v1462 = vcombine.low %v1406, %v1438
        %v1463 = vcombine.high %v1406, %v1438
        %v1464 = vcombine.low %v1413, %v1445
        %v1465 = vcombine.high %v1413, %v1445
        %v1466 = vcombine.low %v1422, %v1454
        %v1467 = vcombine.high %v1422, %v1454
        %v1468 = vcombine.low %v1429, %v1461
        %v1469 = vcombine.high %v1429, %v1461
        %v1470 = vcombine.low %v641, %v647
        %v1471 = vcombine.high %v641, %v647
        %v1473 = vunpack.c.l.s4 1983009808
        %v1474 = vunpack.c.0.s8 %v1473
        %v1475 = vlaneseq
        %v1476 = vshrl.u32 %v1475, 7
        %v1477 = vsub.s32 %v1474, %v1476
        %v1478 = vrot.slane %v1470, %v1477
        %v1480 = vunpack.c.l.s4 1983009808
        %v1481 = vunpack.c.0.s8 %v1480
        %v1482 = vlaneseq
        %v1483 = vshrl.u32 %v1482, 7
        %v1484 = vsub.s32 %v1481, %v1483
        %v1485 = vrot.slane %v1471, %v1484
        %v1486 = vcombine.low %v644, %v650
        %v1487 = vcombine.high %v644, %v650
        %v1489 = vunpack.c.l.s4 1983009808
        %v1490 = vunpack.c.0.s8 %v1489
        %v1491 = vlaneseq
        %v1492 = vshrl.u32 %v1491, 7
        %v1493 = vsub.s32 %v1490, %v1492
        %v1494 = vrot.slane %v1486, %v1493
        %v1496 = vunpack.c.l.s4 1983009808
        %v1497 = vunpack.c.0.s8 %v1496
        %v1498 = vlaneseq
        %v1499 = vshrl.u32 %v1498, 7
        %v1500 = vsub.s32 %v1497, %v1499
        %v1501 = vrot.slane %v1487, %v1500
        %v1502 = vcombine.low %v653, %v659
        %v1503 = vcombine.high %v653, %v659
        %v1505 = vunpack.c.l.s4 1983009808
        %v1506 = vunpack.c.0.s8 %v1505
        %v1507 = vlaneseq
        %v1508 = vshrl.u32 %v1507, 7
        %v1509 = vsub.s32 %v1506, %v1508
        %v1510 = vrot.slane %v1502, %v1509
        %v1512 = vunpack.c.l.s4 1983009808
        %v1513 = vunpack.c.0.s8 %v1512
        %v1514 = vlaneseq
        %v1515 = vshrl.u32 %v1514, 7
        %v1516 = vsub.s32 %v1513, %v1515
        %v1517 = vrot.slane %v1503, %v1516
        %v1518 = vcombine.low %v656, %v662
        %v1519 = vcombine.high %v656, %v662
        %v1521 = vunpack.c.l.s4 1983009808
        %v1522 = vunpack.c.0.s8 %v1521
        %v1523 = vlaneseq
        %v1524 = vshrl.u32 %v1523, 7
        %v1525 = vsub.s32 %v1522, %v1524
        %v1526 = vrot.slane %v1518, %v1525
        %v1528 = vunpack.c.l.s4 1983009808
        %v1529 = vunpack.c.0.s8 %v1528
        %v1530 = vlaneseq
        %v1531 = vshrl.u32 %v1530, 7
        %v1532 = vsub.s32 %v1529, %v1531
        %v1533 = vrot.slane %v1519, %v1532
        %v1534 = vcombine.low %v1478, %v1494
        %v1535 = vcombine.high %v1478, %v1494
        %v1537 = vunpack.c.l.s4 1934713408
        %v1538 = vunpack.c.0.s8 %v1537
        %v1539 = vlaneseq
        %v1540 = vshrl.u32 %v1539, 7
        %v1541 = vsub.s32 %v1538, %v1540
        %v1542 = vrot.slane %v1534, %v1541
        %v1544 = vunpack.c.l.s4 1934713408
        %v1545 = vunpack.c.0.s8 %v1544
        %v1546 = vlaneseq
        %v1547 = vshrl.u32 %v1546, 7
        %v1548 = vsub.s32 %v1545, %v1547
        %v1549 = vrot.slane %v1535, %v1548
        %v1550 = vcombine.low %v1485, %v1501
        %v1551 = vcombine.high %v1485, %v1501
        %v1553 = vunpack.c.l.s4 1934713408
        %v1554 = vunpack.c.0.s8 %v1553
        %v1555 = vlaneseq
        %v1556 = vshrl.u32 %v1555, 7
        %v1557 = vsub.s32 %v1554, %v1556
        %v1558 = vrot.slane %v1550, %v1557
        %v1560 = vunpack.c.l.s4 1934713408
        %v1561 = vunpack.c.0.s8 %v1560
        %v1562 = vlaneseq
        %v1563 = vshrl.u32 %v1562, 7
        %v1564 = vsub.s32 %v1561, %v1563
        %v1565 = vrot.slane %v1551, %v1564
        %v1566 = vcombine.low %v1510, %v1526
        %v1567 = vcombine.high %v1510, %v1526
        %v1569 = vunpack.c.l.s4 1934713408
        %v1570 = vunpack.c.0.s8 %v1569
        %v1571 = vlaneseq
        %v1572 = vshrl.u32 %v1571, 7
        %v1573 = vsub.s32 %v1570, %v1572
        %v1574 = vrot.slane %v1566, %v1573
        %v1576 = vunpack.c.l.s4 1934713408
        %v1577 = vunpack.c.0.s8 %v1576
        %v1578 = vlaneseq
        %v1579 = vshrl.u32 %v1578, 7
        %v1580 = vsub.s32 %v1577, %v1579
        %v1581 = vrot.slane %v1567, %v1580
        %v1582 = vcombine.low %v1517, %v1533
        %v1583 = vcombine.high %v1517, %v1533
        %v1585 = vunpack.c.l.s4 1934713408
        %v1586 = vunpack.c.0.s8 %v1585
        %v1587 = vlaneseq
        %v1588 = vshrl.u32 %v1587, 7
        %v1589 = vsub.s32 %v1586, %v1588
        %v1590 = vrot.slane %v1582, %v1589
        %v1592 = vunpack.c.l.s4 1934713408
        %v1593 = vunpack.c.0.s8 %v1592
        %v1594 = vlaneseq
        %v1595 = vshrl.u32 %v1594, 7
        %v1596 = vsub.s32 %v1593, %v1595
        %v1597 = vrot.slane %v1583, %v1596
        %v1598 = vcombine.low %v1542, %v1574
        %v1599 = vcombine.high %v1542, %v1574
        %v1600 = vcombine.low %v1549, %v1581
        %v1601 = vcombine.high %v1549, %v1581
        %v1602 = vcombine.low %v1558, %v1590
        %v1603 = vcombine.high %v1558, %v1590
        %v1604 = vcombine.low %v1565, %v1597
        %v1605 = vcombine.high %v1565, %v1597
        %v1606 = vcombine.low %v665, %v671
        %v1607 = vcombine.high %v665, %v671
        %v1609 = vunpack.c.l.s4 1983009808
        %v1610 = vunpack.c.0.s8 %v1609
        %v1611 = vlaneseq
        %v1612 = vshrl.u32 %v1611, 7
        %v1613 = vsub.s32 %v1610, %v1612
        %v1614 = vrot.slane %v1606, %v1613
        %v1616 = vunpack.c.l.s4 1983009808
        %v1617 = vunpack.c.0.s8 %v1616
        %v1618 = vlaneseq
        %v1619 = vshrl.u32 %v1618, 7
        %v1620 = vsub.s32 %v1617, %v1619
        %v1621 = vrot.slane %v1607, %v1620
        %v1622 = vcombine.low %v668, %v674
        %v1623 = vcombine.high %v668, %v674
        %v1625 = vunpack.c.l.s4 1983009808
        %v1626 = vunpack.c.0.s8 %v1625
        %v1627 = vlaneseq
        %v1628 = vshrl.u32 %v1627, 7
        %v1629 = vsub.s32 %v1626, %v1628
        %v1630 = vrot.slane %v1622, %v1629
        %v1632 = vunpack.c.l.s4 1983009808
        %v1633 = vunpack.c.0.s8 %v1632
        %v1634 = vlaneseq
        %v1635 = vshrl.u32 %v1634, 7
        %v1636 = vsub.s32 %v1633, %v1635
        %v1637 = vrot.slane %v1623, %v1636
        %v1638 = vcombine.low %v677, %v683
        %v1639 = vcombine.high %v677, %v683
        %v1641 = vunpack.c.l.s4 1983009808
        %v1642 = vunpack.c.0.s8 %v1641
        %v1643 = vlaneseq
        %v1644 = vshrl.u32 %v1643, 7
        %v1645 = vsub.s32 %v1642, %v1644
        %v1646 = vrot.slane %v1638, %v1645
        %v1648 = vunpack.c.l.s4 1983009808
        %v1649 = vunpack.c.0.s8 %v1648
        %v1650 = vlaneseq
        %v1651 = vshrl.u32 %v1650, 7
        %v1652 = vsub.s32 %v1649, %v1651
        %v1653 = vrot.slane %v1639, %v1652
        %v1654 = vcombine.low %v680, %v686
        %v1655 = vcombine.high %v680, %v686
        %v1657 = vunpack.c.l.s4 1983009808
        %v1658 = vunpack.c.0.s8 %v1657
        %v1659 = vlaneseq
        %v1660 = vshrl.u32 %v1659, 7
        %v1661 = vsub.s32 %v1658, %v1660
        %v1662 = vrot.slane %v1654, %v1661
        %v1664 = vunpack.c.l.s4 1983009808
        %v1665 = vunpack.c.0.s8 %v1664
        %v1666 = vlaneseq
        %v1667 = vshrl.u32 %v1666, 7
        %v1668 = vsub.s32 %v1665, %v1667
        %v1669 = vrot.slane %v1655, %v1668
        %v1670 = vcombine.low %v1614, %v1630
        %v1671 = vcombine.high %v1614, %v1630
        %v1673 = vunpack.c.l.s4 1934713408
        %v1674 = vunpack.c.0.s8 %v1673
        %v1675 = vlaneseq
        %v1676 = vshrl.u32 %v1675, 7
        %v1677 = vsub.s32 %v1674, %v1676
        %v1678 = vrot.slane %v1670, %v1677
        %v1680 = vunpack.c.l.s4 1934713408
        %v1681 = vunpack.c.0.s8 %v1680
        %v1682 = vlaneseq
        %v1683 = vshrl.u32 %v1682, 7
        %v1684 = vsub.s32 %v1681, %v1683
        %v1685 = vrot.slane %v1671, %v1684
        %v1686 = vcombine.low %v1621, %v1637
        %v1687 = vcombine.high %v1621, %v1637
        %v1689 = vunpack.c.l.s4 1934713408
        %v1690 = vunpack.c.0.s8 %v1689
        %v1691 = vlaneseq
        %v1692 = vshrl.u32 %v1691, 7
        %v1693 = vsub.s32 %v1690, %v1692
        %v1694 = vrot.slane %v1686, %v1693
        %v1696 = vunpack.c.l.s4 1934713408
        %v1697 = vunpack.c.0.s8 %v1696
        %v1698 = vlaneseq
        %v1699 = vshrl.u32 %v1698, 7
        %v1700 = vsub.s32 %v1697, %v1699
        %v1701 = vrot.slane %v1687, %v1700
        %v1702 = vcombine.low %v1646, %v1662
        %v1703 = vcombine.high %v1646, %v1662
        %v1705 = vunpack.c.l.s4 1934713408
        %v1706 = vunpack.c.0.s8 %v1705
        %v1707 = vlaneseq
        %v1708 = vshrl.u32 %v1707, 7
        %v1709 = vsub.s32 %v1706, %v1708
        %v1710 = vrot.slane %v1702, %v1709
        %v1712 = vunpack.c.l.s4 1934713408
        %v1713 = vunpack.c.0.s8 %v1712
        %v1714 = vlaneseq
        %v1715 = vshrl.u32 %v1714, 7
        %v1716 = vsub.s32 %v1713, %v1715
        %v1717 = vrot.slane %v1703, %v1716
        %v1718 = vcombine.low %v1653, %v1669
        %v1719 = vcombine.high %v1653, %v1669
        %v1721 = vunpack.c.l.s4 1934713408
        %v1722 = vunpack.c.0.s8 %v1721
        %v1723 = vlaneseq
        %v1724 = vshrl.u32 %v1723, 7
        %v1725 = vsub.s32 %v1722, %v1724
        %v1726 = vrot.slane %v1718, %v1725
        %v1728 = vunpack.c.l.s4 1934713408
        %v1729 = vunpack.c.0.s8 %v1728
        %v1730 = vlaneseq
        %v1731 = vshrl.u32 %v1730, 7
        %v1732 = vsub.s32 %v1729, %v1731
        %v1733 = vrot.slane %v1719, %v1732
        %v1734 = vcombine.low %v1678, %v1710
        %v1735 = vcombine.high %v1678, %v1710
        %v1736 = vcombine.low %v1685, %v1717
        %v1737 = vcombine.high %v1685, %v1717
        %v1738 = vcombine.low %v1694, %v1726
        %v1739 = vcombine.high %v1694, %v1726
        %v1740 = vcombine.low %v1701, %v1733
        %v1741 = vcombine.high %v1701, %v1733
        %v1742 = vcombine.low %v689, %v695
        %v1743 = vcombine.high %v689, %v695
        %v1745 = vunpack.c.l.s4 1983009808
        %v1746 = vunpack.c.0.s8 %v1745
        %v1747 = vlaneseq
        %v1748 = vshrl.u32 %v1747, 7
        %v1749 = vsub.s32 %v1746, %v1748
        %v1750 = vrot.slane %v1742, %v1749
        %v1752 = vunpack.c.l.s4 1983009808
        %v1753 = vunpack.c.0.s8 %v1752
        %v1754 = vlaneseq
        %v1755 = vshrl.u32 %v1754, 7
        %v1756 = vsub.s32 %v1753, %v1755
        %v1757 = vrot.slane %v1743, %v1756
        %v1758 = vcombine.low %v692, %v698
        %v1759 = vcombine.high %v692, %v698
        %v1761 = vunpack.c.l.s4 1983009808
        %v1762 = vunpack.c.0.s8 %v1761
        %v1763 = vlaneseq
        %v1764 = vshrl.u32 %v1763, 7
        %v1765 = vsub.s32 %v1762, %v1764
        %v1766 = vrot.slane %v1758, %v1765
        %v1768 = vunpack.c.l.s4 1983009808
        %v1769 = vunpack.c.0.s8 %v1768
        %v1770 = vlaneseq
        %v1771 = vshrl.u32 %v1770, 7
        %v1772 = vsub.s32 %v1769, %v1771
        %v1773 = vrot.slane %v1759, %v1772
        %v1774 = vcombine.low %v701, %v707
        %v1775 = vcombine.high %v701, %v707
        %v1777 = vunpack.c.l.s4 1983009808
        %v1778 = vunpack.c.0.s8 %v1777
        %v1779 = vlaneseq
        %v1780 = vshrl.u32 %v1779, 7
        %v1781 = vsub.s32 %v1778, %v1780
        %v1782 = vrot.slane %v1774, %v1781
        %v1784 = vunpack.c.l.s4 1983009808
        %v1785 = vunpack.c.0.s8 %v1784
        %v1786 = vlaneseq
        %v1787 = vshrl.u32 %v1786, 7
        %v1788 = vsub.s32 %v1785, %v1787
        %v1789 = vrot.slane %v1775, %v1788
        %v1790 = vcombine.low %v704, %v710
        %v1791 = vcombine.high %v704, %v710
        %v1793 = vunpack.c.l.s4 1983009808
        %v1794 = vunpack.c.0.s8 %v1793
        %v1795 = vlaneseq
        %v1796 = vshrl.u32 %v1795, 7
        %v1797 = vsub.s32 %v1794, %v1796
        %v1798 = vrot.slane %v1790, %v1797
        %v1800 = vunpack.c.l.s4 1983009808
        %v1801 = vunpack.c.0.s8 %v1800
        %v1802 = vlaneseq
        %v1803 = vshrl.u32 %v1802, 7
        %v1804 = vsub.s32 %v1801, %v1803
        %v1805 = vrot.slane %v1791, %v1804
        %v1806 = vcombine.low %v1750, %v1766
        %v1807 = vcombine.high %v1750, %v1766
        %v1809 = vunpack.c.l.s4 1934713408
        %v1810 = vunpack.c.0.s8 %v1809
        %v1811 = vlaneseq
        %v1812 = vshrl.u32 %v1811, 7
        %v1813 = vsub.s32 %v1810, %v1812
        %v1814 = vrot.slane %v1806, %v1813
        %v1816 = vunpack.c.l.s4 1934713408
        %v1817 = vunpack.c.0.s8 %v1816
        %v1818 = vlaneseq
        %v1819 = vshrl.u32 %v1818, 7
        %v1820 = vsub.s32 %v1817, %v1819
        %v1821 = vrot.slane %v1807, %v1820
        %v1822 = vcombine.low %v1757, %v1773
        %v1823 = vcombine.high %v1757, %v1773
        %v1825 = vunpack.c.l.s4 1934713408
        %v1826 = vunpack.c.0.s8 %v1825
        %v1827 = vlaneseq
        %v1828 = vshrl.u32 %v1827, 7
        %v1829 = vsub.s32 %v1826, %v1828
        %v1830 = vrot.slane %v1822, %v1829
        %v1832 = vunpack.c.l.s4 1934713408
        %v1833 = vunpack.c.0.s8 %v1832
        %v1834 = vlaneseq
        %v1835 = vshrl.u32 %v1834, 7
        %v1836 = vsub.s32 %v1833, %v1835
        %v1837 = vrot.slane %v1823, %v1836
        %v1838 = vcombine.low %v1782, %v1798
        %v1839 = vcombine.high %v1782, %v1798
        %v1841 = vunpack.c.l.s4 1934713408
        %v1842 = vunpack.c.0.s8 %v1841
        %v1843 = vlaneseq
        %v1844 = vshrl.u32 %v1843, 7
        %v1845 = vsub.s32 %v1842, %v1844
        %v1846 = vrot.slane %v1838, %v1845
        %v1848 = vunpack.c.l.s4 1934713408
        %v1849 = vunpack.c.0.s8 %v1848
        %v1850 = vlaneseq
        %v1851 = vshrl.u32 %v1850, 7
        %v1852 = vsub.s32 %v1849, %v1851
        %v1853 = vrot.slane %v1839, %v1852
        %v1854 = vcombine.low %v1789, %v1805
        %v1855 = vcombine.high %v1789, %v1805
        %v1857 = vunpack.c.l.s4 1934713408
        %v1858 = vunpack.c.0.s8 %v1857
        %v1859 = vlaneseq
        %v1860 = vshrl.u32 %v1859, 7
        %v1861 = vsub.s32 %v1858, %v1860
        %v1862 = vrot.slane %v1854, %v1861
        %v1864 = vunpack.c.l.s4 1934713408
        %v1865 = vunpack.c.0.s8 %v1864
        %v1866 = vlaneseq
        %v1867 = vshrl.u32 %v1866, 7
        %v1868 = vsub.s32 %v1865, %v1867
        %v1869 = vrot.slane %v1855, %v1868
        %v1870 = vcombine.low %v1814, %v1846
        %v1871 = vcombine.high %v1814, %v1846
        %v1872 = vcombine.low %v1821, %v1853
        %v1873 = vcombine.high %v1821, %v1853
        %v1874 = vcombine.low %v1830, %v1862
        %v1875 = vcombine.high %v1830, %v1862
        %v1876 = vcombine.low %v1837, %v1869
        %v1877 = vcombine.high %v1837, %v1869
        %v1878 = vcombine.low %v713, %v719
        %v1879 = vcombine.high %v713, %v719
        %v1881 = vunpack.c.l.s4 1983009808
        %v1882 = vunpack.c.0.s8 %v1881
        %v1883 = vlaneseq
        %v1884 = vshrl.u32 %v1883, 7
        %v1885 = vsub.s32 %v1882, %v1884
        %v1886 = vrot.slane %v1878, %v1885
        %v1888 = vunpack.c.l.s4 1983009808
        %v1889 = vunpack.c.0.s8 %v1888
        %v1890 = vlaneseq
        %v1891 = vshrl.u32 %v1890, 7
        %v1892 = vsub.s32 %v1889, %v1891
        %v1893 = vrot.slane %v1879, %v1892
        %v1894 = vcombine.low %v716, %v722
        %v1895 = vcombine.high %v716, %v722
        %v1897 = vunpack.c.l.s4 1983009808
        %v1898 = vunpack.c.0.s8 %v1897
        %v1899 = vlaneseq
        %v1900 = vshrl.u32 %v1899, 7
        %v1901 = vsub.s32 %v1898, %v1900
        %v1902 = vrot.slane %v1894, %v1901
        %v1904 = vunpack.c.l.s4 1983009808
        %v1905 = vunpack.c.0.s8 %v1904
        %v1906 = vlaneseq
        %v1907 = vshrl.u32 %v1906, 7
        %v1908 = vsub.s32 %v1905, %v1907
        %v1909 = vrot.slane %v1895, %v1908
        %v1910 = vcombine.low %v725, %v731
        %v1911 = vcombine.high %v725, %v731
        %v1913 = vunpack.c.l.s4 1983009808
        %v1914 = vunpack.c.0.s8 %v1913
        %v1915 = vlaneseq
        %v1916 = vshrl.u32 %v1915, 7
        %v1917 = vsub.s32 %v1914, %v1916
        %v1918 = vrot.slane %v1910, %v1917
        %v1920 = vunpack.c.l.s4 1983009808
        %v1921 = vunpack.c.0.s8 %v1920
        %v1922 = vlaneseq
        %v1923 = vshrl.u32 %v1922, 7
        %v1924 = vsub.s32 %v1921, %v1923
        %v1925 = vrot.slane %v1911, %v1924
        %v1926 = vcombine.low %v728, %v734
        %v1927 = vcombine.high %v728, %v734
        %v1929 = vunpack.c.l.s4 1983009808
        %v1930 = vunpack.c.0.s8 %v1929
        %v1931 = vlaneseq
        %v1932 = vshrl.u32 %v1931, 7
        %v1933 = vsub.s32 %v1930, %v1932
        %v1934 = vrot.slane %v1926, %v1933
        %v1936 = vunpack.c.l.s4 1983009808
        %v1937 = vunpack.c.0.s8 %v1936
        %v1938 = vlaneseq
        %v1939 = vshrl.u32 %v1938, 7
        %v1940 = vsub.s32 %v1937, %v1939
        %v1941 = vrot.slane %v1927, %v1940
        %v1942 = vcombine.low %v1886, %v1902
        %v1943 = vcombine.high %v1886, %v1902
        %v1945 = vunpack.c.l.s4 1934713408
        %v1946 = vunpack.c.0.s8 %v1945
        %v1947 = vlaneseq
        %v1948 = vshrl.u32 %v1947, 7
        %v1949 = vsub.s32 %v1946, %v1948
        %v1950 = vrot.slane %v1942, %v1949
        %v1952 = vunpack.c.l.s4 1934713408
        %v1953 = vunpack.c.0.s8 %v1952
        %v1954 = vlaneseq
        %v1955 = vshrl.u32 %v1954, 7
        %v1956 = vsub.s32 %v1953, %v1955
        %v1957 = vrot.slane %v1943, %v1956
        %v1958 = vcombine.low %v1893, %v1909
        %v1959 = vcombine.high %v1893, %v1909
        %v1961 = vunpack.c.l.s4 1934713408
        %v1962 = vunpack.c.0.s8 %v1961
        %v1963 = vlaneseq
        %v1964 = vshrl.u32 %v1963, 7
        %v1965 = vsub.s32 %v1962, %v1964
        %v1966 = vrot.slane %v1958, %v1965
        %v1968 = vunpack.c.l.s4 1934713408
        %v1969 = vunpack.c.0.s8 %v1968
        %v1970 = vlaneseq
        %v1971 = vshrl.u32 %v1970, 7
        %v1972 = vsub.s32 %v1969, %v1971
        %v1973 = vrot.slane %v1959, %v1972
        %v1974 = vcombine.low %v1918, %v1934
        %v1975 = vcombine.high %v1918, %v1934
        %v1977 = vunpack.c.l.s4 1934713408
        %v1978 = vunpack.c.0.s8 %v1977
        %v1979 = vlaneseq
        %v1980 = vshrl.u32 %v1979, 7
        %v1981 = vsub.s32 %v1978, %v1980
        %v1982 = vrot.slane %v1974, %v1981
        %v1984 = vunpack.c.l.s4 1934713408
        %v1985 = vunpack.c.0.s8 %v1984
        %v1986 = vlaneseq
        %v1987 = vshrl.u32 %v1986, 7
        %v1988 = vsub.s32 %v1985, %v1987
        %v1989 = vrot.slane %v1975, %v1988
        %v1990 = vcombine.low %v1925, %v1941
        %v1991 = vcombine.high %v1925, %v1941
        %v1993 = vunpack.c.l.s4 1934713408
        %v1994 = vunpack.c.0.s8 %v1993
        %v1995 = vlaneseq
        %v1996 = vshrl.u32 %v1995, 7
        %v1997 = vsub.s32 %v1994, %v1996
        %v1998 = vrot.slane %v1990, %v1997
        %v2000 = vunpack.c.l.s4 1934713408
        %v2001 = vunpack.c.0.s8 %v2000
        %v2002 = vlaneseq
        %v2003 = vshrl.u32 %v2002, 7
        %v2004 = vsub.s32 %v2001, %v2003
        %v2005 = vrot.slane %v1991, %v2004
        %v2006 = vcombine.low %v1950, %v1982
        %v2007 = vcombine.high %v1950, %v1982
        %v2008 = vcombine.low %v1957, %v1989
        %v2009 = vcombine.high %v1957, %v1989
        %v2010 = vcombine.low %v1966, %v1998
        %v2011 = vcombine.high %v1966, %v1998
        %v2012 = vcombine.low %v1973, %v2005
        %v2013 = vcombine.high %v1973, %v2005
        %v2014 = vcombine.low %v543, %v741
        %v2015 = vcombine.high %v543, %v741
        %v2017 = vunpack.c.l.s4 1983009808
        %v2018 = vunpack.c.0.s8 %v2017
        %v2019 = vlaneseq
        %v2020 = vshrl.u32 %v2019, 7
        %v2021 = vsub.s32 %v2018, %v2020
        %v2022 = vrot.slane %v2014, %v2021
        %v2024 = vunpack.c.l.s4 1983009808
        %v2025 = vunpack.c.0.s8 %v2024
        %v2026 = vlaneseq
        %v2027 = vshrl.u32 %v2026, 7
        %v2028 = vsub.s32 %v2025, %v2027
        %v2029 = vrot.slane %v2015, %v2028
        %v2030 = vcombine.low %v738, %v744
        %v2031 = vcombine.high %v738, %v744
        %v2033 = vunpack.c.l.s4 1983009808
        %v2034 = vunpack.c.0.s8 %v2033
        %v2035 = vlaneseq
        %v2036 = vshrl.u32 %v2035, 7
        %v2037 = vsub.s32 %v2034, %v2036
        %v2038 = vrot.slane %v2030, %v2037
        %v2040 = vunpack.c.l.s4 1983009808
        %v2041 = vunpack.c.0.s8 %v2040
        %v2042 = vlaneseq
        %v2043 = vshrl.u32 %v2042, 7
        %v2044 = vsub.s32 %v2041, %v2043
        %v2045 = vrot.slane %v2031, %v2044
        %v2046 = vcombine.low %v747, %v753
        %v2047 = vcombine.high %v747, %v753
        %v2049 = vunpack.c.l.s4 1983009808
        %v2050 = vunpack.c.0.s8 %v2049
        %v2051 = vlaneseq
        %v2052 = vshrl.u32 %v2051, 7
        %v2053 = vsub.s32 %v2050, %v2052
        %v2054 = vrot.slane %v2046, %v2053
        %v2056 = vunpack.c.l.s4 1983009808
        %v2057 = vunpack.c.0.s8 %v2056
        %v2058 = vlaneseq
        %v2059 = vshrl.u32 %v2058, 7
        %v2060 = vsub.s32 %v2057, %v2059
        %v2061 = vrot.slane %v2047, %v2060
        %v2062 = vcombine.low %v750, %v756
        %v2063 = vcombine.high %v750, %v756
        %v2065 = vunpack.c.l.s4 1983009808
        %v2066 = vunpack.c.0.s8 %v2065
        %v2067 = vlaneseq
        %v2068 = vshrl.u32 %v2067, 7
        %v2069 = vsub.s32 %v2066, %v2068
        %v2070 = vrot.slane %v2062, %v2069
        %v2072 = vunpack.c.l.s4 1983009808
        %v2073 = vunpack.c.0.s8 %v2072
        %v2074 = vlaneseq
        %v2075 = vshrl.u32 %v2074, 7
        %v2076 = vsub.s32 %v2073, %v2075
        %v2077 = vrot.slane %v2063, %v2076
        %v2078 = vcombine.low %v2022, %v2038
        %v2079 = vcombine.high %v2022, %v2038
        %v2081 = vunpack.c.l.s4 1934713408
        %v2082 = vunpack.c.0.s8 %v2081
        %v2083 = vlaneseq
        %v2084 = vshrl.u32 %v2083, 7
        %v2085 = vsub.s32 %v2082, %v2084
        %v2086 = vrot.slane %v2078, %v2085
        %v2088 = vunpack.c.l.s4 1934713408
        %v2089 = vunpack.c.0.s8 %v2088
        %v2090 = vlaneseq
        %v2091 = vshrl.u32 %v2090, 7
        %v2092 = vsub.s32 %v2089, %v2091
        %v2093 = vrot.slane %v2079, %v2092
        %v2094 = vcombine.low %v2029, %v2045
        %v2095 = vcombine.high %v2029, %v2045
        %v2097 = vunpack.c.l.s4 1934713408
        %v2098 = vunpack.c.0.s8 %v2097
        %v2099 = vlaneseq
        %v2100 = vshrl.u32 %v2099, 7
        %v2101 = vsub.s32 %v2098, %v2100
        %v2102 = vrot.slane %v2094, %v2101
        %v2104 = vunpack.c.l.s4 1934713408
        %v2105 = vunpack.c.0.s8 %v2104
        %v2106 = vlaneseq
        %v2107 = vshrl.u32 %v2106, 7
        %v2108 = vsub.s32 %v2105, %v2107
        %v2109 = vrot.slane %v2095, %v2108
        %v2110 = vcombine.low %v2054, %v2070
        %v2111 = vcombine.high %v2054, %v2070
        %v2113 = vunpack.c.l.s4 1934713408
        %v2114 = vunpack.c.0.s8 %v2113
        %v2115 = vlaneseq
        %v2116 = vshrl.u32 %v2115, 7
        %v2117 = vsub.s32 %v2114, %v2116
        %v2118 = vrot.slane %v2110, %v2117
        %v2120 = vunpack.c.l.s4 1934713408
        %v2121 = vunpack.c.0.s8 %v2120
        %v2122 = vlaneseq
        %v2123 = vshrl.u32 %v2122, 7
        %v2124 = vsub.s32 %v2121, %v2123
        %v2125 = vrot.slane %v2111, %v2124
        %v2126 = vcombine.low %v2061, %v2077
        %v2127 = vcombine.high %v2061, %v2077
        %v2129 = vunpack.c.l.s4 1934713408
        %v2130 = vunpack.c.0.s8 %v2129
        %v2131 = vlaneseq
        %v2132 = vshrl.u32 %v2131, 7
        %v2133 = vsub.s32 %v2130, %v2132
        %v2134 = vrot.slane %v2126, %v2133
        %v2136 = vunpack.c.l.s4 1934713408
        %v2137 = vunpack.c.0.s8 %v2136
        %v2138 = vlaneseq
        %v2139 = vshrl.u32 %v2138, 7
        %v2140 = vsub.s32 %v2137, %v2139
        %v2141 = vrot.slane %v2127, %v2140
        %v2142 = vcombine.low %v2086, %v2118
        %v2143 = vcombine.high %v2086, %v2118
        %v2144 = vcombine.low %v2093, %v2125
        %v2145 = vcombine.high %v2093, %v2125
        %v2146 = vcombine.low %v2102, %v2134
        %v2147 = vcombine.high %v2102, %v2134
        %v2148 = vcombine.low %v2109, %v2141
        %v2149 = vcombine.high %v2109, %v2141
        %v2150 = vcombine.low %v759, %v765
        %v2151 = vcombine.high %v759, %v765
        %v2153 = vunpack.c.l.s4 1983009808
        %v2154 = vunpack.c.0.s8 %v2153
        %v2155 = vlaneseq
        %v2156 = vshrl.u32 %v2155, 7
        %v2157 = vsub.s32 %v2154, %v2156
        %v2158 = vrot.slane %v2150, %v2157
        %v2160 = vunpack.c.l.s4 1983009808
        %v2161 = vunpack.c.0.s8 %v2160
        %v2162 = vlaneseq
        %v2163 = vshrl.u32 %v2162, 7
        %v2164 = vsub.s32 %v2161, %v2163
        %v2165 = vrot.slane %v2151, %v2164
        %v2166 = vcombine.low %v762, %v768
        %v2167 = vcombine.high %v762, %v768
        %v2169 = vunpack.c.l.s4 1983009808
        %v2170 = vunpack.c.0.s8 %v2169
        %v2171 = vlaneseq
        %v2172 = vshrl.u32 %v2171, 7
        %v2173 = vsub.s32 %v2170, %v2172
        %v2174 = vrot.slane %v2166, %v2173
        %v2176 = vunpack.c.l.s4 1983009808
        %v2177 = vunpack.c.0.s8 %v2176
        %v2178 = vlaneseq
        %v2179 = vshrl.u32 %v2178, 7
        %v2180 = vsub.s32 %v2177, %v2179
        %v2181 = vrot.slane %v2167, %v2180
        %v2182 = vcombine.low %v771, %v777
        %v2183 = vcombine.high %v771, %v777
        %v2185 = vunpack.c.l.s4 1983009808
        %v2186 = vunpack.c.0.s8 %v2185
        %v2187 = vlaneseq
        %v2188 = vshrl.u32 %v2187, 7
        %v2189 = vsub.s32 %v2186, %v2188
        %v2190 = vrot.slane %v2182, %v2189
        %v2192 = vunpack.c.l.s4 1983009808
        %v2193 = vunpack.c.0.s8 %v2192
        %v2194 = vlaneseq
        %v2195 = vshrl.u32 %v2194, 7
        %v2196 = vsub.s32 %v2193, %v2195
        %v2197 = vrot.slane %v2183, %v2196
        %v2198 = vcombine.low %v774, %v780
        %v2199 = vcombine.high %v774, %v780
        %v2201 = vunpack.c.l.s4 1983009808
        %v2202 = vunpack.c.0.s8 %v2201
        %v2203 = vlaneseq
        %v2204 = vshrl.u32 %v2203, 7
        %v2205 = vsub.s32 %v2202, %v2204
        %v2206 = vrot.slane %v2198, %v2205
        %v2208 = vunpack.c.l.s4 1983009808
        %v2209 = vunpack.c.0.s8 %v2208
        %v2210 = vlaneseq
        %v2211 = vshrl.u32 %v2210, 7
        %v2212 = vsub.s32 %v2209, %v2211
        %v2213 = vrot.slane %v2199, %v2212
        %v2214 = vcombine.low %v2158, %v2174
        %v2215 = vcombine.high %v2158, %v2174
        %v2217 = vunpack.c.l.s4 1934713408
        %v2218 = vunpack.c.0.s8 %v2217
        %v2219 = vlaneseq
        %v2220 = vshrl.u32 %v2219, 7
        %v2221 = vsub.s32 %v2218, %v2220
        %v2222 = vrot.slane %v2214, %v2221
        %v2224 = vunpack.c.l.s4 1934713408
        %v2225 = vunpack.c.0.s8 %v2224
        %v2226 = vlaneseq
        %v2227 = vshrl.u32 %v2226, 7
        %v2228 = vsub.s32 %v2225, %v2227
        %v2229 = vrot.slane %v2215, %v2228
        %v2230 = vcombine.low %v2165, %v2181
        %v2231 = vcombine.high %v2165, %v2181
        %v2233 = vunpack.c.l.s4 1934713408
        %v2234 = vunpack.c.0.s8 %v2233
        %v2235 = vlaneseq
        %v2236 = vshrl.u32 %v2235, 7
        %v2237 = vsub.s32 %v2234, %v2236
        %v2238 = vrot.slane %v2230, %v2237
        %v2240 = vunpack.c.l.s4 1934713408
        %v2241 = vunpack.c.0.s8 %v2240
        %v2242 = vlaneseq
        %v2243 = vshrl.u32 %v2242, 7
        %v2244 = vsub.s32 %v2241, %v2243
        %v2245 = vrot.slane %v2231, %v2244
        %v2246 = vcombine.low %v2190, %v2206
        %v2247 = vcombine.high %v2190, %v2206
        %v2249 = vunpack.c.l.s4 1934713408
        %v2250 = vunpack.c.0.s8 %v2249
        %v2251 = vlaneseq
        %v2252 = vshrl.u32 %v2251, 7
        %v2253 = vsub.s32 %v2250, %v2252
        %v2254 = vrot.slane %v2246, %v2253
        %v2256 = vunpack.c.l.s4 1934713408
        %v2257 = vunpack.c.0.s8 %v2256
        %v2258 = vlaneseq
        %v2259 = vshrl.u32 %v2258, 7
        %v2260 = vsub.s32 %v2257, %v2259
        %v2261 = vrot.slane %v2247, %v2260
        %v2262 = vcombine.low %v2197, %v2213
        %v2263 = vcombine.high %v2197, %v2213
        %v2265 = vunpack.c.l.s4 1934713408
        %v2266 = vunpack.c.0.s8 %v2265
        %v2267 = vlaneseq
        %v2268 = vshrl.u32 %v2267, 7
        %v2269 = vsub.s32 %v2266, %v2268
        %v2270 = vrot.slane %v2262, %v2269
        %v2272 = vunpack.c.l.s4 1934713408
        %v2273 = vunpack.c.0.s8 %v2272
        %v2274 = vlaneseq
        %v2275 = vshrl.u32 %v2274, 7
        %v2276 = vsub.s32 %v2273, %v2275
        %v2277 = vrot.slane %v2263, %v2276
        %v2278 = vcombine.low %v2222, %v2254
        %v2279 = vcombine.high %v2222, %v2254
        %v2280 = vcombine.low %v2229, %v2261
        %v2281 = vcombine.high %v2229, %v2261
        %v2282 = vcombine.low %v2238, %v2270
        %v2283 = vcombine.high %v2238, %v2270
        %v2284 = vcombine.low %v2245, %v2277
        %v2285 = vcombine.high %v2245, %v2277
        %v2286 = vcombine.low %v783, %v789
        %v2287 = vcombine.high %v783, %v789
        %v2289 = vunpack.c.l.s4 1983009808
        %v2290 = vunpack.c.0.s8 %v2289
        %v2291 = vlaneseq
        %v2292 = vshrl.u32 %v2291, 7
        %v2293 = vsub.s32 %v2290, %v2292
        %v2294 = vrot.slane %v2286, %v2293
        %v2296 = vunpack.c.l.s4 1983009808
        %v2297 = vunpack.c.0.s8 %v2296
        %v2298 = vlaneseq
        %v2299 = vshrl.u32 %v2298, 7
        %v2300 = vsub.s32 %v2297, %v2299
        %v2301 = vrot.slane %v2287, %v2300
        %v2302 = vcombine.low %v786, %v792
        %v2303 = vcombine.high %v786, %v792
        %v2305 = vunpack.c.l.s4 1983009808
        %v2306 = vunpack.c.0.s8 %v2305
        %v2307 = vlaneseq
        %v2308 = vshrl.u32 %v2307, 7
        %v2309 = vsub.s32 %v2306, %v2308
        %v2310 = vrot.slane %v2302, %v2309
        %v2312 = vunpack.c.l.s4 1983009808
        %v2313 = vunpack.c.0.s8 %v2312
        %v2314 = vlaneseq
        %v2315 = vshrl.u32 %v2314, 7
        %v2316 = vsub.s32 %v2313, %v2315
        %v2317 = vrot.slane %v2303, %v2316
        %v2318 = vcombine.low %v795, %v801
        %v2319 = vcombine.high %v795, %v801
        %v2321 = vunpack.c.l.s4 1983009808
        %v2322 = vunpack.c.0.s8 %v2321
        %v2323 = vlaneseq
        %v2324 = vshrl.u32 %v2323, 7
        %v2325 = vsub.s32 %v2322, %v2324
        %v2326 = vrot.slane %v2318, %v2325
        %v2328 = vunpack.c.l.s4 1983009808
        %v2329 = vunpack.c.0.s8 %v2328
        %v2330 = vlaneseq
        %v2331 = vshrl.u32 %v2330, 7
        %v2332 = vsub.s32 %v2329, %v2331
        %v2333 = vrot.slane %v2319, %v2332
        %v2334 = vcombine.low %v798, %v804
        %v2335 = vcombine.high %v798, %v804
        %v2337 = vunpack.c.l.s4 1983009808
        %v2338 = vunpack.c.0.s8 %v2337
        %v2339 = vlaneseq
        %v2340 = vshrl.u32 %v2339, 7
        %v2341 = vsub.s32 %v2338, %v2340
        %v2342 = vrot.slane %v2334, %v2341
        %v2344 = vunpack.c.l.s4 1983009808
        %v2345 = vunpack.c.0.s8 %v2344
        %v2346 = vlaneseq
        %v2347 = vshrl.u32 %v2346, 7
        %v2348 = vsub.s32 %v2345, %v2347
        %v2349 = vrot.slane %v2335, %v2348
        %v2350 = vcombine.low %v2294, %v2310
        %v2351 = vcombine.high %v2294, %v2310
        %v2353 = vunpack.c.l.s4 1934713408
        %v2354 = vunpack.c.0.s8 %v2353
        %v2355 = vlaneseq
        %v2356 = vshrl.u32 %v2355, 7
        %v2357 = vsub.s32 %v2354, %v2356
        %v2358 = vrot.slane %v2350, %v2357
        %v2360 = vunpack.c.l.s4 1934713408
        %v2361 = vunpack.c.0.s8 %v2360
        %v2362 = vlaneseq
        %v2363 = vshrl.u32 %v2362, 7
        %v2364 = vsub.s32 %v2361, %v2363
        %v2365 = vrot.slane %v2351, %v2364
        %v2366 = vcombine.low %v2301, %v2317
        %v2367 = vcombine.high %v2301, %v2317
        %v2369 = vunpack.c.l.s4 1934713408
        %v2370 = vunpack.c.0.s8 %v2369
        %v2371 = vlaneseq
        %v2372 = vshrl.u32 %v2371, 7
        %v2373 = vsub.s32 %v2370, %v2372
        %v2374 = vrot.slane %v2366, %v2373
        %v2376 = vunpack.c.l.s4 1934713408
        %v2377 = vunpack.c.0.s8 %v2376
        %v2378 = vlaneseq
        %v2379 = vshrl.u32 %v2378, 7
        %v2380 = vsub.s32 %v2377, %v2379
        %v2381 = vrot.slane %v2367, %v2380
        %v2382 = vcombine.low %v2326, %v2342
        %v2383 = vcombine.high %v2326, %v2342
        %v2385 = vunpack.c.l.s4 1934713408
        %v2386 = vunpack.c.0.s8 %v2385
        %v2387 = vlaneseq
        %v2388 = vshrl.u32 %v2387, 7
        %v2389 = vsub.s32 %v2386, %v2388
        %v2390 = vrot.slane %v2382, %v2389
        %v2392 = vunpack.c.l.s4 1934713408
        %v2393 = vunpack.c.0.s8 %v2392
        %v2394 = vlaneseq
        %v2395 = vshrl.u32 %v2394, 7
        %v2396 = vsub.s32 %v2393, %v2395
        %v2397 = vrot.slane %v2383, %v2396
        %v2398 = vcombine.low %v2333, %v2349
        %v2399 = vcombine.high %v2333, %v2349
        %v2401 = vunpack.c.l.s4 1934713408
        %v2402 = vunpack.c.0.s8 %v2401
        %v2403 = vlaneseq
        %v2404 = vshrl.u32 %v2403, 7
        %v2405 = vsub.s32 %v2402, %v2404
        %v2406 = vrot.slane %v2398, %v2405
        %v2408 = vunpack.c.l.s4 1934713408
        %v2409 = vunpack.c.0.s8 %v2408
        %v2410 = vlaneseq
        %v2411 = vshrl.u32 %v2410, 7
        %v2412 = vsub.s32 %v2409, %v2411
        %v2413 = vrot.slane %v2399, %v2412
        %v2414 = vcombine.low %v2358, %v2390
        %v2415 = vcombine.high %v2358, %v2390
        %v2416 = vcombine.low %v2365, %v2397
        %v2417 = vcombine.high %v2365, %v2397
        %v2418 = vcombine.low %v2374, %v2406
        %v2419 = vcombine.high %v2374, %v2406
        %v2420 = vcombine.low %v2381, %v2413
        %v2421 = vcombine.high %v2381, %v2413
        %v2422 = vcombine.low %v807, %v813
        %v2423 = vcombine.high %v807, %v813
        %v2425 = vunpack.c.l.s4 1983009808
        %v2426 = vunpack.c.0.s8 %v2425
        %v2427 = vlaneseq
        %v2428 = vshrl.u32 %v2427, 7
        %v2429 = vsub.s32 %v2426, %v2428
        %v2430 = vrot.slane %v2422, %v2429
        %v2432 = vunpack.c.l.s4 1983009808
        %v2433 = vunpack.c.0.s8 %v2432
        %v2434 = vlaneseq
        %v2435 = vshrl.u32 %v2434, 7
        %v2436 = vsub.s32 %v2433, %v2435
        %v2437 = vrot.slane %v2423, %v2436
        %v2438 = vcombine.low %v810, %v816
        %v2439 = vcombine.high %v810, %v816
        %v2441 = vunpack.c.l.s4 1983009808
        %v2442 = vunpack.c.0.s8 %v2441
        %v2443 = vlaneseq
        %v2444 = vshrl.u32 %v2443, 7
        %v2445 = vsub.s32 %v2442, %v2444
        %v2446 = vrot.slane %v2438, %v2445
        %v2448 = vunpack.c.l.s4 1983009808
        %v2449 = vunpack.c.0.s8 %v2448
        %v2450 = vlaneseq
        %v2451 = vshrl.u32 %v2450, 7
        %v2452 = vsub.s32 %v2449, %v2451
        %v2453 = vrot.slane %v2439, %v2452
        %v2454 = vcombine.low %v819, %v825
        %v2455 = vcombine.high %v819, %v825
        %v2457 = vunpack.c.l.s4 1983009808
        %v2458 = vunpack.c.0.s8 %v2457
        %v2459 = vlaneseq
        %v2460 = vshrl.u32 %v2459, 7
        %v2461 = vsub.s32 %v2458, %v2460
        %v2462 = vrot.slane %v2454, %v2461
        %v2464 = vunpack.c.l.s4 1983009808
        %v2465 = vunpack.c.0.s8 %v2464
        %v2466 = vlaneseq
        %v2467 = vshrl.u32 %v2466, 7
        %v2468 = vsub.s32 %v2465, %v2467
        %v2469 = vrot.slane %v2455, %v2468
        %v2470 = vcombine.low %v822, %v828
        %v2471 = vcombine.high %v822, %v828
        %v2473 = vunpack.c.l.s4 1983009808
        %v2474 = vunpack.c.0.s8 %v2473
        %v2475 = vlaneseq
        %v2476 = vshrl.u32 %v2475, 7
        %v2477 = vsub.s32 %v2474, %v2476
        %v2478 = vrot.slane %v2470, %v2477
        %v2480 = vunpack.c.l.s4 1983009808
        %v2481 = vunpack.c.0.s8 %v2480
        %v2482 = vlaneseq
        %v2483 = vshrl.u32 %v2482, 7
        %v2484 = vsub.s32 %v2481, %v2483
        %v2485 = vrot.slane %v2471, %v2484
        %v2486 = vcombine.low %v2430, %v2446
        %v2487 = vcombine.high %v2430, %v2446
        %v2489 = vunpack.c.l.s4 1934713408
        %v2490 = vunpack.c.0.s8 %v2489
        %v2491 = vlaneseq
        %v2492 = vshrl.u32 %v2491, 7
        %v2493 = vsub.s32 %v2490, %v2492
        %v2494 = vrot.slane %v2486, %v2493
        %v2496 = vunpack.c.l.s4 1934713408
        %v2497 = vunpack.c.0.s8 %v2496
        %v2498 = vlaneseq
        %v2499 = vshrl.u32 %v2498, 7
        %v2500 = vsub.s32 %v2497, %v2499
        %v2501 = vrot.slane %v2487, %v2500
        %v2502 = vcombine.low %v2437, %v2453
        %v2503 = vcombine.high %v2437, %v2453
        %v2505 = vunpack.c.l.s4 1934713408
        %v2506 = vunpack.c.0.s8 %v2505
        %v2507 = vlaneseq
        %v2508 = vshrl.u32 %v2507, 7
        %v2509 = vsub.s32 %v2506, %v2508
        %v2510 = vrot.slane %v2502, %v2509
        %v2512 = vunpack.c.l.s4 1934713408
        %v2513 = vunpack.c.0.s8 %v2512
        %v2514 = vlaneseq
        %v2515 = vshrl.u32 %v2514, 7
        %v2516 = vsub.s32 %v2513, %v2515
        %v2517 = vrot.slane %v2503, %v2516
        %v2518 = vcombine.low %v2462, %v2478
        %v2519 = vcombine.high %v2462, %v2478
        %v2521 = vunpack.c.l.s4 1934713408
        %v2522 = vunpack.c.0.s8 %v2521
        %v2523 = vlaneseq
        %v2524 = vshrl.u32 %v2523, 7
        %v2525 = vsub.s32 %v2522, %v2524
        %v2526 = vrot.slane %v2518, %v2525
        %v2528 = vunpack.c.l.s4 1934713408
        %v2529 = vunpack.c.0.s8 %v2528
        %v2530 = vlaneseq
        %v2531 = vshrl.u32 %v2530, 7
        %v2532 = vsub.s32 %v2529, %v2531
        %v2533 = vrot.slane %v2519, %v2532
        %v2534 = vcombine.low %v2469, %v2485
        %v2535 = vcombine.high %v2469, %v2485
        %v2537 = vunpack.c.l.s4 1934713408
        %v2538 = vunpack.c.0.s8 %v2537
        %v2539 = vlaneseq
        %v2540 = vshrl.u32 %v2539, 7
        %v2541 = vsub.s32 %v2538, %v2540
        %v2542 = vrot.slane %v2534, %v2541
        %v2544 = vunpack.c.l.s4 1934713408
        %v2545 = vunpack.c.0.s8 %v2544
        %v2546 = vlaneseq
        %v2547 = vshrl.u32 %v2546, 7
        %v2548 = vsub.s32 %v2545, %v2547
        %v2549 = vrot.slane %v2535, %v2548
        %v2550 = vcombine.low %v2494, %v2526
        %v2551 = vcombine.high %v2494, %v2526
        %v2552 = vcombine.low %v2501, %v2533
        %v2553 = vcombine.high %v2501, %v2533
        %v2554 = vcombine.low %v2510, %v2542
        %v2555 = vcombine.high %v2510, %v2542
        %v2556 = vcombine.low %v2517, %v2549
        %v2557 = vcombine.high %v2517, %v2549
        %v2558 = vcombine.low %v831, %v837
        %v2559 = vcombine.high %v831, %v837
        %v2561 = vunpack.c.l.s4 1983009808
        %v2562 = vunpack.c.0.s8 %v2561
        %v2563 = vlaneseq
        %v2564 = vshrl.u32 %v2563, 7
        %v2565 = vsub.s32 %v2562, %v2564
        %v2566 = vrot.slane %v2558, %v2565
        %v2568 = vunpack.c.l.s4 1983009808
        %v2569 = vunpack.c.0.s8 %v2568
        %v2570 = vlaneseq
        %v2571 = vshrl.u32 %v2570, 7
        %v2572 = vsub.s32 %v2569, %v2571
        %v2573 = vrot.slane %v2559, %v2572
        %v2574 = vcombine.low %v834, %v840
        %v2575 = vcombine.high %v834, %v840
        %v2577 = vunpack.c.l.s4 1983009808
        %v2578 = vunpack.c.0.s8 %v2577
        %v2579 = vlaneseq
        %v2580 = vshrl.u32 %v2579, 7
        %v2581 = vsub.s32 %v2578, %v2580
        %v2582 = vrot.slane %v2574, %v2581
        %v2584 = vunpack.c.l.s4 1983009808
        %v2585 = vunpack.c.0.s8 %v2584
        %v2586 = vlaneseq
        %v2587 = vshrl.u32 %v2586, 7
        %v2588 = vsub.s32 %v2585, %v2587
        %v2589 = vrot.slane %v2575, %v2588
        %v2590 = vcombine.low %v843, %v849
        %v2591 = vcombine.high %v843, %v849
        %v2593 = vunpack.c.l.s4 1983009808
        %v2594 = vunpack.c.0.s8 %v2593
        %v2595 = vlaneseq
        %v2596 = vshrl.u32 %v2595, 7
        %v2597 = vsub.s32 %v2594, %v2596
        %v2598 = vrot.slane %v2590, %v2597
        %v2600 = vunpack.c.l.s4 1983009808
        %v2601 = vunpack.c.0.s8 %v2600
        %v2602 = vlaneseq
        %v2603 = vshrl.u32 %v2602, 7
        %v2604 = vsub.s32 %v2601, %v2603
        %v2605 = vrot.slane %v2591, %v2604
        %v2606 = vcombine.low %v846, %v852
        %v2607 = vcombine.high %v846, %v852
        %v2609 = vunpack.c.l.s4 1983009808
        %v2610 = vunpack.c.0.s8 %v2609
        %v2611 = vlaneseq
        %v2612 = vshrl.u32 %v2611, 7
        %v2613 = vsub.s32 %v2610, %v2612
        %v2614 = vrot.slane %v2606, %v2613
        %v2616 = vunpack.c.l.s4 1983009808
        %v2617 = vunpack.c.0.s8 %v2616
        %v2618 = vlaneseq
        %v2619 = vshrl.u32 %v2618, 7
        %v2620 = vsub.s32 %v2617, %v2619
        %v2621 = vrot.slane %v2607, %v2620
        %v2622 = vcombine.low %v2566, %v2582
        %v2623 = vcombine.high %v2566, %v2582
        %v2625 = vunpack.c.l.s4 1934713408
        %v2626 = vunpack.c.0.s8 %v2625
        %v2627 = vlaneseq
        %v2628 = vshrl.u32 %v2627, 7
        %v2629 = vsub.s32 %v2626, %v2628
        %v2630 = vrot.slane %v2622, %v2629
        %v2632 = vunpack.c.l.s4 1934713408
        %v2633 = vunpack.c.0.s8 %v2632
        %v2634 = vlaneseq
        %v2635 = vshrl.u32 %v2634, 7
        %v2636 = vsub.s32 %v2633, %v2635
        %v2637 = vrot.slane %v2623, %v2636
        %v2638 = vcombine.low %v2573, %v2589
        %v2639 = vcombine.high %v2573, %v2589
        %v2641 = vunpack.c.l.s4 1934713408
        %v2642 = vunpack.c.0.s8 %v2641
        %v2643 = vlaneseq
        %v2644 = vshrl.u32 %v2643, 7
        %v2645 = vsub.s32 %v2642, %v2644
        %v2646 = vrot.slane %v2638, %v2645
        %v2648 = vunpack.c.l.s4 1934713408
        %v2649 = vunpack.c.0.s8 %v2648
        %v2650 = vlaneseq
        %v2651 = vshrl.u32 %v2650, 7
        %v2652 = vsub.s32 %v2649, %v2651
        %v2653 = vrot.slane %v2639, %v2652
        %v2654 = vcombine.low %v2598, %v2614
        %v2655 = vcombine.high %v2598, %v2614
        %v2657 = vunpack.c.l.s4 1934713408
        %v2658 = vunpack.c.0.s8 %v2657
        %v2659 = vlaneseq
        %v2660 = vshrl.u32 %v2659, 7
        %v2661 = vsub.s32 %v2658, %v2660
        %v2662 = vrot.slane %v2654, %v2661
        %v2664 = vunpack.c.l.s4 1934713408
        %v2665 = vunpack.c.0.s8 %v2664
        %v2666 = vlaneseq
        %v2667 = vshrl.u32 %v2666, 7
        %v2668 = vsub.s32 %v2665, %v2667
        %v2669 = vrot.slane %v2655, %v2668
        %v2670 = vcombine.low %v2605, %v2621
        %v2671 = vcombine.high %v2605, %v2621
        %v2673 = vunpack.c.l.s4 1934713408
        %v2674 = vunpack.c.0.s8 %v2673
        %v2675 = vlaneseq
        %v2676 = vshrl.u32 %v2675, 7
        %v2677 = vsub.s32 %v2674, %v2676
        %v2678 = vrot.slane %v2670, %v2677
        %v2680 = vunpack.c.l.s4 1934713408
        %v2681 = vunpack.c.0.s8 %v2680
        %v2682 = vlaneseq
        %v2683 = vshrl.u32 %v2682, 7
        %v2684 = vsub.s32 %v2681, %v2683
        %v2685 = vrot.slane %v2671, %v2684
        %v2686 = vcombine.low %v2630, %v2662
        %v2687 = vcombine.high %v2630, %v2662
        %v2688 = vcombine.low %v2637, %v2669
        %v2689 = vcombine.high %v2637, %v2669
        %v2690 = vcombine.low %v2646, %v2678
        %v2691 = vcombine.high %v2646, %v2678
        %v2692 = vcombine.low %v2653, %v2685
        %v2693 = vcombine.high %v2653, %v2685
        %v2694 = vcombine.low %v855, %v861
        %v2695 = vcombine.high %v855, %v861
        %v2697 = vunpack.c.l.s4 1983009808
        %v2698 = vunpack.c.0.s8 %v2697
        %v2699 = vlaneseq
        %v2700 = vshrl.u32 %v2699, 7
        %v2701 = vsub.s32 %v2698, %v2700
        %v2702 = vrot.slane %v2694, %v2701
        %v2704 = vunpack.c.l.s4 1983009808
        %v2705 = vunpack.c.0.s8 %v2704
        %v2706 = vlaneseq
        %v2707 = vshrl.u32 %v2706, 7
        %v2708 = vsub.s32 %v2705, %v2707
        %v2709 = vrot.slane %v2695, %v2708
        %v2710 = vcombine.low %v858, %v864
        %v2711 = vcombine.high %v858, %v864
        %v2713 = vunpack.c.l.s4 1983009808
        %v2714 = vunpack.c.0.s8 %v2713
        %v2715 = vlaneseq
        %v2716 = vshrl.u32 %v2715, 7
        %v2717 = vsub.s32 %v2714, %v2716
        %v2718 = vrot.slane %v2710, %v2717
        %v2720 = vunpack.c.l.s4 1983009808
        %v2721 = vunpack.c.0.s8 %v2720
        %v2722 = vlaneseq
        %v2723 = vshrl.u32 %v2722, 7
        %v2724 = vsub.s32 %v2721, %v2723
        %v2725 = vrot.slane %v2711, %v2724
        %v2726 = vcombine.low %v867, %v873
        %v2727 = vcombine.high %v867, %v873
        %v2729 = vunpack.c.l.s4 1983009808
        %v2730 = vunpack.c.0.s8 %v2729
        %v2731 = vlaneseq
        %v2732 = vshrl.u32 %v2731, 7
        %v2733 = vsub.s32 %v2730, %v2732
        %v2734 = vrot.slane %v2726, %v2733
        %v2736 = vunpack.c.l.s4 1983009808
        %v2737 = vunpack.c.0.s8 %v2736
        %v2738 = vlaneseq
        %v2739 = vshrl.u32 %v2738, 7
        %v2740 = vsub.s32 %v2737, %v2739
        %v2741 = vrot.slane %v2727, %v2740
        %v2742 = vcombine.low %v870, %v876
        %v2743 = vcombine.high %v870, %v876
        %v2745 = vunpack.c.l.s4 1983009808
        %v2746 = vunpack.c.0.s8 %v2745
        %v2747 = vlaneseq
        %v2748 = vshrl.u32 %v2747, 7
        %v2749 = vsub.s32 %v2746, %v2748
        %v2750 = vrot.slane %v2742, %v2749
        %v2752 = vunpack.c.l.s4 1983009808
        %v2753 = vunpack.c.0.s8 %v2752
        %v2754 = vlaneseq
        %v2755 = vshrl.u32 %v2754, 7
        %v2756 = vsub.s32 %v2753, %v2755
        %v2757 = vrot.slane %v2743, %v2756
        %v2758 = vcombine.low %v2702, %v2718
        %v2759 = vcombine.high %v2702, %v2718
        %v2761 = vunpack.c.l.s4 1934713408
        %v2762 = vunpack.c.0.s8 %v2761
        %v2763 = vlaneseq
        %v2764 = vshrl.u32 %v2763, 7
        %v2765 = vsub.s32 %v2762, %v2764
        %v2766 = vrot.slane %v2758, %v2765
        %v2768 = vunpack.c.l.s4 1934713408
        %v2769 = vunpack.c.0.s8 %v2768
        %v2770 = vlaneseq
        %v2771 = vshrl.u32 %v2770, 7
        %v2772 = vsub.s32 %v2769, %v2771
        %v2773 = vrot.slane %v2759, %v2772
        %v2774 = vcombine.low %v2709, %v2725
        %v2775 = vcombine.high %v2709, %v2725
        %v2777 = vunpack.c.l.s4 1934713408
        %v2778 = vunpack.c.0.s8 %v2777
        %v2779 = vlaneseq
        %v2780 = vshrl.u32 %v2779, 7
        %v2781 = vsub.s32 %v2778, %v2780
        %v2782 = vrot.slane %v2774, %v2781
        %v2784 = vunpack.c.l.s4 1934713408
        %v2785 = vunpack.c.0.s8 %v2784
        %v2786 = vlaneseq
        %v2787 = vshrl.u32 %v2786, 7
        %v2788 = vsub.s32 %v2785, %v2787
        %v2789 = vrot.slane %v2775, %v2788
        %v2790 = vcombine.low %v2734, %v2750
        %v2791 = vcombine.high %v2734, %v2750
        %v2793 = vunpack.c.l.s4 1934713408
        %v2794 = vunpack.c.0.s8 %v2793
        %v2795 = vlaneseq
        %v2796 = vshrl.u32 %v2795, 7
        %v2797 = vsub.s32 %v2794, %v2796
        %v2798 = vrot.slane %v2790, %v2797
        %v2800 = vunpack.c.l.s4 1934713408
        %v2801 = vunpack.c.0.s8 %v2800
        %v2802 = vlaneseq
        %v2803 = vshrl.u32 %v2802, 7
        %v2804 = vsub.s32 %v2801, %v2803
        %v2805 = vrot.slane %v2791, %v2804
        %v2806 = vcombine.low %v2741, %v2757
        %v2807 = vcombine.high %v2741, %v2757
        %v2809 = vunpack.c.l.s4 1934713408
        %v2810 = vunpack.c.0.s8 %v2809
        %v2811 = vlaneseq
        %v2812 = vshrl.u32 %v2811, 7
        %v2813 = vsub.s32 %v2810, %v2812
        %v2814 = vrot.slane %v2806, %v2813
        %v2816 = vunpack.c.l.s4 1934713408
        %v2817 = vunpack.c.0.s8 %v2816
        %v2818 = vlaneseq
        %v2819 = vshrl.u32 %v2818, 7
        %v2820 = vsub.s32 %v2817, %v2819
        %v2821 = vrot.slane %v2807, %v2820
        %v2822 = vcombine.low %v2766, %v2798
        %v2823 = vcombine.high %v2766, %v2798
        %v2824 = vcombine.low %v2773, %v2805
        %v2825 = vcombine.high %v2773, %v2805
        %v2826 = vcombine.low %v2782, %v2814
        %v2827 = vcombine.high %v2782, %v2814
        %v2828 = vcombine.low %v2789, %v2821
        %v2829 = vcombine.high %v2789, %v2821
        %v2830 = vcombine.low %v879, %v885
        %v2831 = vcombine.high %v879, %v885
        %v2833 = vunpack.c.l.s4 1983009808
        %v2834 = vunpack.c.0.s8 %v2833
        %v2835 = vlaneseq
        %v2836 = vshrl.u32 %v2835, 7
        %v2837 = vsub.s32 %v2834, %v2836
        %v2838 = vrot.slane %v2830, %v2837
        %v2840 = vunpack.c.l.s4 1983009808
        %v2841 = vunpack.c.0.s8 %v2840
        %v2842 = vlaneseq
        %v2843 = vshrl.u32 %v2842, 7
        %v2844 = vsub.s32 %v2841, %v2843
        %v2845 = vrot.slane %v2831, %v2844
        %v2846 = vcombine.low %v882, %v888
        %v2847 = vcombine.high %v882, %v888
        %v2849 = vunpack.c.l.s4 1983009808
        %v2850 = vunpack.c.0.s8 %v2849
        %v2851 = vlaneseq
        %v2852 = vshrl.u32 %v2851, 7
        %v2853 = vsub.s32 %v2850, %v2852
        %v2854 = vrot.slane %v2846, %v2853
        %v2856 = vunpack.c.l.s4 1983009808
        %v2857 = vunpack.c.0.s8 %v2856
        %v2858 = vlaneseq
        %v2859 = vshrl.u32 %v2858, 7
        %v2860 = vsub.s32 %v2857, %v2859
        %v2861 = vrot.slane %v2847, %v2860
        %v2862 = vcombine.low %v891, %v897
        %v2863 = vcombine.high %v891, %v897
        %v2865 = vunpack.c.l.s4 1983009808
        %v2866 = vunpack.c.0.s8 %v2865
        %v2867 = vlaneseq
        %v2868 = vshrl.u32 %v2867, 7
        %v2869 = vsub.s32 %v2866, %v2868
        %v2870 = vrot.slane %v2862, %v2869
        %v2872 = vunpack.c.l.s4 1983009808
        %v2873 = vunpack.c.0.s8 %v2872
        %v2874 = vlaneseq
        %v2875 = vshrl.u32 %v2874, 7
        %v2876 = vsub.s32 %v2873, %v2875
        %v2877 = vrot.slane %v2863, %v2876
        %v2878 = vcombine.low %v894, %v900
        %v2879 = vcombine.high %v894, %v900
        %v2881 = vunpack.c.l.s4 1983009808
        %v2882 = vunpack.c.0.s8 %v2881
        %v2883 = vlaneseq
        %v2884 = vshrl.u32 %v2883, 7
        %v2885 = vsub.s32 %v2882, %v2884
        %v2886 = vrot.slane %v2878, %v2885
        %v2888 = vunpack.c.l.s4 1983009808
        %v2889 = vunpack.c.0.s8 %v2888
        %v2890 = vlaneseq
        %v2891 = vshrl.u32 %v2890, 7
        %v2892 = vsub.s32 %v2889, %v2891
        %v2893 = vrot.slane %v2879, %v2892
        %v2894 = vcombine.low %v2838, %v2854
        %v2895 = vcombine.high %v2838, %v2854
        %v2897 = vunpack.c.l.s4 1934713408
        %v2898 = vunpack.c.0.s8 %v2897
        %v2899 = vlaneseq
        %v2900 = vshrl.u32 %v2899, 7
        %v2901 = vsub.s32 %v2898, %v2900
        %v2902 = vrot.slane %v2894, %v2901
        %v2904 = vunpack.c.l.s4 1934713408
        %v2905 = vunpack.c.0.s8 %v2904
        %v2906 = vlaneseq
        %v2907 = vshrl.u32 %v2906, 7
        %v2908 = vsub.s32 %v2905, %v2907
        %v2909 = vrot.slane %v2895, %v2908
        %v2910 = vcombine.low %v2845, %v2861
        %v2911 = vcombine.high %v2845, %v2861
        %v2913 = vunpack.c.l.s4 1934713408
        %v2914 = vunpack.c.0.s8 %v2913
        %v2915 = vlaneseq
        %v2916 = vshrl.u32 %v2915, 7
        %v2917 = vsub.s32 %v2914, %v2916
        %v2918 = vrot.slane %v2910, %v2917
        %v2920 = vunpack.c.l.s4 1934713408
        %v2921 = vunpack.c.0.s8 %v2920
        %v2922 = vlaneseq
        %v2923 = vshrl.u32 %v2922, 7
        %v2924 = vsub.s32 %v2921, %v2923
        %v2925 = vrot.slane %v2911, %v2924
        %v2926 = vcombine.low %v2870, %v2886
        %v2927 = vcombine.high %v2870, %v2886
        %v2929 = vunpack.c.l.s4 1934713408
        %v2930 = vunpack.c.0.s8 %v2929
        %v2931 = vlaneseq
        %v2932 = vshrl.u32 %v2931, 7
        %v2933 = vsub.s32 %v2930, %v2932
        %v2934 = vrot.slane %v2926, %v2933
        %v2936 = vunpack.c.l.s4 1934713408
        %v2937 = vunpack.c.0.s8 %v2936
        %v2938 = vlaneseq
        %v2939 = vshrl.u32 %v2938, 7
        %v2940 = vsub.s32 %v2937, %v2939
        %v2941 = vrot.slane %v2927, %v2940
        %v2942 = vcombine.low %v2877, %v2893
        %v2943 = vcombine.high %v2877, %v2893
        %v2945 = vunpack.c.l.s4 1934713408
        %v2946 = vunpack.c.0.s8 %v2945
        %v2947 = vlaneseq
        %v2948 = vshrl.u32 %v2947, 7
        %v2949 = vsub.s32 %v2946, %v2948
        %v2950 = vrot.slane %v2942, %v2949
        %v2952 = vunpack.c.l.s4 1934713408
        %v2953 = vunpack.c.0.s8 %v2952
        %v2954 = vlaneseq
        %v2955 = vshrl.u32 %v2954, 7
        %v2956 = vsub.s32 %v2953, %v2955
        %v2957 = vrot.slane %v2943, %v2956
        %v2958 = vcombine.low %v2902, %v2934
        %v2959 = vcombine.high %v2902, %v2934
        %v2960 = vcombine.low %v2909, %v2941
        %v2961 = vcombine.high %v2909, %v2941
        %v2962 = vcombine.low %v2918, %v2950
        %v2963 = vcombine.high %v2918, %v2950
        %v2964 = vcombine.low %v2925, %v2957
        %v2965 = vcombine.high %v2925, %v2957
        %v2966 = vcombine.low %v903, %v909
        %v2967 = vcombine.high %v903, %v909
        %v2969 = vunpack.c.l.s4 1983009808
        %v2970 = vunpack.c.0.s8 %v2969
        %v2971 = vlaneseq
        %v2972 = vshrl.u32 %v2971, 7
        %v2973 = vsub.s32 %v2970, %v2972
        %v2974 = vrot.slane %v2966, %v2973
        %v2976 = vunpack.c.l.s4 1983009808
        %v2977 = vunpack.c.0.s8 %v2976
        %v2978 = vlaneseq
        %v2979 = vshrl.u32 %v2978, 7
        %v2980 = vsub.s32 %v2977, %v2979
        %v2981 = vrot.slane %v2967, %v2980
        %v2982 = vcombine.low %v906, %v912
        %v2983 = vcombine.high %v906, %v912
        %v2985 = vunpack.c.l.s4 1983009808
        %v2986 = vunpack.c.0.s8 %v2985
        %v2987 = vlaneseq
        %v2988 = vshrl.u32 %v2987, 7
        %v2989 = vsub.s32 %v2986, %v2988
        %v2990 = vrot.slane %v2982, %v2989
        %v2992 = vunpack.c.l.s4 1983009808
        %v2993 = vunpack.c.0.s8 %v2992
        %v2994 = vlaneseq
        %v2995 = vshrl.u32 %v2994, 7
        %v2996 = vsub.s32 %v2993, %v2995
        %v2997 = vrot.slane %v2983, %v2996
        %v2998 = vcombine.low %v915, %v921
        %v2999 = vcombine.high %v915, %v921
        %v3001 = vunpack.c.l.s4 1983009808
        %v3002 = vunpack.c.0.s8 %v3001
        %v3003 = vlaneseq
        %v3004 = vshrl.u32 %v3003, 7
        %v3005 = vsub.s32 %v3002, %v3004
        %v3006 = vrot.slane %v2998, %v3005
        %v3008 = vunpack.c.l.s4 1983009808
        %v3009 = vunpack.c.0.s8 %v3008
        %v3010 = vlaneseq
        %v3011 = vshrl.u32 %v3010, 7
        %v3012 = vsub.s32 %v3009, %v3011
        %v3013 = vrot.slane %v2999, %v3012
        %v3014 = vcombine.low %v918, %v924
        %v3015 = vcombine.high %v918, %v924
        %v3017 = vunpack.c.l.s4 1983009808
        %v3018 = vunpack.c.0.s8 %v3017
        %v3019 = vlaneseq
        %v3020 = vshrl.u32 %v3019, 7
        %v3021 = vsub.s32 %v3018, %v3020
        %v3022 = vrot.slane %v3014, %v3021
        %v3024 = vunpack.c.l.s4 1983009808
        %v3025 = vunpack.c.0.s8 %v3024
        %v3026 = vlaneseq
        %v3027 = vshrl.u32 %v3026, 7
        %v3028 = vsub.s32 %v3025, %v3027
        %v3029 = vrot.slane %v3015, %v3028
        %v3030 = vcombine.low %v2974, %v2990
        %v3031 = vcombine.high %v2974, %v2990
        %v3033 = vunpack.c.l.s4 1934713408
        %v3034 = vunpack.c.0.s8 %v3033
        %v3035 = vlaneseq
        %v3036 = vshrl.u32 %v3035, 7
        %v3037 = vsub.s32 %v3034, %v3036
        %v3038 = vrot.slane %v3030, %v3037
        %v3040 = vunpack.c.l.s4 1934713408
        %v3041 = vunpack.c.0.s8 %v3040
        %v3042 = vlaneseq
        %v3043 = vshrl.u32 %v3042, 7
        %v3044 = vsub.s32 %v3041, %v3043
        %v3045 = vrot.slane %v3031, %v3044
        %v3046 = vcombine.low %v2981, %v2997
        %v3047 = vcombine.high %v2981, %v2997
        %v3049 = vunpack.c.l.s4 1934713408
        %v3050 = vunpack.c.0.s8 %v3049
        %v3051 = vlaneseq
        %v3052 = vshrl.u32 %v3051, 7
        %v3053 = vsub.s32 %v3050, %v3052
        %v3054 = vrot.slane %v3046, %v3053
        %v3056 = vunpack.c.l.s4 1934713408
        %v3057 = vunpack.c.0.s8 %v3056
        %v3058 = vlaneseq
        %v3059 = vshrl.u32 %v3058, 7
        %v3060 = vsub.s32 %v3057, %v3059
        %v3061 = vrot.slane %v3047, %v3060
        %v3062 = vcombine.low %v3006, %v3022
        %v3063 = vcombine.high %v3006, %v3022
        %v3065 = vunpack.c.l.s4 1934713408
        %v3066 = vunpack.c.0.s8 %v3065
        %v3067 = vlaneseq
        %v3068 = vshrl.u32 %v3067, 7
        %v3069 = vsub.s32 %v3066, %v3068
        %v3070 = vrot.slane %v3062, %v3069
        %v3072 = vunpack.c.l.s4 1934713408
        %v3073 = vunpack.c.0.s8 %v3072
        %v3074 = vlaneseq
        %v3075 = vshrl.u32 %v3074, 7
        %v3076 = vsub.s32 %v3073, %v3075
        %v3077 = vrot.slane %v3063, %v3076
        %v3078 = vcombine.low %v3013, %v3029
        %v3079 = vcombine.high %v3013, %v3029
        %v3081 = vunpack.c.l.s4 1934713408
        %v3082 = vunpack.c.0.s8 %v3081
        %v3083 = vlaneseq
        %v3084 = vshrl.u32 %v3083, 7
        %v3085 = vsub.s32 %v3082, %v3084
        %v3086 = vrot.slane %v3078, %v3085
        %v3088 = vunpack.c.l.s4 1934713408
        %v3089 = vunpack.c.0.s8 %v3088
        %v3090 = vlaneseq
        %v3091 = vshrl.u32 %v3090, 7
        %v3092 = vsub.s32 %v3089, %v3091
        %v3093 = vrot.slane %v3079, %v3092
        %v3094 = vcombine.low %v3038, %v3070
        %v3095 = vcombine.high %v3038, %v3070
        %v3096 = vcombine.low %v3045, %v3077
        %v3097 = vcombine.high %v3045, %v3077
        %v3098 = vcombine.low %v3054, %v3086
        %v3099 = vcombine.high %v3054, %v3086
        %v3100 = vcombine.low %v3061, %v3093
        %v3101 = vcombine.high %v3061, %v3093
        %vm3102 = vcmask 15360
        %v3103 = vsel %vm3102, %v1054, -inf
        %3104 = vmax.xlane.f32.xlu0 %v3103
        %v3105 = vpop.xlane.xlu0 %3104
        %v3106 = vsel %vm3102, %v1190, -inf
        %3107 = vmax.xlane.f32.xlu0 %v3106
        %v3108 = vpop.xlane.xlu0 %3107
        %v3109 = vsel %vm3102, %v1326, -inf
        %3110 = vmax.xlane.f32.xlu0 %v3109
        %v3111 = vpop.xlane.xlu0 %3110
        %v3112 = vsel %vm3102, %v1462, -inf
        %3113 = vmax.xlane.f32.xlu0 %v3112
        %v3114 = vpop.xlane.xlu0 %3113
        %v3115 = vsel %vm3102, %v1598, -inf
        %3116 = vmax.xlane.f32.xlu0 %v3115
        %v3117 = vpop.xlane.xlu0 %3116
        %v3118 = vsel %vm3102, %v1734, -inf
        %3119 = vmax.xlane.f32.xlu0 %v3118
        %v3120 = vpop.xlane.xlu0 %3119
        %v3121 = vsel %vm3102, %v1870, -inf
        %3122 = vmax.xlane.f32.xlu0 %v3121
        %v3123 = vpop.xlane.xlu0 %3122
        %v3124 = vsel %vm3102, %v2006, -inf
        %3125 = vmax.xlane.f32.xlu0 %v3124
        %v3126 = vpop.xlane.xlu0 %3125
        %v3127 = vsel %vm3102, %v2142, -inf
        %3128 = vmax.xlane.f32.xlu0 %v3127
        %v3129 = vpop.xlane.xlu0 %3128
        %v3130 = vsel %vm3102, %v2278, -inf
        %3131 = vmax.xlane.f32.xlu0 %v3130
        %v3132 = vpop.xlane.xlu0 %3131
        %v3133 = vsel %vm3102, %v2414, -inf
        %3134 = vmax.xlane.f32.xlu0 %v3133
        %v3135 = vpop.xlane.xlu0 %3134
        %v3136 = vsel %vm3102, %v2550, -inf
        %3137 = vmax.xlane.f32.xlu0 %v3136
        %v3138 = vpop.xlane.xlu0 %3137
        %v3139 = vsel %vm3102, %v2686, -inf
        %3140 = vmax.xlane.f32.xlu0 %v3139
        %v3141 = vpop.xlane.xlu0 %3140
        %v3142 = vsel %vm3102, %v2822, -inf
        %3143 = vmax.xlane.f32.xlu0 %v3142
        %v3144 = vpop.xlane.xlu0 %3143
        %v3145 = vsel %vm3102, %v2958, -inf
        %3146 = vmax.xlane.f32.xlu0 %v3145
        %v3147 = vpop.xlane.xlu0 %3146
        %v3148 = vsel %vm3102, %v3094, -inf
        %3149 = vmax.xlane.f32.xlu0 %v3148
        %v3150 = vpop.xlane.xlu0 %3149
        %v3151 = vsel %vm3102, %v1055, -inf
        %3152 = vmax.xlane.f32.xlu0 %v3151
        %v3153 = vpop.xlane.xlu0 %3152
        %v3154 = vsel %vm3102, %v1191, -inf
        %3155 = vmax.xlane.f32.xlu0 %v3154
        %v3156 = vpop.xlane.xlu0 %3155
        %v3157 = vsel %vm3102, %v1327, -inf
        %3158 = vmax.xlane.f32.xlu0 %v3157
        %v3159 = vpop.xlane.xlu0 %3158
        %v3160 = vsel %vm3102, %v1463, -inf
        %3161 = vmax.xlane.f32.xlu0 %v3160
        %v3162 = vpop.xlane.xlu0 %3161
        %v3163 = vsel %vm3102, %v1599, -inf
        %3164 = vmax.xlane.f32.xlu0 %v3163
        %v3165 = vpop.xlane.xlu0 %3164
        %v3166 = vsel %vm3102, %v1735, -inf
        %3167 = vmax.xlane.f32.xlu0 %v3166
        %v3168 = vpop.xlane.xlu0 %3167
        %v3169 = vsel %vm3102, %v1871, -inf
        %3170 = vmax.xlane.f32.xlu0 %v3169
        %v3171 = vpop.xlane.xlu0 %3170
        %v3172 = vsel %vm3102, %v2007, -inf
        %3173 = vmax.xlane.f32.xlu0 %v3172
        %v3174 = vpop.xlane.xlu0 %3173
        %v3175 = vsel %vm3102, %v2143, -inf
        %3176 = vmax.xlane.f32.xlu0 %v3175
        %v3177 = vpop.xlane.xlu0 %3176
        %v3178 = vsel %vm3102, %v2279, -inf
        %3179 = vmax.xlane.f32.xlu0 %v3178
        %v3180 = vpop.xlane.xlu0 %3179
        %v3181 = vsel %vm3102, %v2415, -inf
        %3182 = vmax.xlane.f32.xlu0 %v3181
        %v3183 = vpop.xlane.xlu0 %3182
        %v3184 = vsel %vm3102, %v2551, -inf
        %3185 = vmax.xlane.f32.xlu0 %v3184
        %v3186 = vpop.xlane.xlu0 %3185
        %v3187 = vsel %vm3102, %v2687, -inf
        %3188 = vmax.xlane.f32.xlu0 %v3187
        %v3189 = vpop.xlane.xlu0 %3188
        %v3190 = vsel %vm3102, %v2823, -inf
        %3191 = vmax.xlane.f32.xlu0 %v3190
        %v3192 = vpop.xlane.xlu0 %3191
        %v3193 = vsel %vm3102, %v2959, -inf
        %3194 = vmax.xlane.f32.xlu0 %v3193
        %v3195 = vpop.xlane.xlu0 %3194
        %v3196 = vsel %vm3102, %v3095, -inf
        %3197 = vmax.xlane.f32.xlu0 %v3196
        %v3198 = vpop.xlane.xlu0 %3197
        %v3199 = vsel %vm3102, %v1056, -inf
        %3200 = vmax.xlane.f32.xlu0 %v3199
        %v3201 = vpop.xlane.xlu0 %3200
        %v3202 = vsel %vm3102, %v1192, -inf
        %3203 = vmax.xlane.f32.xlu0 %v3202
        %v3204 = vpop.xlane.xlu0 %3203
        %v3205 = vsel %vm3102, %v1328, -inf
        %3206 = vmax.xlane.f32.xlu0 %v3205
        %v3207 = vpop.xlane.xlu0 %3206
        %v3208 = vsel %vm3102, %v1464, -inf
        %3209 = vmax.xlane.f32.xlu0 %v3208
        %v3210 = vpop.xlane.xlu0 %3209
        %v3211 = vsel %vm3102, %v1600, -inf
        %3212 = vmax.xlane.f32.xlu0 %v3211
        %v3213 = vpop.xlane.xlu0 %3212
        %v3214 = vsel %vm3102, %v1736, -inf
        %3215 = vmax.xlane.f32.xlu0 %v3214
        %v3216 = vpop.xlane.xlu0 %3215
        %v3217 = vsel %vm3102, %v1872, -inf
        %3218 = vmax.xlane.f32.xlu0 %v3217
        %v3219 = vpop.xlane.xlu0 %3218
        %v3220 = vsel %vm3102, %v2008, -inf
        %3221 = vmax.xlane.f32.xlu0 %v3220
        %v3222 = vpop.xlane.xlu0 %3221
        %v3223 = vsel %vm3102, %v2144, -inf
        %3224 = vmax.xlane.f32.xlu0 %v3223
        %v3225 = vpop.xlane.xlu0 %3224
        %v3226 = vsel %vm3102, %v2280, -inf
        %3227 = vmax.xlane.f32.xlu0 %v3226
        %v3228 = vpop.xlane.xlu0 %3227
        %v3229 = vsel %vm3102, %v2416, -inf
        %3230 = vmax.xlane.f32.xlu0 %v3229
        %v3231 = vpop.xlane.xlu0 %3230
        %v3232 = vsel %vm3102, %v2552, -inf
        %3233 = vmax.xlane.f32.xlu0 %v3232
        %v3234 = vpop.xlane.xlu0 %3233
        %v3235 = vsel %vm3102, %v2688, -inf
        %3236 = vmax.xlane.f32.xlu0 %v3235
        %v3237 = vpop.xlane.xlu0 %3236
        %v3238 = vsel %vm3102, %v2824, -inf
        %3239 = vmax.xlane.f32.xlu0 %v3238
        %v3240 = vpop.xlane.xlu0 %3239
        %v3241 = vsel %vm3102, %v2960, -inf
        %3242 = vmax.xlane.f32.xlu0 %v3241
        %v3243 = vpop.xlane.xlu0 %3242
        %v3244 = vsel %vm3102, %v3096, -inf
        %3245 = vmax.xlane.f32.xlu0 %v3244
        %v3246 = vpop.xlane.xlu0 %3245
        %v3247 = vsel %vm3102, %v1057, -inf
        %3248 = vmax.xlane.f32.xlu0 %v3247
        %v3249 = vpop.xlane.xlu0 %3248
        %v3250 = vsel %vm3102, %v1193, -inf
        %3251 = vmax.xlane.f32.xlu0 %v3250
        %v3252 = vpop.xlane.xlu0 %3251
        %v3253 = vsel %vm3102, %v1329, -inf
        %3254 = vmax.xlane.f32.xlu0 %v3253
        %v3255 = vpop.xlane.xlu0 %3254
        %v3256 = vsel %vm3102, %v1465, -inf
        %3257 = vmax.xlane.f32.xlu0 %v3256
        %v3258 = vpop.xlane.xlu0 %3257
        %v3259 = vsel %vm3102, %v1601, -inf
        %3260 = vmax.xlane.f32.xlu0 %v3259
        %v3261 = vpop.xlane.xlu0 %3260
        %v3262 = vsel %vm3102, %v1737, -inf
        %3263 = vmax.xlane.f32.xlu0 %v3262
        %v3264 = vpop.xlane.xlu0 %3263
        %v3265 = vsel %vm3102, %v1873, -inf
        %3266 = vmax.xlane.f32.xlu0 %v3265
        %v3267 = vpop.xlane.xlu0 %3266
        %v3268 = vsel %vm3102, %v2009, -inf
        %3269 = vmax.xlane.f32.xlu0 %v3268
        %v3270 = vpop.xlane.xlu0 %3269
        %v3271 = vsel %vm3102, %v2145, -inf
        %3272 = vmax.xlane.f32.xlu0 %v3271
        %v3273 = vpop.xlane.xlu0 %3272
        %v3274 = vsel %vm3102, %v2281, -inf
        %3275 = vmax.xlane.f32.xlu0 %v3274
        %v3276 = vpop.xlane.xlu0 %3275
        %v3277 = vsel %vm3102, %v2417, -inf
        %3278 = vmax.xlane.f32.xlu0 %v3277
        %v3279 = vpop.xlane.xlu0 %3278
        %v3280 = vsel %vm3102, %v2553, -inf
        %3281 = vmax.xlane.f32.xlu0 %v3280
        %v3282 = vpop.xlane.xlu0 %3281
        %v3283 = vsel %vm3102, %v2689, -inf
        %3284 = vmax.xlane.f32.xlu0 %v3283
        %v3285 = vpop.xlane.xlu0 %3284
        %v3286 = vsel %vm3102, %v2825, -inf
        %3287 = vmax.xlane.f32.xlu0 %v3286
        %v3288 = vpop.xlane.xlu0 %3287
        %v3289 = vsel %vm3102, %v2961, -inf
        %3290 = vmax.xlane.f32.xlu0 %v3289
        %v3291 = vpop.xlane.xlu0 %3290
        %v3292 = vsel %vm3102, %v3097, -inf
        %3293 = vmax.xlane.f32.xlu0 %v3292
        %v3294 = vpop.xlane.xlu0 %3293
        %v3295 = vsel %vm3102, %v1058, -inf
        %3296 = vmax.xlane.f32.xlu0 %v3295
        %v3297 = vpop.xlane.xlu0 %3296
        %v3298 = vsel %vm3102, %v1194, -inf
        %3299 = vmax.xlane.f32.xlu0 %v3298
        %v3300 = vpop.xlane.xlu0 %3299
        %v3301 = vsel %vm3102, %v1330, -inf
        %3302 = vmax.xlane.f32.xlu0 %v3301
        %v3303 = vpop.xlane.xlu0 %3302
        %v3304 = vsel %vm3102, %v1466, -inf
        %3305 = vmax.xlane.f32.xlu0 %v3304
        %v3306 = vpop.xlane.xlu0 %3305
        %v3307 = vsel %vm3102, %v1602, -inf
        %3308 = vmax.xlane.f32.xlu0 %v3307
        %v3309 = vpop.xlane.xlu0 %3308
        %v3310 = vsel %vm3102, %v1738, -inf
        %3311 = vmax.xlane.f32.xlu0 %v3310
        %v3312 = vpop.xlane.xlu0 %3311
        %v3313 = vsel %vm3102, %v1874, -inf
        %3314 = vmax.xlane.f32.xlu0 %v3313
        %v3315 = vpop.xlane.xlu0 %3314
        %v3316 = vsel %vm3102, %v2010, -inf
        %3317 = vmax.xlane.f32.xlu0 %v3316
        %v3318 = vpop.xlane.xlu0 %3317
        %v3319 = vsel %vm3102, %v2146, -inf
        %3320 = vmax.xlane.f32.xlu0 %v3319
        %v3321 = vpop.xlane.xlu0 %3320
        %v3322 = vsel %vm3102, %v2282, -inf
        %3323 = vmax.xlane.f32.xlu0 %v3322
        %v3324 = vpop.xlane.xlu0 %3323
        %v3325 = vsel %vm3102, %v2418, -inf
        %3326 = vmax.xlane.f32.xlu0 %v3325
        %v3327 = vpop.xlane.xlu0 %3326
        %v3328 = vsel %vm3102, %v2554, -inf
        %3329 = vmax.xlane.f32.xlu0 %v3328
        %v3330 = vpop.xlane.xlu0 %3329
        %v3331 = vsel %vm3102, %v2690, -inf
        %3332 = vmax.xlane.f32.xlu0 %v3331
        %v3333 = vpop.xlane.xlu0 %3332
        %v3334 = vsel %vm3102, %v2826, -inf
        %3335 = vmax.xlane.f32.xlu0 %v3334
        %v3336 = vpop.xlane.xlu0 %3335
        %v3337 = vsel %vm3102, %v2962, -inf
        %3338 = vmax.xlane.f32.xlu0 %v3337
        %v3339 = vpop.xlane.xlu0 %3338
        %v3340 = vsel %vm3102, %v3098, -inf
        %3341 = vmax.xlane.f32.xlu0 %v3340
        %v3342 = vpop.xlane.xlu0 %3341
        %v3343 = vsel %vm3102, %v1059, -inf
        %3344 = vmax.xlane.f32.xlu0 %v3343
        %v3345 = vpop.xlane.xlu0 %3344
        %v3346 = vsel %vm3102, %v1195, -inf
        %3347 = vmax.xlane.f32.xlu0 %v3346
        %v3348 = vpop.xlane.xlu0 %3347
        %v3349 = vsel %vm3102, %v1331, -inf
        %3350 = vmax.xlane.f32.xlu0 %v3349
        %v3351 = vpop.xlane.xlu0 %3350
        %v3352 = vsel %vm3102, %v1467, -inf
        %3353 = vmax.xlane.f32.xlu0 %v3352
        %v3354 = vpop.xlane.xlu0 %3353
        %v3355 = vsel %vm3102, %v1603, -inf
        %3356 = vmax.xlane.f32.xlu0 %v3355
        %v3357 = vpop.xlane.xlu0 %3356
        %v3358 = vsel %vm3102, %v1739, -inf
        %3359 = vmax.xlane.f32.xlu0 %v3358
        %v3360 = vpop.xlane.xlu0 %3359
        %v3361 = vsel %vm3102, %v1875, -inf
        %3362 = vmax.xlane.f32.xlu0 %v3361
        %v3363 = vpop.xlane.xlu0 %3362
        %v3364 = vsel %vm3102, %v2011, -inf
        %3365 = vmax.xlane.f32.xlu0 %v3364
        %v3366 = vpop.xlane.xlu0 %3365
        %v3367 = vsel %vm3102, %v2147, -inf
        %3368 = vmax.xlane.f32.xlu0 %v3367
        %v3369 = vpop.xlane.xlu0 %3368
        %v3370 = vsel %vm3102, %v2283, -inf
        %3371 = vmax.xlane.f32.xlu0 %v3370
        %v3372 = vpop.xlane.xlu0 %3371
        %v3373 = vsel %vm3102, %v2419, -inf
        %3374 = vmax.xlane.f32.xlu0 %v3373
        %v3375 = vpop.xlane.xlu0 %3374
        %v3376 = vsel %vm3102, %v2555, -inf
        %3377 = vmax.xlane.f32.xlu0 %v3376
        %v3378 = vpop.xlane.xlu0 %3377
        %v3379 = vsel %vm3102, %v2691, -inf
        %3380 = vmax.xlane.f32.xlu0 %v3379
        %v3381 = vpop.xlane.xlu0 %3380
        %v3382 = vsel %vm3102, %v2827, -inf
        %3383 = vmax.xlane.f32.xlu0 %v3382
        %v3384 = vpop.xlane.xlu0 %3383
        %v3385 = vsel %vm3102, %v2963, -inf
        %3386 = vmax.xlane.f32.xlu0 %v3385
        %v3387 = vpop.xlane.xlu0 %3386
        %v3388 = vsel %vm3102, %v3099, -inf
        %3389 = vmax.xlane.f32.xlu0 %v3388
        %v3390 = vpop.xlane.xlu0 %3389
        %v3391 = vsel %vm3102, %v1060, -inf
        %3392 = vmax.xlane.f32.xlu0 %v3391
        %v3393 = vpop.xlane.xlu0 %3392
        %v3394 = vsel %vm3102, %v1196, -inf
        %3395 = vmax.xlane.f32.xlu0 %v3394
        %v3396 = vpop.xlane.xlu0 %3395
        %v3397 = vsel %vm3102, %v1332, -inf
        %3398 = vmax.xlane.f32.xlu0 %v3397
        %v3399 = vpop.xlane.xlu0 %3398
        %v3400 = vsel %vm3102, %v1468, -inf
        %3401 = vmax.xlane.f32.xlu0 %v3400
        %v3402 = vpop.xlane.xlu0 %3401
        %v3403 = vsel %vm3102, %v1604, -inf
        %3404 = vmax.xlane.f32.xlu0 %v3403
        %v3405 = vpop.xlane.xlu0 %3404
        %v3406 = vsel %vm3102, %v1740, -inf
        %3407 = vmax.xlane.f32.xlu0 %v3406
        %v3408 = vpop.xlane.xlu0 %3407
        %v3409 = vsel %vm3102, %v1876, -inf
        %3410 = vmax.xlane.f32.xlu0 %v3409
        %v3411 = vpop.xlane.xlu0 %3410
        %v3412 = vsel %vm3102, %v2012, -inf
        %3413 = vmax.xlane.f32.xlu0 %v3412
        %v3414 = vpop.xlane.xlu0 %3413
        %v3415 = vsel %vm3102, %v2148, -inf
        %3416 = vmax.xlane.f32.xlu0 %v3415
        %v3417 = vpop.xlane.xlu0 %3416
        %v3418 = vsel %vm3102, %v2284, -inf
        %3419 = vmax.xlane.f32.xlu0 %v3418
        %v3420 = vpop.xlane.xlu0 %3419
        %v3421 = vsel %vm3102, %v2420, -inf
        %3422 = vmax.xlane.f32.xlu0 %v3421
        %v3423 = vpop.xlane.xlu0 %3422
        %v3424 = vsel %vm3102, %v2556, -inf
        %3425 = vmax.xlane.f32.xlu0 %v3424
        %v3426 = vpop.xlane.xlu0 %3425
        %v3427 = vsel %vm3102, %v2692, -inf
        %3428 = vmax.xlane.f32.xlu0 %v3427
        %v3429 = vpop.xlane.xlu0 %3428
        %v3430 = vsel %vm3102, %v2828, -inf
        %3431 = vmax.xlane.f32.xlu0 %v3430
        %v3432 = vpop.xlane.xlu0 %3431
        %v3433 = vsel %vm3102, %v2964, -inf
        %3434 = vmax.xlane.f32.xlu0 %v3433
        %v3435 = vpop.xlane.xlu0 %3434
        %v3436 = vsel %vm3102, %v3100, -inf
        %3437 = vmax.xlane.f32.xlu0 %v3436
        %v3438 = vpop.xlane.xlu0 %3437
        %v3439 = vsel %vm3102, %v1061, -inf
        %3440 = vmax.xlane.f32.xlu0 %v3439
        %v3441 = vpop.xlane.xlu0 %3440
        %v3442 = vsel %vm3102, %v1197, -inf
        %3443 = vmax.xlane.f32.xlu0 %v3442
        %v3444 = vpop.xlane.xlu0 %3443
        %v3445 = vsel %vm3102, %v1333, -inf
        %3446 = vmax.xlane.f32.xlu0 %v3445
        %v3447 = vpop.xlane.xlu0 %3446
        %v3448 = vsel %vm3102, %v1469, -inf
        %3449 = vmax.xlane.f32.xlu0 %v3448
        %v3450 = vpop.xlane.xlu0 %3449
        %v3451 = vsel %vm3102, %v1605, -inf
        %3452 = vmax.xlane.f32.xlu0 %v3451
        %v3453 = vpop.xlane.xlu0 %3452
        %v3454 = vsel %vm3102, %v1741, -inf
        %3455 = vmax.xlane.f32.xlu0 %v3454
        %v3456 = vpop.xlane.xlu0 %3455
        %v3457 = vsel %vm3102, %v1877, -inf
        %3458 = vmax.xlane.f32.xlu0 %v3457
        %v3459 = vpop.xlane.xlu0 %3458
        %v3460 = vsel %vm3102, %v2013, -inf
        %3461 = vmax.xlane.f32.xlu0 %v3460
        %v3462 = vpop.xlane.xlu0 %3461
        %v3463 = vsel %vm3102, %v2149, -inf
        %3464 = vmax.xlane.f32.xlu0 %v3463
        %v3465 = vpop.xlane.xlu0 %3464
        %v3466 = vsel %vm3102, %v2285, -inf
        %3467 = vmax.xlane.f32.xlu0 %v3466
        %v3468 = vpop.xlane.xlu0 %3467
        %v3469 = vsel %vm3102, %v2421, -inf
        %3470 = vmax.xlane.f32.xlu0 %v3469
        %v3471 = vpop.xlane.xlu0 %3470
        %v3472 = vsel %vm3102, %v2557, -inf
        %3473 = vmax.xlane.f32.xlu0 %v3472
        %v3474 = vpop.xlane.xlu0 %3473
        %v3475 = vsel %vm3102, %v2693, -inf
        %3476 = vmax.xlane.f32.xlu0 %v3475
        %v3477 = vpop.xlane.xlu0 %3476
        %v3478 = vsel %vm3102, %v2829, -inf
        %3479 = vmax.xlane.f32.xlu0 %v3478
        %v3480 = vpop.xlane.xlu0 %3479
        %v3481 = vsel %vm3102, %v2965, -inf
        %3482 = vmax.xlane.f32.xlu0 %v3481
        %v3483 = vpop.xlane.xlu0 %3482
        %v3484 = vsel %vm3102, %v3101, -inf
        %3485 = vmax.xlane.f32.xlu0 %v3484
        %v3486 = vpop.xlane.xlu0 %3485
        %v3615 = vlaneseq
        %v3616 = vshrl.u32 %v3615, 7
        %v3617 = vsub.s32 %v253, %v3616
        %v3618 = vrot.slane %v3105, %v3617
        %v3619 = vadd.s32 %v253, 4294967288
        %v3620 = vlaneseq
        %v3621 = vshrl.u32 %v3620, 7
        %v3622 = vsub.s32 %v3619, %v3621
        %v3623 = vrot.slane %v3108, %v3622
        %vm3624 = vcmask 130112
        %v3625 = vsel %vm3624, %v3623, %v3618
        %v3626 = vadd.s32 %v253, 4294967280
        %v3627 = vlaneseq
        %v3628 = vshrl.u32 %v3627, 7
        %v3629 = vsub.s32 %v3626, %v3628
        %v3630 = vrot.slane %v3111, %v3629
        %vm3631 = vcmask 195712
        %v3632 = vsel %vm3631, %v3630, %v3625
        %v3633 = vadd.s32 %v253, 4294967272
        %v3634 = vlaneseq
        %v3635 = vshrl.u32 %v3634, 7
        %v3636 = vsub.s32 %v3633, %v3635
        %v3637 = vrot.slane %v3114, %v3636
        %vm3638 = vcmask 261312
        %v3639 = vsel %vm3638, %v3637, %v3632
        %v3640 = vadd.s32 %v253, 4294967264
        %v3641 = vlaneseq
        %v3642 = vshrl.u32 %v3641, 7
        %v3643 = vsub.s32 %v3640, %v3642
        %v3644 = vrot.slane %v3117, %v3643
        %vm3645 = vcmask 326912
        %v3646 = vsel %vm3645, %v3644, %v3639
        %v3647 = vadd.s32 %v253, 4294967256
        %v3648 = vlaneseq
        %v3649 = vshrl.u32 %v3648, 7
        %v3650 = vsub.s32 %v3647, %v3649
        %v3651 = vrot.slane %v3120, %v3650
        %vm3652 = vcmask 392512
        %v3653 = vsel %vm3652, %v3651, %v3646
        %v3654 = vadd.s32 %v253, 4294967248
        %v3655 = vlaneseq
        %v3656 = vshrl.u32 %v3655, 7
        %v3657 = vsub.s32 %v3654, %v3656
        %v3658 = vrot.slane %v3123, %v3657
        %vm3659 = vcmask 458112
        %v3660 = vsel %vm3659, %v3658, %v3653
        %v3661 = vadd.s32 %v253, 4294967240
        %v3662 = vlaneseq
        %v3663 = vshrl.u32 %v3662, 7
        %v3664 = vsub.s32 %v3661, %v3663
        %v3665 = vrot.slane %v3126, %v3664
        %vm3666 = vcmask 523712
        %v3667 = vsel %vm3666, %v3665, %v3660
        %v3668 = vadd.s32 %v253, 4294967232
        %v3669 = vlaneseq
        %v3670 = vshrl.u32 %v3669, 7
        %v3671 = vsub.s32 %v3668, %v3670
        %v3672 = vrot.slane %v3129, %v3671
        %vm3673 = vcmask 589312
        %v3674 = vsel %vm3673, %v3672, %v3667
        %v3675 = vadd.s32 %v253, 4294967224
        %v3676 = vlaneseq
        %v3677 = vshrl.u32 %v3676, 7
        %v3678 = vsub.s32 %v3675, %v3677
        %v3679 = vrot.slane %v3132, %v3678
        %vm3680 = vcmask 654912
        %v3681 = vsel %vm3680, %v3679, %v3674
        %v3682 = vadd.s32 %v253, 4294967216
        %v3683 = vlaneseq
        %v3684 = vshrl.u32 %v3683, 7
        %v3685 = vsub.s32 %v3682, %v3684
        %v3686 = vrot.slane %v3135, %v3685
        %vm3687 = vcmask 720512
        %v3688 = vsel %vm3687, %v3686, %v3681
        %v3689 = vadd.s32 %v253, 4294967208
        %v3690 = vlaneseq
        %v3691 = vshrl.u32 %v3690, 7
        %v3692 = vsub.s32 %v3689, %v3691
        %v3693 = vrot.slane %v3138, %v3692
        %vm3694 = vcmask 786112
        %v3695 = vsel %vm3694, %v3693, %v3688
        %v3696 = vadd.s32 %v253, 4294967200
        %v3697 = vlaneseq
        %v3698 = vshrl.u32 %v3697, 7
        %v3699 = vsub.s32 %v3696, %v3698
        %v3700 = vrot.slane %v3141, %v3699
        %vm3701 = vcmask 851712
        %v3702 = vsel %vm3701, %v3700, %v3695
        %v3703 = vadd.s32 %v253, 4294967192
        %v3704 = vlaneseq
        %v3705 = vshrl.u32 %v3704, 7
        %v3706 = vsub.s32 %v3703, %v3705
        %v3707 = vrot.slane %v3144, %v3706
        %vm3708 = vcmask 917312
        %v3709 = vsel %vm3708, %v3707, %v3702
        %v3710 = vadd.s32 %v253, 4294967184
        %v3711 = vlaneseq
        %v3712 = vshrl.u32 %v3711, 7
        %v3713 = vsub.s32 %v3710, %v3712
        %v3714 = vrot.slane %v3147, %v3713
        %vm3715 = vcmask 982912
        %v3716 = vsel %vm3715, %v3714, %v3709
        %v3717 = vadd.s32 %v253, 4294967176
        %v3718 = vlaneseq
        %v3719 = vshrl.u32 %v3718, 7
        %v3720 = vsub.s32 %v3717, %v3719
        %v3721 = vrot.slane %v3150, %v3720
        %vm3722 = vcmask 1048512
        %v3723 = vsel %vm3722, %v3721, %v3716
        %v3724 = vlaneseq
        %v3725 = vshrl.u32 %v3724, 7
        %v3726 = vsub.s32 %v253, %v3725
        %v3727 = vrot.slane %v3153, %v3726
        %v3728 = vlaneseq
        %v3729 = vshrl.u32 %v3728, 7
        %v3730 = vsub.s32 %v3619, %v3729
        %v3731 = vrot.slane %v3156, %v3730
        %v3732 = vsel %vm3624, %v3731, %v3727
        %v3733 = vlaneseq
        %v3734 = vshrl.u32 %v3733, 7
        %v3735 = vsub.s32 %v3626, %v3734
        %v3736 = vrot.slane %v3159, %v3735
        %v3737 = vsel %vm3631, %v3736, %v3732
        %v3738 = vlaneseq
        %v3739 = vshrl.u32 %v3738, 7
        %v3740 = vsub.s32 %v3633, %v3739
        %v3741 = vrot.slane %v3162, %v3740
        %v3742 = vsel %vm3638, %v3741, %v3737
        %v3743 = vlaneseq
        %v3744 = vshrl.u32 %v3743, 7
        %v3745 = vsub.s32 %v3640, %v3744
        %v3746 = vrot.slane %v3165, %v3745
        %v3747 = vsel %vm3645, %v3746, %v3742
        %v3748 = vlaneseq
        %v3749 = vshrl.u32 %v3748, 7
        %v3750 = vsub.s32 %v3647, %v3749
        %v3751 = vrot.slane %v3168, %v3750
        %v3752 = vsel %vm3652, %v3751, %v3747
        %v3753 = vlaneseq
        %v3754 = vshrl.u32 %v3753, 7
        %v3755 = vsub.s32 %v3654, %v3754
        %v3756 = vrot.slane %v3171, %v3755
        %v3757 = vsel %vm3659, %v3756, %v3752
        %v3758 = vlaneseq
        %v3759 = vshrl.u32 %v3758, 7
        %v3760 = vsub.s32 %v3661, %v3759
        %v3761 = vrot.slane %v3174, %v3760
        %v3762 = vsel %vm3666, %v3761, %v3757
        %v3763 = vlaneseq
        %v3764 = vshrl.u32 %v3763, 7
        %v3765 = vsub.s32 %v3668, %v3764
        %v3766 = vrot.slane %v3177, %v3765
        %v3767 = vsel %vm3673, %v3766, %v3762
        %v3768 = vlaneseq
        %v3769 = vshrl.u32 %v3768, 7
        %v3770 = vsub.s32 %v3675, %v3769
        %v3771 = vrot.slane %v3180, %v3770
        %v3772 = vsel %vm3680, %v3771, %v3767
        %v3773 = vlaneseq
        %v3774 = vshrl.u32 %v3773, 7
        %v3775 = vsub.s32 %v3682, %v3774
        %v3776 = vrot.slane %v3183, %v3775
        %v3777 = vsel %vm3687, %v3776, %v3772
        %v3778 = vlaneseq
        %v3779 = vshrl.u32 %v3778, 7
        %v3780 = vsub.s32 %v3689, %v3779
        %v3781 = vrot.slane %v3186, %v3780
        %v3782 = vsel %vm3694, %v3781, %v3777
        %v3783 = vlaneseq
        %v3784 = vshrl.u32 %v3783, 7
        %v3785 = vsub.s32 %v3696, %v3784
        %v3786 = vrot.slane %v3189, %v3785
        %v3787 = vsel %vm3701, %v3786, %v3782
        %v3788 = vlaneseq
        %v3789 = vshrl.u32 %v3788, 7
        %v3790 = vsub.s32 %v3703, %v3789
        %v3791 = vrot.slane %v3192, %v3790
        %v3792 = vsel %vm3708, %v3791, %v3787
        %v3793 = vlaneseq
        %v3794 = vshrl.u32 %v3793, 7
        %v3795 = vsub.s32 %v3710, %v3794
        %v3796 = vrot.slane %v3195, %v3795
        %v3797 = vsel %vm3715, %v3796, %v3792
        %v3798 = vlaneseq
        %v3799 = vshrl.u32 %v3798, 7
        %v3800 = vsub.s32 %v3717, %v3799
        %v3801 = vrot.slane %v3198, %v3800
        %v3802 = vsel %vm3722, %v3801, %v3797
        %v3803 = vlaneseq
        %v3804 = vshrl.u32 %v3803, 7
        %v3805 = vsub.s32 %v253, %v3804
        %v3806 = vrot.slane %v3201, %v3805
        %v3807 = vlaneseq
        %v3808 = vshrl.u32 %v3807, 7
        %v3809 = vsub.s32 %v3619, %v3808
        %v3810 = vrot.slane %v3204, %v3809
        %v3811 = vsel %vm3624, %v3810, %v3806
        %v3812 = vlaneseq
        %v3813 = vshrl.u32 %v3812, 7
        %v3814 = vsub.s32 %v3626, %v3813
        %v3815 = vrot.slane %v3207, %v3814
        %v3816 = vsel %vm3631, %v3815, %v3811
        %v3817 = vlaneseq
        %v3818 = vshrl.u32 %v3817, 7
        %v3819 = vsub.s32 %v3633, %v3818
        %v3820 = vrot.slane %v3210, %v3819
        %v3821 = vsel %vm3638, %v3820, %v3816
        %v3822 = vlaneseq
        %v3823 = vshrl.u32 %v3822, 7
        %v3824 = vsub.s32 %v3640, %v3823
        %v3825 = vrot.slane %v3213, %v3824
        %v3826 = vsel %vm3645, %v3825, %v3821
        %v3827 = vlaneseq
        %v3828 = vshrl.u32 %v3827, 7
        %v3829 = vsub.s32 %v3647, %v3828
        %v3830 = vrot.slane %v3216, %v3829
        %v3831 = vsel %vm3652, %v3830, %v3826
        %v3832 = vlaneseq
        %v3833 = vshrl.u32 %v3832, 7
        %v3834 = vsub.s32 %v3654, %v3833
        %v3835 = vrot.slane %v3219, %v3834
        %v3836 = vsel %vm3659, %v3835, %v3831
        %v3837 = vlaneseq
        %v3838 = vshrl.u32 %v3837, 7
        %v3839 = vsub.s32 %v3661, %v3838
        %v3840 = vrot.slane %v3222, %v3839
        %v3841 = vsel %vm3666, %v3840, %v3836
        %v3842 = vlaneseq
        %v3843 = vshrl.u32 %v3842, 7
        %v3844 = vsub.s32 %v3668, %v3843
        %v3845 = vrot.slane %v3225, %v3844
        %v3846 = vsel %vm3673, %v3845, %v3841
        %v3847 = vlaneseq
        %v3848 = vshrl.u32 %v3847, 7
        %v3849 = vsub.s32 %v3675, %v3848
        %v3850 = vrot.slane %v3228, %v3849
        %v3851 = vsel %vm3680, %v3850, %v3846
        %v3852 = vlaneseq
        %v3853 = vshrl.u32 %v3852, 7
        %v3854 = vsub.s32 %v3682, %v3853
        %v3855 = vrot.slane %v3231, %v3854
        %v3856 = vsel %vm3687, %v3855, %v3851
        %v3857 = vlaneseq
        %v3858 = vshrl.u32 %v3857, 7
        %v3859 = vsub.s32 %v3689, %v3858
        %v3860 = vrot.slane %v3234, %v3859
        %v3861 = vsel %vm3694, %v3860, %v3856
        %v3862 = vlaneseq
        %v3863 = vshrl.u32 %v3862, 7
        %v3864 = vsub.s32 %v3696, %v3863
        %v3865 = vrot.slane %v3237, %v3864
        %v3866 = vsel %vm3701, %v3865, %v3861
        %v3867 = vlaneseq
        %v3868 = vshrl.u32 %v3867, 7
        %v3869 = vsub.s32 %v3703, %v3868
        %v3870 = vrot.slane %v3240, %v3869
        %v3871 = vsel %vm3708, %v3870, %v3866
        %v3872 = vlaneseq
        %v3873 = vshrl.u32 %v3872, 7
        %v3874 = vsub.s32 %v3710, %v3873
        %v3875 = vrot.slane %v3243, %v3874
        %v3876 = vsel %vm3715, %v3875, %v3871
        %v3877 = vlaneseq
        %v3878 = vshrl.u32 %v3877, 7
        %v3879 = vsub.s32 %v3717, %v3878
        %v3880 = vrot.slane %v3246, %v3879
        %v3881 = vsel %vm3722, %v3880, %v3876
        %v3882 = vlaneseq
        %v3883 = vshrl.u32 %v3882, 7
        %v3884 = vsub.s32 %v253, %v3883
        %v3885 = vrot.slane %v3249, %v3884
        %v3886 = vlaneseq
        %v3887 = vshrl.u32 %v3886, 7
        %v3888 = vsub.s32 %v3619, %v3887
        %v3889 = vrot.slane %v3252, %v3888
        %v3890 = vsel %vm3624, %v3889, %v3885
        %v3891 = vlaneseq
        %v3892 = vshrl.u32 %v3891, 7
        %v3893 = vsub.s32 %v3626, %v3892
        %v3894 = vrot.slane %v3255, %v3893
        %v3895 = vsel %vm3631, %v3894, %v3890
        %v3896 = vlaneseq
        %v3897 = vshrl.u32 %v3896, 7
        %v3898 = vsub.s32 %v3633, %v3897
        %v3899 = vrot.slane %v3258, %v3898
        %v3900 = vsel %vm3638, %v3899, %v3895
        %v3901 = vlaneseq
        %v3902 = vshrl.u32 %v3901, 7
        %v3903 = vsub.s32 %v3640, %v3902
        %v3904 = vrot.slane %v3261, %v3903
        %v3905 = vsel %vm3645, %v3904, %v3900
        %v3906 = vlaneseq
        %v3907 = vshrl.u32 %v3906, 7
        %v3908 = vsub.s32 %v3647, %v3907
        %v3909 = vrot.slane %v3264, %v3908
        %v3910 = vsel %vm3652, %v3909, %v3905
        %v3911 = vlaneseq
        %v3912 = vshrl.u32 %v3911, 7
        %v3913 = vsub.s32 %v3654, %v3912
        %v3914 = vrot.slane %v3267, %v3913
        %v3915 = vsel %vm3659, %v3914, %v3910
        %v3916 = vlaneseq
        %v3917 = vshrl.u32 %v3916, 7
        %v3918 = vsub.s32 %v3661, %v3917
        %v3919 = vrot.slane %v3270, %v3918
        %v3920 = vsel %vm3666, %v3919, %v3915
        %v3921 = vlaneseq
        %v3922 = vshrl.u32 %v3921, 7
        %v3923 = vsub.s32 %v3668, %v3922
        %v3924 = vrot.slane %v3273, %v3923
        %v3925 = vsel %vm3673, %v3924, %v3920
        %v3926 = vlaneseq
        %v3927 = vshrl.u32 %v3926, 7
        %v3928 = vsub.s32 %v3675, %v3927
        %v3929 = vrot.slane %v3276, %v3928
        %v3930 = vsel %vm3680, %v3929, %v3925
        %v3931 = vlaneseq
        %v3932 = vshrl.u32 %v3931, 7
        %v3933 = vsub.s32 %v3682, %v3932
        %v3934 = vrot.slane %v3279, %v3933
        %v3935 = vsel %vm3687, %v3934, %v3930
        %v3936 = vlaneseq
        %v3937 = vshrl.u32 %v3936, 7
        %v3938 = vsub.s32 %v3689, %v3937
        %v3939 = vrot.slane %v3282, %v3938
        %v3940 = vsel %vm3694, %v3939, %v3935
        %v3941 = vlaneseq
        %v3942 = vshrl.u32 %v3941, 7
        %v3943 = vsub.s32 %v3696, %v3942
        %v3944 = vrot.slane %v3285, %v3943
        %v3945 = vsel %vm3701, %v3944, %v3940
        %v3946 = vlaneseq
        %v3947 = vshrl.u32 %v3946, 7
        %v3948 = vsub.s32 %v3703, %v3947
        %v3949 = vrot.slane %v3288, %v3948
        %v3950 = vsel %vm3708, %v3949, %v3945
        %v3951 = vlaneseq
        %v3952 = vshrl.u32 %v3951, 7
        %v3953 = vsub.s32 %v3710, %v3952
        %v3954 = vrot.slane %v3291, %v3953
        %v3955 = vsel %vm3715, %v3954, %v3950
        %v3956 = vlaneseq
        %v3957 = vshrl.u32 %v3956, 7
        %v3958 = vsub.s32 %v3717, %v3957
        %v3959 = vrot.slane %v3294, %v3958
        %v3960 = vsel %vm3722, %v3959, %v3955
        %v3961 = vlaneseq
        %v3962 = vshrl.u32 %v3961, 7
        %v3963 = vsub.s32 %v253, %v3962
        %v3964 = vrot.slane %v3297, %v3963
        %v3965 = vlaneseq
        %v3966 = vshrl.u32 %v3965, 7
        %v3967 = vsub.s32 %v3619, %v3966
        %v3968 = vrot.slane %v3300, %v3967
        %v3969 = vsel %vm3624, %v3968, %v3964
        %v3970 = vlaneseq
        %v3971 = vshrl.u32 %v3970, 7
        %v3972 = vsub.s32 %v3626, %v3971
        %v3973 = vrot.slane %v3303, %v3972
        %v3974 = vsel %vm3631, %v3973, %v3969
        %v3975 = vlaneseq
        %v3976 = vshrl.u32 %v3975, 7
        %v3977 = vsub.s32 %v3633, %v3976
        %v3978 = vrot.slane %v3306, %v3977
        %v3979 = vsel %vm3638, %v3978, %v3974
        %v3980 = vlaneseq
        %v3981 = vshrl.u32 %v3980, 7
        %v3982 = vsub.s32 %v3640, %v3981
        %v3983 = vrot.slane %v3309, %v3982
        %v3984 = vsel %vm3645, %v3983, %v3979
        %v3985 = vlaneseq
        %v3986 = vshrl.u32 %v3985, 7
        %v3987 = vsub.s32 %v3647, %v3986
        %v3988 = vrot.slane %v3312, %v3987
        %v3989 = vsel %vm3652, %v3988, %v3984
        %v3990 = vlaneseq
        %v3991 = vshrl.u32 %v3990, 7
        %v3992 = vsub.s32 %v3654, %v3991
        %v3993 = vrot.slane %v3315, %v3992
        %v3994 = vsel %vm3659, %v3993, %v3989
        %v3995 = vlaneseq
        %v3996 = vshrl.u32 %v3995, 7
        %v3997 = vsub.s32 %v3661, %v3996
        %v3998 = vrot.slane %v3318, %v3997
        %v3999 = vsel %vm3666, %v3998, %v3994
        %v4000 = vlaneseq
        %v4001 = vshrl.u32 %v4000, 7
        %v4002 = vsub.s32 %v3668, %v4001
        %v4003 = vrot.slane %v3321, %v4002
        %v4004 = vsel %vm3673, %v4003, %v3999
        %v4005 = vlaneseq
        %v4006 = vshrl.u32 %v4005, 7
        %v4007 = vsub.s32 %v3675, %v4006
        %v4008 = vrot.slane %v3324, %v4007
        %v4009 = vsel %vm3680, %v4008, %v4004
        %v4010 = vlaneseq
        %v4011 = vshrl.u32 %v4010, 7
        %v4012 = vsub.s32 %v3682, %v4011
        %v4013 = vrot.slane %v3327, %v4012
        %v4014 = vsel %vm3687, %v4013, %v4009
        %v4015 = vlaneseq
        %v4016 = vshrl.u32 %v4015, 7
        %v4017 = vsub.s32 %v3689, %v4016
        %v4018 = vrot.slane %v3330, %v4017
        %v4019 = vsel %vm3694, %v4018, %v4014
        %v4020 = vlaneseq
        %v4021 = vshrl.u32 %v4020, 7
        %v4022 = vsub.s32 %v3696, %v4021
        %v4023 = vrot.slane %v3333, %v4022
        %v4024 = vsel %vm3701, %v4023, %v4019
        %v4025 = vlaneseq
        %v4026 = vshrl.u32 %v4025, 7
        %v4027 = vsub.s32 %v3703, %v4026
        %v4028 = vrot.slane %v3336, %v4027
        %v4029 = vsel %vm3708, %v4028, %v4024
        %v4030 = vlaneseq
        %v4031 = vshrl.u32 %v4030, 7
        %v4032 = vsub.s32 %v3710, %v4031
        %v4033 = vrot.slane %v3339, %v4032
        %v4034 = vsel %vm3715, %v4033, %v4029
        %v4035 = vlaneseq
        %v4036 = vshrl.u32 %v4035, 7
        %v4037 = vsub.s32 %v3717, %v4036
        %v4038 = vrot.slane %v3342, %v4037
        %v4039 = vsel %vm3722, %v4038, %v4034
        %v4040 = vlaneseq
        %v4041 = vshrl.u32 %v4040, 7
        %v4042 = vsub.s32 %v253, %v4041
        %v4043 = vrot.slane %v3345, %v4042
        %v4044 = vlaneseq
        %v4045 = vshrl.u32 %v4044, 7
        %v4046 = vsub.s32 %v3619, %v4045
        %v4047 = vrot.slane %v3348, %v4046
        %v4048 = vsel %vm3624, %v4047, %v4043
        %v4049 = vlaneseq
        %v4050 = vshrl.u32 %v4049, 7
        %v4051 = vsub.s32 %v3626, %v4050
        %v4052 = vrot.slane %v3351, %v4051
        %v4053 = vsel %vm3631, %v4052, %v4048
        %v4054 = vlaneseq
        %v4055 = vshrl.u32 %v4054, 7
        %v4056 = vsub.s32 %v3633, %v4055
        %v4057 = vrot.slane %v3354, %v4056
        %v4058 = vsel %vm3638, %v4057, %v4053
        %v4059 = vlaneseq
        %v4060 = vshrl.u32 %v4059, 7
        %v4061 = vsub.s32 %v3640, %v4060
        %v4062 = vrot.slane %v3357, %v4061
        %v4063 = vsel %vm3645, %v4062, %v4058
        %v4064 = vlaneseq
        %v4065 = vshrl.u32 %v4064, 7
        %v4066 = vsub.s32 %v3647, %v4065
        %v4067 = vrot.slane %v3360, %v4066
        %v4068 = vsel %vm3652, %v4067, %v4063
        %v4069 = vlaneseq
        %v4070 = vshrl.u32 %v4069, 7
        %v4071 = vsub.s32 %v3654, %v4070
        %v4072 = vrot.slane %v3363, %v4071
        %v4073 = vsel %vm3659, %v4072, %v4068
        %v4074 = vlaneseq
        %v4075 = vshrl.u32 %v4074, 7
        %v4076 = vsub.s32 %v3661, %v4075
        %v4077 = vrot.slane %v3366, %v4076
        %v4078 = vsel %vm3666, %v4077, %v4073
        %v4079 = vlaneseq
        %v4080 = vshrl.u32 %v4079, 7
        %v4081 = vsub.s32 %v3668, %v4080
        %v4082 = vrot.slane %v3369, %v4081
        %v4083 = vsel %vm3673, %v4082, %v4078
        %v4084 = vlaneseq
        %v4085 = vshrl.u32 %v4084, 7
        %v4086 = vsub.s32 %v3675, %v4085
        %v4087 = vrot.slane %v3372, %v4086
        %v4088 = vsel %vm3680, %v4087, %v4083
        %v4089 = vlaneseq
        %v4090 = vshrl.u32 %v4089, 7
        %v4091 = vsub.s32 %v3682, %v4090
        %v4092 = vrot.slane %v3375, %v4091
        %v4093 = vsel %vm3687, %v4092, %v4088
        %v4094 = vlaneseq
        %v4095 = vshrl.u32 %v4094, 7
        %v4096 = vsub.s32 %v3689, %v4095
        %v4097 = vrot.slane %v3378, %v4096
        %v4098 = vsel %vm3694, %v4097, %v4093
        %v4099 = vlaneseq
        %v4100 = vshrl.u32 %v4099, 7
        %v4101 = vsub.s32 %v3696, %v4100
        %v4102 = vrot.slane %v3381, %v4101
        %v4103 = vsel %vm3701, %v4102, %v4098
        %v4104 = vlaneseq
        %v4105 = vshrl.u32 %v4104, 7
        %v4106 = vsub.s32 %v3703, %v4105
        %v4107 = vrot.slane %v3384, %v4106
        %v4108 = vsel %vm3708, %v4107, %v4103
        %v4109 = vlaneseq
        %v4110 = vshrl.u32 %v4109, 7
        %v4111 = vsub.s32 %v3710, %v4110
        %v4112 = vrot.slane %v3387, %v4111
        %v4113 = vsel %vm3715, %v4112, %v4108
        %v4114 = vlaneseq
        %v4115 = vshrl.u32 %v4114, 7
        %v4116 = vsub.s32 %v3717, %v4115
        %v4117 = vrot.slane %v3390, %v4116
        %v4118 = vsel %vm3722, %v4117, %v4113
        %v4119 = vlaneseq
        %v4120 = vshrl.u32 %v4119, 7
        %v4121 = vsub.s32 %v253, %v4120
        %v4122 = vrot.slane %v3393, %v4121
        %v4123 = vlaneseq
        %v4124 = vshrl.u32 %v4123, 7
        %v4125 = vsub.s32 %v3619, %v4124
        %v4126 = vrot.slane %v3396, %v4125
        %v4127 = vsel %vm3624, %v4126, %v4122
        %v4128 = vlaneseq
        %v4129 = vshrl.u32 %v4128, 7
        %v4130 = vsub.s32 %v3626, %v4129
        %v4131 = vrot.slane %v3399, %v4130
        %v4132 = vsel %vm3631, %v4131, %v4127
        %v4133 = vlaneseq
        %v4134 = vshrl.u32 %v4133, 7
        %v4135 = vsub.s32 %v3633, %v4134
        %v4136 = vrot.slane %v3402, %v4135
        %v4137 = vsel %vm3638, %v4136, %v4132
        %v4138 = vlaneseq
        %v4139 = vshrl.u32 %v4138, 7
        %v4140 = vsub.s32 %v3640, %v4139
        %v4141 = vrot.slane %v3405, %v4140
        %v4142 = vsel %vm3645, %v4141, %v4137
        %v4143 = vlaneseq
        %v4144 = vshrl.u32 %v4143, 7
        %v4145 = vsub.s32 %v3647, %v4144
        %v4146 = vrot.slane %v3408, %v4145
        %v4147 = vsel %vm3652, %v4146, %v4142
        %v4148 = vlaneseq
        %v4149 = vshrl.u32 %v4148, 7
        %v4150 = vsub.s32 %v3654, %v4149
        %v4151 = vrot.slane %v3411, %v4150
        %v4152 = vsel %vm3659, %v4151, %v4147
        %v4153 = vlaneseq
        %v4154 = vshrl.u32 %v4153, 7
        %v4155 = vsub.s32 %v3661, %v4154
        %v4156 = vrot.slane %v3414, %v4155
        %v4157 = vsel %vm3666, %v4156, %v4152
        %v4158 = vlaneseq
        %v4159 = vshrl.u32 %v4158, 7
        %v4160 = vsub.s32 %v3668, %v4159
        %v4161 = vrot.slane %v3417, %v4160
        %v4162 = vsel %vm3673, %v4161, %v4157
        %v4163 = vlaneseq
        %v4164 = vshrl.u32 %v4163, 7
        %v4165 = vsub.s32 %v3675, %v4164
        %v4166 = vrot.slane %v3420, %v4165
        %v4167 = vsel %vm3680, %v4166, %v4162
        %v4168 = vlaneseq
        %v4169 = vshrl.u32 %v4168, 7
        %v4170 = vsub.s32 %v3682, %v4169
        %v4171 = vrot.slane %v3423, %v4170
        %v4172 = vsel %vm3687, %v4171, %v4167
        %v4173 = vlaneseq
        %v4174 = vshrl.u32 %v4173, 7
        %v4175 = vsub.s32 %v3689, %v4174
        %v4176 = vrot.slane %v3426, %v4175
        %v4177 = vsel %vm3694, %v4176, %v4172
        %v4178 = vlaneseq
        %v4179 = vshrl.u32 %v4178, 7
        %v4180 = vsub.s32 %v3696, %v4179
        %v4181 = vrot.slane %v3429, %v4180
        %v4182 = vsel %vm3701, %v4181, %v4177
        %v4183 = vlaneseq
        %v4184 = vshrl.u32 %v4183, 7
        %v4185 = vsub.s32 %v3703, %v4184
        %v4186 = vrot.slane %v3432, %v4185
        %v4187 = vsel %vm3708, %v4186, %v4182
        %v4188 = vlaneseq
        %v4189 = vshrl.u32 %v4188, 7
        %v4190 = vsub.s32 %v3710, %v4189
        %v4191 = vrot.slane %v3435, %v4190
        %v4192 = vsel %vm3715, %v4191, %v4187
        %v4193 = vlaneseq
        %v4194 = vshrl.u32 %v4193, 7
        %v4195 = vsub.s32 %v3717, %v4194
        %v4196 = vrot.slane %v3438, %v4195
        %v4197 = vsel %vm3722, %v4196, %v4192
        %v4198 = vlaneseq
        %v4199 = vshrl.u32 %v4198, 7
        %v4200 = vsub.s32 %v253, %v4199
        %v4201 = vrot.slane %v3441, %v4200
        %v4202 = vlaneseq
        %v4203 = vshrl.u32 %v4202, 7
        %v4204 = vsub.s32 %v3619, %v4203
        %v4205 = vrot.slane %v3444, %v4204
        %v4206 = vsel %vm3624, %v4205, %v4201
        %v4207 = vlaneseq
        %v4208 = vshrl.u32 %v4207, 7
        %v4209 = vsub.s32 %v3626, %v4208
        %v4210 = vrot.slane %v3447, %v4209
        %v4211 = vsel %vm3631, %v4210, %v4206
        %v4212 = vlaneseq
        %v4213 = vshrl.u32 %v4212, 7
        %v4214 = vsub.s32 %v3633, %v4213
        %v4215 = vrot.slane %v3450, %v4214
        %v4216 = vsel %vm3638, %v4215, %v4211
        %v4217 = vlaneseq
        %v4218 = vshrl.u32 %v4217, 7
        %v4219 = vsub.s32 %v3640, %v4218
        %v4220 = vrot.slane %v3453, %v4219
        %v4221 = vsel %vm3645, %v4220, %v4216
        %v4222 = vlaneseq
        %v4223 = vshrl.u32 %v4222, 7
        %v4224 = vsub.s32 %v3647, %v4223
        %v4225 = vrot.slane %v3456, %v4224
        %v4226 = vsel %vm3652, %v4225, %v4221
        %v4227 = vlaneseq
        %v4228 = vshrl.u32 %v4227, 7
        %v4229 = vsub.s32 %v3654, %v4228
        %v4230 = vrot.slane %v3459, %v4229
        %v4231 = vsel %vm3659, %v4230, %v4226
        %v4232 = vlaneseq
        %v4233 = vshrl.u32 %v4232, 7
        %v4234 = vsub.s32 %v3661, %v4233
        %v4235 = vrot.slane %v3462, %v4234
        %v4236 = vsel %vm3666, %v4235, %v4231
        %v4237 = vlaneseq
        %v4238 = vshrl.u32 %v4237, 7
        %v4239 = vsub.s32 %v3668, %v4238
        %v4240 = vrot.slane %v3465, %v4239
        %v4241 = vsel %vm3673, %v4240, %v4236
        %v4242 = vlaneseq
        %v4243 = vshrl.u32 %v4242, 7
        %v4244 = vsub.s32 %v3675, %v4243
        %v4245 = vrot.slane %v3468, %v4244
        %v4246 = vsel %vm3680, %v4245, %v4241
        %v4247 = vlaneseq
        %v4248 = vshrl.u32 %v4247, 7
        %v4249 = vsub.s32 %v3682, %v4248
        %v4250 = vrot.slane %v3471, %v4249
        %v4251 = vsel %vm3687, %v4250, %v4246
        %v4252 = vlaneseq
        %v4253 = vshrl.u32 %v4252, 7
        %v4254 = vsub.s32 %v3689, %v4253
        %v4255 = vrot.slane %v3474, %v4254
        %v4256 = vsel %vm3694, %v4255, %v4251
        %v4257 = vlaneseq
        %v4258 = vshrl.u32 %v4257, 7
        %v4259 = vsub.s32 %v3696, %v4258
        %v4260 = vrot.slane %v3477, %v4259
        %v4261 = vsel %vm3701, %v4260, %v4256
        %v4262 = vlaneseq
        %v4263 = vshrl.u32 %v4262, 7
        %v4264 = vsub.s32 %v3703, %v4263
        %v4265 = vrot.slane %v3480, %v4264
        %v4266 = vsel %vm3708, %v4265, %v4261
        %v4267 = vlaneseq
        %v4268 = vshrl.u32 %v4267, 7
        %v4269 = vsub.s32 %v3710, %v4268
        %v4270 = vrot.slane %v3483, %v4269
        %v4271 = vsel %vm3715, %v4270, %v4266
        %v4272 = vlaneseq
        %v4273 = vshrl.u32 %v4272, 7
        %v4274 = vsub.s32 %v3717, %v4273
        %v4275 = vrot.slane %v3486, %v4274
        %v4276 = vsel %vm3722, %v4275, %v4271
        %vm4277 = vcmask 1041409
        %v4278 = vsel %vm4277, %v3802, %v3723
        %vm4279 = vcmask 1042434
        %v4280 = vsel %vm4279, %v3881, %v4278
        %vm4281 = vcmask 1043459
        %v4282 = vsel %vm4281, %v3960, %v4280
        %vm4283 = vcmask 1044484
        %v4284 = vsel %vm4283, %v4039, %v4282
        %vm4285 = vcmask 1045509
        %v4286 = vsel %vm4285, %v4118, %v4284
        %vm4287 = vcmask 1046534
        %v4288 = vsel %vm4287, %v4197, %v4286
        %vm4289 = vcmask 1047559
        %v4290 = vsel %vm4289, %v4276, %v4288
        %4292 = vst [vmem:[%s249] sm:$0xff] %v4290
        %s4293 = sand.u32 %s102, 1
        %s4294 = scalar_lea.sflag [#allocation4], %s4293
        %s4295 = sand.u32 %s102, 1
        %s4296 = smul.addr %s4295, 16
        %s4297 = scalar_lea.vmem [#allocation8], %s4296
        %s4298 = sand.u32 %s128, 1
        %s4299 = scalar_lea.sflag [#allocation10], %s4298
        %s4300 = sand.u32 %s128, 1
        %s4301 = smul.addr %s4300, 8
        %s4302 = scalar_lea.vmem [#allocation9], %s4301
        // Predicated region
        $region45: #{tpu_custom_call.1} parent=31 // pred_check
          %p4303 = pneg %p112
        $region46: #{tpu_custom_call.1} parent=31 // pred_check_branch
          %4305 = sbr.rel (%p4303) target = $region48
        $region47: #{tpu_custom_call.1} parent=31 // pred_region
          %s4306 = smul.u32 2, %s26
          %s4308 = ssub.s32 256, 256
          %4309 = vsyncadd %s4294, %s4308
          %s4310 = smul.addr %s4306, 128
          %s4311 = scalar_lea.hbm %s3, %s4310
          %s4313 = sshll.u32 %s4297, 4
          %s4314 = int_to_ptr.vmem [resolvable:$true] %s4313
          %4316 = dma.vmem_to_hbm [thread:$0]  %s4314, 256, %s4311, %s4294
        $region48: #{tpu_custom_call.1} parent=31 // pred_fallthru
          _
        // Predicated region
        $region49: #{tpu_custom_call.1} parent=31 // pred_check
          %p4317 = pneg %p138
        $region50: #{tpu_custom_call.1} parent=31 // pred_check_branch
          %4319 = sbr.rel (%p4317) target = $region52
        $region51: #{tpu_custom_call.1} parent=31 // pred_region
          %s4321 = ssub.s32 128, 128
          %4322 = vsyncadd %s4299, %s4321
          %s4323 = smul.addr %s26, 128
          %s4324 = scalar_lea.hbm %s4, %s4323
          %s4326 = sshll.u32 %s4302, 4
          %s4327 = int_to_ptr.vmem [resolvable:$true] %s4326
          %4329 = dma.vmem_to_hbm [thread:$0]  %s4327, 128, %s4324, %s4299
        $region52: #{tpu_custom_call.1} parent=31 // pred_fallthru
          _
      $region32: #{tpu_custom_call.1} parent=5 // pred_fallthru
        _
      %p4330 = scmp.le.s32.totalorder 2, %s21
      // Predicated region
      $region53: #{tpu_custom_call.1} parent=5 // pred_check
        %p4331 = pneg %p4330
      $region54: #{tpu_custom_call.1} parent=5 // pred_check_branch
        %4333 = sbr.rel (%p4331) target = $region56
      $region55: #{tpu_custom_call.1} parent=5 // pred_region
        %s4334 = ssub.s32 %s21, 2
        // Predicated region
        $region57: #{tpu_custom_call.1} parent=55 // pred_check
          %p4335 = pneg %p118
        $region58: #{tpu_custom_call.1} parent=55 // pred_check_branch
          %4337 = sbr.rel (%p4335) target = $region60
        $region59: #{tpu_custom_call.1} parent=55 // pred_region
          %s4338 = sand.u32 %s103, 1
          %s4339 = scalar_lea.sflag [#allocation4], %s4338
          %s4340 = sand.u32 %s103, 1
          %s4341 = smul.addr %s4340, 16
          %s4342 = scalar_lea.vmem [#allocation8], %s4341
          %4343 = dma.done %s4339, 256
        $region60: #{tpu_custom_call.1} parent=55 // pred_fallthru
          _
        // Predicated region
        $region61: #{tpu_custom_call.1} parent=55 // pred_check
          %p4344 = pneg %p144
        $region62: #{tpu_custom_call.1} parent=55 // pred_check_branch
          %4346 = sbr.rel (%p4344) target = $region64
        $region63: #{tpu_custom_call.1} parent=55 // pred_region
          %s4347 = sand.u32 %s129, 1
          %s4348 = scalar_lea.sflag [#allocation10], %s4347
          %s4349 = sand.u32 %s129, 1
          %s4350 = smul.addr %s4349, 8
          %s4351 = scalar_lea.vmem [#allocation9], %s4350
          %4352 = dma.done %s4348, 128
        $region64: #{tpu_custom_call.1} parent=55 // pred_fallthru
          _
      $region56: #{tpu_custom_call.1} parent=5 // pred_fallthru
        _
    $region6: #{tpu_custom_call.1} parent=1 // loop_footer
      %s25 = sadd.s32 1, %s21
    $region7: #{tpu_custom_call.1} parent=1 // loop_footer_branch
      %20 = sbr.rel target = $region3
    $region8: #{tpu_custom_call.1} parent=1 // loop_exit
      _
    %4353 = vsyncpa [#allocation3], 1
    %s4354 = scalar_lea.sflag [#allocation3], 1
    %4355 = vsyncpa %s4354, 1
    %4356 = vsyncpa [#allocation6], 1
    %4357 = vsyncpa [#allocation4], 1
    %s4358 = scalar_lea.sflag [#allocation4], 1
    %4359 = vsyncpa %s4358, 1
    %4360 = vsyncpa [#allocation10], 1
    %s4361 = scalar_lea.sflag [#allocation10], 1
    %4362 = vsyncpa %s4361, 1

</llo_original>
